<compile_context>
chip_gen: v6e
topology: v6e:2x2x1
jax: 0.10.0
libtpu: 0.0.40
codegen_flags: <defaults>
</compile_context>

<pallas_src>
import jax
import jax.numpy as jnp
from jax import lax
from jax.experimental import pallas as pl
from jax.experimental.pallas import tpu as pltpu


def _round_up(x, m):
    return ((x + m - 1) // m) * m


# ---------------------------------------------------------------------------
# Fully fused forward kernel (B images per grid step, B % 8 == 0)
# ---------------------------------------------------------------------------

def _make_fused_kernel(B):
    W, K = 28, 5
    Ho1, Wo1 = 24, 24
    Hp1, Wp1, C1 = 12, 12, 10
    Ho2, Wo2 = 8, 8
    Hp2, Wp2, C2 = 4, 4, 20

    def kernel(x_ref, wb1_ref, b1_ref, wb2_ref, b2_ref,
               wfc1_ref, bfc1_ref, wfc_ref, bfc_ref,
               x1_ref, x2_ref, x3_ref, x4_ref, lp_ref):
        # x_ref: (28, B, 28) = (h, image, w); image width lives in the lanes.
        x = x_ref[...]

        # ---- conv1: 5 banded matmuls (one per kernel row di), no im2col ----
        # wb1_ref[di][w_in, w_out*10 + o] = conv1_w[o, 0, di, w_in - w_out].
        acc1 = jnp.zeros((Ho1 * B, Wo1 * C1), jnp.float32)
        for di in range(K):
            rows = x[di:di + Ho1]                               # (24, B, 28)
            acc1 = acc1 + jnp.dot(rows.reshape(Ho1 * B, W), wb1_ref[di],
                                  preferred_element_type=jnp.float32)
        acc1 = acc1 + b1_ref[...]                               # bias, tiled over w

        # ---- 2x2 max-pool + ReLU, entirely in registers ----
        # rows are (i, image): pool i in adjacent pairs (outer-axis reduce).
        h1 = jnp.max(acc1.reshape(Hp1, 2, B, Wo1 * C1), axis=1)   # (12,B,240)
        h1 = h1.reshape(Hp1 * B, Wo1 * C1)
        # lanes are (w_out, channel): pool w in pairs of 10-lane blocks.
        parts = [jnp.maximum(h1[:, (2 * w) * C1:(2 * w + 1) * C1],
                             h1[:, (2 * w + 1) * C1:(2 * w + 2) * C1])
                 for w in range(Wp1)]
        pooled1 = jnp.maximum(jnp.concatenate(parts, axis=-1), 0.0)  # (12B,120)

        # x1 output as (h, image, w*c); wrapper converts to NCHW cheaply.
        x1_ref[...] = pooled1.reshape(Hp1, B, Wp1 * C1)

        # ---- conv2 (same banded-matmul scheme, 10 input channels) ----
        # TODO(synk): Dropout2d / F.dropout are inference-mode identity here.
        p1 = pooled1.reshape(Hp1, B, Wp1 * C1)
        acc2 = jnp.zeros((Ho2 * B, Wo2 * C2), jnp.float32)
        for di in range(K):
            rows = p1[di:di + Ho2]                              # (8, B, 120)
            acc2 = acc2 + jnp.dot(rows.reshape(Ho2 * B, Wp1 * C1), wb2_ref[di],
                                  preferred_element_type=jnp.float32)
        acc2 = acc2 + b2_ref[...]

        h2 = jnp.max(acc2.reshape(Hp2, 2, B, Wo2 * C2), axis=1)   # (4,B,160)
        h2 = h2.reshape(Hp2 * B, Wo2 * C2)
        parts2 = [jnp.maximum(h2[:, (2 * w) * C2:(2 * w + 1) * C2],
                              h2[:, (2 * w + 1) * C2:(2 * w + 2) * C2])
                  for w in range(Wp2)]
        pooled2 = jnp.maximum(jnp.concatenate(parts2, axis=-1), 0.0)  # (4B,80)

        # ---- flatten lane-dense: one 320-lane row per image, (hp,wp,c) order
        p2 = pooled2.reshape(Hp2, B, Wp2 * C2)
        x2_hwc = jnp.concatenate([p2[h] for h in range(Hp2)], axis=-1)  # (B,320)
        x2_ref[...] = x2_hwc

        # ---- fc1 + ReLU + fc + log_softmax (fc1 rows pre-permuted to match)
        h = jnp.dot(x2_hwc, wfc1_ref[...],
                    preferred_element_type=jnp.float32) + bfc1_ref[...]
        h = jnp.maximum(h, 0.0)
        x3_ref[...] = h
        z = jnp.dot(h, wfc_ref[...],
                    preferred_element_type=jnp.float32) + bfc_ref[...]
        x4_ref[...] = z
        m = jnp.max(z, axis=-1, keepdims=True)
        s = z - m
        lse = jnp.log(jnp.sum(jnp.exp(s), axis=-1, keepdims=True))
        lp_ref[...] = s - lse

    return kernel


def _fused_forward_call(x_t, params, B, N_pad):
    kernel = _make_fused_kernel(B)
    out_shapes = (
        jax.ShapeDtypeStruct((12, N_pad, 120), jnp.float32),  # x1 (h, n, w*c)
        jax.ShapeDtypeStruct((N_pad, 320), jnp.float32),      # x2, (hp,wp,c)
        jax.ShapeDtypeStruct((N_pad, 50), jnp.float32),       # x3
        jax.ShapeDtypeStruct((N_pad, 10), jnp.float32),       # x4
        jax.ShapeDtypeStruct((N_pad, 10), jnp.float32),       # log_softmax
    )
    return pl.pallas_call(
        kernel,
        out_shape=out_shapes,
        grid_spec=pltpu.PrefetchScalarGridSpec(
            num_scalar_prefetch=0,
            grid=(N_pad // B,),
            in_specs=[
                pl.BlockSpec((28, B, 28), lambda n: (0, n, 0)),    # x (h,n,w)
                pl.BlockSpec((5, 28, 240), lambda n: (0, 0, 0)),   # wb1
                pl.BlockSpec((1, 240), lambda n: (0, 0)),          # b1 tiled
                pl.BlockSpec((5, 120, 160), lambda n: (0, 0, 0)),  # wb2
                pl.BlockSpec((1, 160), lambda n: (0, 0)),          # b2 tiled
                pl.BlockSpec((320, 50), lambda n: (0, 0)),         # fc1 (perm)
                pl.BlockSpec((1, 50), lambda n: (0, 0)),
                pl.BlockSpec((50, 10), lambda n: (0, 0)),          # fc
                pl.BlockSpec((1, 10), lambda n: (0, 0)),
            ],
            out_specs=(
                pl.BlockSpec((12, B, 120), lambda n: (0, n, 0)),
                pl.BlockSpec((B, 320), lambda n: (n, 0)),
                pl.BlockSpec((B, 50), lambda n: (n, 0)),
                pl.BlockSpec((B, 10), lambda n: (n, 0)),
                pl.BlockSpec((B, 10), lambda n: (n, 0)),
            ),
        ),
        compiler_params=pltpu.CompilerParams(
            dimension_semantics=("parallel",)),
    )(x_t, params["wb1"], params["b1t"], params["wb2"], params["b2t"],
      params["wfc1p"], params["bfc1"], params["wfct"], params["bfc"])


# ---------------------------------------------------------------------------
# Parameters
# ---------------------------------------------------------------------------

def init_params(key):
    """PyTorch-layout parameters (nn.Conv2d / nn.Linear uniform init bounds)."""
    keys = jax.random.split(key, 8)

    def u(k, shape, fan_in):
        bound = 1.0 / (fan_in ** 0.5)
        return jax.random.uniform(k, shape, jnp.float32, -bound, bound)

    return {
        "w1": u(keys[0], (10, 1, 5, 5), 25),      # conv1 (OIHW)
        "b1": u(keys[1], (10,), 25),
        "w2": u(keys[2], (20, 10, 5, 5), 250),    # conv2 (OIHW)
        "b2": u(keys[3], (20,), 250),
        "wfc1": u(keys[4], (50, 320), 320),       # fc1 (out, in)
        "bfc1": u(keys[5], (50,), 320),
        "wfc": u(keys[6], (10, 50), 50),          # fc  (out, in)
        "bfc": u(keys[7], (10,), 50),
    }


def prepare_params(p):
    """One-time layout prep: banded conv matrices, tiled biases, permuted FC."""
    # conv1 -> 5 banded matrices (28, 240):
    #   wb1[di, w_in, w_out*10 + o] = w1[o, 0, di, w_in - w_out]
    w1_dxo = jnp.transpose(p["w1"], (2, 3, 1, 0)).reshape(5, 5, 10)  # (di,dj,o)
    wb1 = jnp.zeros((5, 28, 24, 10), jnp.float32)
    j1 = jnp.arange(24)
    for dj in range(5):
        val = jnp.broadcast_to(w1_dxo[:, dj, None, :], (5, 24, 10))
        wb1 = wb1.at[:, j1 + dj, j1, :].set(val)
    wb1 = wb1.reshape(5, 28, 240)

    # conv2 -> 5 banded matrices (120, 160):
    #   wb2[di, w_in*10 + c, w_out*20 + o] = w2[o, c, di, w_in - w_out]
    w2_dxco = jnp.transpose(p["w2"], (2, 3, 1, 0))            # (di, dj, c, o)
    wb2 = jnp.zeros((5, 12, 8, 10, 20), jnp.float32)          # (di,w_in,w_out,c,o)
    j2 = jnp.arange(8)
    for dj in range(5):
        val = jnp.broadcast_to(w2_dxco[:, dj, None, :, :], (5, 8, 10, 20))
        wb2 = wb2.at[:, j2 + dj, j2, :, :].set(val)
    wb2 = jnp.transpose(wb2, (0, 1, 3, 2, 4)).reshape(5, 120, 160)

    # fc1 weight: (in, out) with input rows permuted from PyTorch (c, hp, wp)
    # flatten order to the kernel's lane-dense (hp, wp, c) order.
    wfc1p = jnp.transpose(p["wfc1"].reshape(50, 20, 4, 4),
                          (2, 3, 1, 0)).reshape(320, 50)

    return {
        "wb1": wb1,
        "b1t": jnp.tile(p["b1"], 24).reshape(1, 240),
        "wb2": wb2,
        "b2t": jnp.tile(p["b2"], 8).reshape(1, 160),
        "wfc1p": wfc1p,
        "bfc1": p["bfc1"].reshape(1, 50),
        "wfct": p["wfc"].T,                       # (50, 10)
        "bfc": p["bfc"].reshape(1, 10),
    }


# ---------------------------------------------------------------------------
# Forward pass (matches the PyTorch cnnmnist module, inference mode)
# ---------------------------------------------------------------------------

def cnnmnist_forward(params, x_nchw):
    N = x_nchw.shape[0]
    B = min(16, _round_up(max(N, 1), 8))          # images per grid step
    N_pad = _round_up(N, B)

    x = x_nchw.reshape(N, 28, 28)
    x_t = jnp.transpose(x, (1, 0, 2))             # (28, N, 28): w stays in lanes
    if N_pad != N:
        x_t = jnp.pad(x_t, ((0, 0), (0, N_pad - N), (0, 0)))

    x1_raw, x2_hwc, x3, x4, logp = _fused_forward_call(x_t, params, B, N_pad)

    # Tiny wrapper-side relayouts to the exact PyTorch shapes/orders.
    x1 = jnp.transpose(x1_raw.reshape(12, N_pad, 12, 10), (1, 3, 0, 2))[:N]
    x2 = jnp.transpose(x2_hwc.reshape(N_pad, 4, 4, 20),
                       (0, 3, 1, 2)).reshape(N_pad, 320)[:N]
    return [x1, x2, x3[:N], x4[:N]], logp[:N]


# ---------------------------------------------------------------------------
# Plain-XLA reference (for a correctness cross-check in __main__)
# ---------------------------------------------------------------------------

def reference_forward(raw, x_nchw):
    def conv(x, w, b):
        y = lax.conv_general_dilated(x, w, (1, 1), "VALID",
                                     dimension_numbers=("NCHW", "OIHW", "NCHW"))
        return y + b.reshape(1, -1, 1, 1)

    def pool2(x):
        return lax.reduce_window(x, -jnp.inf, lax.max,
                                 (1, 1, 2, 2), (1, 1, 2, 2), "VALID")

    x1 = jnp.maximum(pool2(conv(x_nchw, raw["w1"], raw["b1"])), 0.0)
    x2 = jnp.maximum(pool2(conv(x1, raw["w2"], raw["b2"])), 0.0)
    x2 = x2.reshape(x_nchw.shape[0], 320)
    x3 = jnp.maximum(x2 @ raw["wfc1"].T + raw["bfc1"], 0.0)
    x4 = x3 @ raw["wfc"].T + raw["bfc"]
    return [x1, x2, x3, x4], jax.nn.log_softmax(x4, axis=1)


if __name__ == "__main__":
    key = jax.random.PRNGKey(0)
    pkey, xkey = jax.random.split(key)
    raw = init_params(pkey)
    params = prepare_params(raw)
    # MNIST-shaped input is required (fc1 expects 20*4*4 = 320 features).
    x = jax.random.normal(xkey, (2, 1, 28, 28), jnp.float32)

    fwd = jax.jit(cnnmnist_forward)
    (x1, x2, x3, x4), logp = fwd(params, x)
    jax.block_until_ready((x1, x2, x3, x4, logp))

    assert x1.shape == (2, 10, 12, 12)
    assert x2.shape == (2, 320)
    assert x3.shape == (2, 50)
    assert x4.shape == (2, 10)
    assert logp.shape == (2, 10)
    assert bool(jnp.allclose(jnp.sum(jnp.exp(logp), axis=1), 1.0, atol=1e-4))

    # Cross-check against plain XLA (loose tol covers MXU f32 pass splitting;
    # layout/weight-ordering bugs would show up as O(1) differences).
    (r1, r2, r3, r4), rlp = jax.jit(reference_forward)(raw, x)
    for a, b in ((x1, r1), (x2, r2), (x3, r3), (x4, r4), (logp, rlp)):
        diff = float(jnp.max(jnp.abs(a - b)))
        assert diff < 5e-2, diff

    print("KERNEL_OK")
</pallas_src>

<mosaic_0001>
module attributes {stable_mosaic.version = 11 : i64} {
  func.func @kernel(%arg0: i32, %arg1: memref<28x8x28xf32, #tpu.memory_space<vmem>>, %arg2: memref<5x28x240xf32, #tpu.memory_space<vmem>>, %arg3: memref<1x240xf32, #tpu.memory_space<vmem>>, %arg4: memref<5x120x160xf32, #tpu.memory_space<vmem>>, %arg5: memref<1x160xf32, #tpu.memory_space<vmem>>, %arg6: memref<320x50xf32, #tpu.memory_space<vmem>>, %arg7: memref<1x50xf32, #tpu.memory_space<vmem>>, %arg8: memref<50x10xf32, #tpu.memory_space<vmem>>, %arg9: memref<1x10xf32, #tpu.memory_space<vmem>>, %arg10: memref<12x8x120xf32, #tpu.memory_space<vmem>>, %arg11: memref<8x320xf32, #tpu.memory_space<vmem>>, %arg12: memref<8x50xf32, #tpu.memory_space<vmem>>, %arg13: memref<8x10xf32, #tpu.memory_space<vmem>>, %arg14: memref<8x10xf32, #tpu.memory_space<vmem>>) attributes {dimension_semantics = [#tpu.dimension_semantics<parallel>], iteration_bounds = array<i64: 1>, scalar_prefetch = 0 : i64, scratch_operands = 0 : i64, tpu.core_type = #tpu.core_type<tc>, window_params = [{transform_indices = @transform_0, window_bounds = array<i64: 28, 8, 28>}, {pipeline_mode = #tpu.pipeline_mode<synchronous>, transform_indices = @transform_1, window_bounds = array<i64: 5, 28, 240>}, {pipeline_mode = #tpu.pipeline_mode<synchronous>, transform_indices = @transform_2, window_bounds = array<i64: 1, 240>}, {pipeline_mode = #tpu.pipeline_mode<synchronous>, transform_indices = @transform_3, window_bounds = array<i64: 5, 120, 160>}, {pipeline_mode = #tpu.pipeline_mode<synchronous>, transform_indices = @transform_4, window_bounds = array<i64: 1, 160>}, {pipeline_mode = #tpu.pipeline_mode<synchronous>, transform_indices = @transform_5, window_bounds = array<i64: 320, 50>}, {pipeline_mode = #tpu.pipeline_mode<synchronous>, transform_indices = @transform_6, window_bounds = array<i64: 1, 50>}, {pipeline_mode = #tpu.pipeline_mode<synchronous>, transform_indices = @transform_7, window_bounds = array<i64: 50, 10>}, {pipeline_mode = #tpu.pipeline_mode<synchronous>, transform_indices = @transform_8, window_bounds = array<i64: 1, 10>}, {transform_indices = @transform_9, window_bounds = array<i64: 12, 8, 120>}, {transform_indices = @transform_10, window_bounds = array<i64: 8, 320>}, {transform_indices = @transform_11, window_bounds = array<i64: 8, 50>}, {transform_indices = @transform_12, window_bounds = array<i64: 8, 10>}, {transform_indices = @transform_13, window_bounds = array<i64: 8, 10>}]} {
    %c0 = arith.constant 0 : index
    %c0_0 = arith.constant 0 : index
    %c0_1 = arith.constant 0 : index
    %0 = vector.load %arg1[%c0, %c0_0, %c0_1] : memref<28x8x28xf32, #tpu.memory_space<vmem>>, vector<28x8x28xf32>
    %cst = arith.constant 0.000000e+00 : f32
    %1 = vector.broadcast %cst : f32 to vector<192x240xf32>
    %2 = vector.extract_strided_slice %0 {offsets = [0, 0, 0], sizes = [24, 8, 28], strides = [1, 1, 1]} : vector<28x8x28xf32> to vector<24x8x28xf32>
    %3 = vector.shape_cast %2 : vector<24x8x28xf32> to vector<192x28xf32>
    %c0_2 = arith.constant 0 : index
    %c0_3 = arith.constant 0 : index
    %c0_4 = arith.constant 0 : index
    %4 = vector.load %arg2[%c0_2, %c0_3, %c0_4] : memref<5x28x240xf32, #tpu.memory_space<vmem>>, vector<1x28x240xf32>
    %5 = vector.shape_cast %4 : vector<1x28x240xf32> to vector<28x240xf32>
    %cst_5 = arith.constant dense<0.000000e+00> : vector<192x240xf32>
    %6 = tpu.matmul %3, %5, %cst_5 {dimension_numbers = #tpu.dot_dimension_numbers<[1], [0], [0], [1], [0, 0, 1, 1], [], []>} : vector<192x28xf32>, vector<28x240xf32>, vector<192x240xf32> -> vector<192x240xf32>
    %7 = arith.addf %1, %6 : vector<192x240xf32>
    %8 = vector.extract_strided_slice %0 {offsets = [1, 0, 0], sizes = [24, 8, 28], strides = [1, 1, 1]} : vector<28x8x28xf32> to vector<24x8x28xf32>
    %9 = vector.shape_cast %8 : vector<24x8x28xf32> to vector<192x28xf32>
    %c1 = arith.constant 1 : index
    %c0_6 = arith.constant 0 : index
    %c0_7 = arith.constant 0 : index
    %10 = vector.load %arg2[%c1, %c0_6, %c0_7] : memref<5x28x240xf32, #tpu.memory_space<vmem>>, vector<1x28x240xf32>
    %11 = vector.shape_cast %10 : vector<1x28x240xf32> to vector<28x240xf32>
    %cst_8 = arith.constant dense<0.000000e+00> : vector<192x240xf32>
    %12 = tpu.matmul %9, %11, %cst_8 {dimension_numbers = #tpu.dot_dimension_numbers<[1], [0], [0], [1], [0, 0, 1, 1], [], []>} : vector<192x28xf32>, vector<28x240xf32>, vector<192x240xf32> -> vector<192x240xf32>
    %13 = arith.addf %7, %12 : vector<192x240xf32>
    %14 = vector.extract_strided_slice %0 {offsets = [2, 0, 0], sizes = [24, 8, 28], strides = [1, 1, 1]} : vector<28x8x28xf32> to vector<24x8x28xf32>
    %15 = vector.shape_cast %14 : vector<24x8x28xf32> to vector<192x28xf32>
    %c2 = arith.constant 2 : index
    %c0_9 = arith.constant 0 : index
    %c0_10 = arith.constant 0 : index
    %16 = vector.load %arg2[%c2, %c0_9, %c0_10] : memref<5x28x240xf32, #tpu.memory_space<vmem>>, vector<1x28x240xf32>
    %17 = vector.shape_cast %16 : vector<1x28x240xf32> to vector<28x240xf32>
    %cst_11 = arith.constant dense<0.000000e+00> : vector<192x240xf32>
    %18 = tpu.matmul %15, %17, %cst_11 {dimension_numbers = #tpu.dot_dimension_numbers<[1], [0], [0], [1], [0, 0, 1, 1], [], []>} : vector<192x28xf32>, vector<28x240xf32>, vector<192x240xf32> -> vector<192x240xf32>
    %19 = arith.addf %13, %18 : vector<192x240xf32>
    %20 = vector.extract_strided_slice %0 {offsets = [3, 0, 0], sizes = [24, 8, 28], strides = [1, 1, 1]} : vector<28x8x28xf32> to vector<24x8x28xf32>
    %21 = vector.shape_cast %20 : vector<24x8x28xf32> to vector<192x28xf32>
    %c3 = arith.constant 3 : index
    %c0_12 = arith.constant 0 : index
    %c0_13 = arith.constant 0 : index
    %22 = vector.load %arg2[%c3, %c0_12, %c0_13] : memref<5x28x240xf32, #tpu.memory_space<vmem>>, vector<1x28x240xf32>
    %23 = vector.shape_cast %22 : vector<1x28x240xf32> to vector<28x240xf32>
    %cst_14 = arith.constant dense<0.000000e+00> : vector<192x240xf32>
    %24 = tpu.matmul %21, %23, %cst_14 {dimension_numbers = #tpu.dot_dimension_numbers<[1], [0], [0], [1], [0, 0, 1, 1], [], []>} : vector<192x28xf32>, vector<28x240xf32>, vector<192x240xf32> -> vector<192x240xf32>
    %25 = arith.addf %19, %24 : vector<192x240xf32>
    %26 = vector.extract_strided_slice %0 {offsets = [4, 0, 0], sizes = [24, 8, 28], strides = [1, 1, 1]} : vector<28x8x28xf32> to vector<24x8x28xf32>
    %27 = vector.shape_cast %26 : vector<24x8x28xf32> to vector<192x28xf32>
    %c4 = arith.constant 4 : index
    %c0_15 = arith.constant 0 : index
    %c0_16 = arith.constant 0 : index
    %28 = vector.load %arg2[%c4, %c0_15, %c0_16] : memref<5x28x240xf32, #tpu.memory_space<vmem>>, vector<1x28x240xf32>
    %29 = vector.shape_cast %28 : vector<1x28x240xf32> to vector<28x240xf32>
    %cst_17 = arith.constant dense<0.000000e+00> : vector<192x240xf32>
    %30 = tpu.matmul %27, %29, %cst_17 {dimension_numbers = #tpu.dot_dimension_numbers<[1], [0], [0], [1], [0, 0, 1, 1], [], []>} : vector<192x28xf32>, vector<28x240xf32>, vector<192x240xf32> -> vector<192x240xf32>
    %31 = arith.addf %25, %30 : vector<192x240xf32>
    %c0_18 = arith.constant 0 : index
    %c0_19 = arith.constant 0 : index
    %32 = vector.load %arg3[%c0_18, %c0_19] : memref<1x240xf32, #tpu.memory_space<vmem>>, vector<1x240xf32>
    %33 = vector.broadcast %32 : vector<1x240xf32> to vector<192x240xf32>
    %34 = arith.addf %31, %33 : vector<192x240xf32>
    %35 = vector.shape_cast %34 : vector<192x240xf32> to vector<12x2x8x240xf32>
    %cst_20 = arith.constant dense<0xFF800000> : vector<12x8x240xf32>
    %36 = vector.multi_reduction <maximumf>, %35, %cst_20 [1] : vector<12x2x8x240xf32> to vector<12x8x240xf32>
    %37 = vector.shape_cast %36 : vector<12x8x240xf32> to vector<96x240xf32>
    %38 = vector.extract_strided_slice %37 {offsets = [0, 0], sizes = [96, 10], strides = [1, 1]} : vector<96x240xf32> to vector<96x10xf32>
    %39 = vector.extract_strided_slice %37 {offsets = [0, 10], sizes = [96, 10], strides = [1, 1]} : vector<96x240xf32> to vector<96x10xf32>
    %40 = arith.maximumf %38, %39 : vector<96x10xf32>
    %41 = vector.extract_strided_slice %37 {offsets = [0, 20], sizes = [96, 10], strides = [1, 1]} : vector<96x240xf32> to vector<96x10xf32>
    %42 = vector.extract_strided_slice %37 {offsets = [0, 30], sizes = [96, 10], strides = [1, 1]} : vector<96x240xf32> to vector<96x10xf32>
    %43 = arith.maximumf %41, %42 : vector<96x10xf32>
    %44 = vector.extract_strided_slice %37 {offsets = [0, 40], sizes = [96, 10], strides = [1, 1]} : vector<96x240xf32> to vector<96x10xf32>
    %45 = vector.extract_strided_slice %37 {offsets = [0, 50], sizes = [96, 10], strides = [1, 1]} : vector<96x240xf32> to vector<96x10xf32>
    %46 = arith.maximumf %44, %45 : vector<96x10xf32>
    %47 = vector.extract_strided_slice %37 {offsets = [0, 60], sizes = [96, 10], strides = [1, 1]} : vector<96x240xf32> to vector<96x10xf32>
    %48 = vector.extract_strided_slice %37 {offsets = [0, 70], sizes = [96, 10], strides = [1, 1]} : vector<96x240xf32> to vector<96x10xf32>
    %49 = arith.maximumf %47, %48 : vector<96x10xf32>
    %50 = vector.extract_strided_slice %37 {offsets = [0, 80], sizes = [96, 10], strides = [1, 1]} : vector<96x240xf32> to vector<96x10xf32>
    %51 = vector.extract_strided_slice %37 {offsets = [0, 90], sizes = [96, 10], strides = [1, 1]} : vector<96x240xf32> to vector<96x10xf32>
    %52 = arith.maximumf %50, %51 : vector<96x10xf32>
    %53 = vector.extract_strided_slice %37 {offsets = [0, 100], sizes = [96, 10], strides = [1, 1]} : vector<96x240xf32> to vector<96x10xf32>
    %54 = vector.extract_strided_slice %37 {offsets = [0, 110], sizes = [96, 10], strides = [1, 1]} : vector<96x240xf32> to vector<96x10xf32>
    %55 = arith.maximumf %53, %54 : vector<96x10xf32>
    %56 = vector.extract_strided_slice %37 {offsets = [0, 120], sizes = [96, 10], strides = [1, 1]} : vector<96x240xf32> to vector<96x10xf32>
    %57 = vector.extract_strided_slice %37 {offsets = [0, 130], sizes = [96, 10], strides = [1, 1]} : vector<96x240xf32> to vector<96x10xf32>
    %58 = arith.maximumf %56, %57 : vector<96x10xf32>
    %59 = vector.extract_strided_slice %37 {offsets = [0, 140], sizes = [96, 10], strides = [1, 1]} : vector<96x240xf32> to vector<96x10xf32>
    %60 = vector.extract_strided_slice %37 {offsets = [0, 150], sizes = [96, 10], strides = [1, 1]} : vector<96x240xf32> to vector<96x10xf32>
    %61 = arith.maximumf %59, %60 : vector<96x10xf32>
    %62 = vector.extract_strided_slice %37 {offsets = [0, 160], sizes = [96, 10], strides = [1, 1]} : vector<96x240xf32> to vector<96x10xf32>
    %63 = vector.extract_strided_slice %37 {offsets = [0, 170], sizes = [96, 10], strides = [1, 1]} : vector<96x240xf32> to vector<96x10xf32>
    %64 = arith.maximumf %62, %63 : vector<96x10xf32>
    %65 = vector.extract_strided_slice %37 {offsets = [0, 180], sizes = [96, 10], strides = [1, 1]} : vector<96x240xf32> to vector<96x10xf32>
    %66 = vector.extract_strided_slice %37 {offsets = [0, 190], sizes = [96, 10], strides = [1, 1]} : vector<96x240xf32> to vector<96x10xf32>
    %67 = arith.maximumf %65, %66 : vector<96x10xf32>
    %68 = vector.extract_strided_slice %37 {offsets = [0, 200], sizes = [96, 10], strides = [1, 1]} : vector<96x240xf32> to vector<96x10xf32>
    %69 = vector.extract_strided_slice %37 {offsets = [0, 210], sizes = [96, 10], strides = [1, 1]} : vector<96x240xf32> to vector<96x10xf32>
    %70 = arith.maximumf %68, %69 : vector<96x10xf32>
    %71 = vector.extract_strided_slice %37 {offsets = [0, 220], sizes = [96, 10], strides = [1, 1]} : vector<96x240xf32> to vector<96x10xf32>
    %72 = vector.extract_strided_slice %37 {offsets = [0, 230], sizes = [96, 10], strides = [1, 1]} : vector<96x240xf32> to vector<96x10xf32>
    %73 = arith.maximumf %71, %72 : vector<96x10xf32>
    %74 = tpu.concatenate %40, %43, %46, %49, %52, %55, %58, %61, %64, %67, %70, %73 in 1 : vector<96x10xf32>, vector<96x10xf32>, vector<96x10xf32>, vector<96x10xf32>, vector<96x10xf32>, vector<96x10xf32>, vector<96x10xf32>, vector<96x10xf32>, vector<96x10xf32>, vector<96x10xf32>, vector<96x10xf32>, vector<96x10xf32> -> vector<96x120xf32>
    %cst_21 = arith.constant 0.000000e+00 : f32
    %75 = vector.broadcast %cst_21 : f32 to vector<96x120xf32>
    %76 = arith.maximumf %74, %75 : vector<96x120xf32>
    %77 = vector.shape_cast %76 : vector<96x120xf32> to vector<12x8x120xf32>
    %c0_22 = arith.constant 0 : index
    %c0_23 = arith.constant 0 : index
    %c0_24 = arith.constant 0 : index
    %78 = vector.load %arg10[%c0_22, %c0_23, %c0_24] : memref<12x8x120xf32, #tpu.memory_space<vmem>>, vector<12x8x120xf32>
    tpu.vector_store %arg10[%c0_22, %c0_23, %c0_24], %77 {strides = array<i32>} : memref<12x8x120xf32, #tpu.memory_space<vmem>>, vector<12x8x120xf32>,
    %79 = vector.shape_cast %76 : vector<96x120xf32> to vector<12x8x120xf32>
    %cst_25 = arith.constant 0.000000e+00 : f32
    %80 = vector.broadcast %cst_25 : f32 to vector<64x160xf32>
    %81 = vector.extract_strided_slice %79 {offsets = [0, 0, 0], sizes = [8, 8, 120], strides = [1, 1, 1]} : vector<12x8x120xf32> to vector<8x8x120xf32>
    %82 = vector.shape_cast %81 : vector<8x8x120xf32> to vector<64x120xf32>
    %c0_26 = arith.constant 0 : index
    %c0_27 = arith.constant 0 : index
    %c0_28 = arith.constant 0 : index
    %83 = vector.load %arg4[%c0_26, %c0_27, %c0_28] : memref<5x120x160xf32, #tpu.memory_space<vmem>>, vector<1x120x160xf32>
    %84 = vector.shape_cast %83 : vector<1x120x160xf32> to vector<120x160xf32>
    %cst_29 = arith.constant dense<0.000000e+00> : vector<64x160xf32>
    %85 = tpu.matmul %82, %84, %cst_29 {dimension_numbers = #tpu.dot_dimension_numbers<[1], [0], [0], [1], [0, 0, 1, 1], [], []>} : vector<64x120xf32>, vector<120x160xf32>, vector<64x160xf32> -> vector<64x160xf32>
    %86 = arith.addf %80, %85 : vector<64x160xf32>
    %87 = vector.extract_strided_slice %79 {offsets = [1, 0, 0], sizes = [8, 8, 120], strides = [1, 1, 1]} : vector<12x8x120xf32> to vector<8x8x120xf32>
    %88 = vector.shape_cast %87 : vector<8x8x120xf32> to vector<64x120xf32>
    %c1_30 = arith.constant 1 : index
    %c0_31 = arith.constant 0 : index
    %c0_32 = arith.constant 0 : index
    %89 = vector.load %arg4[%c1_30, %c0_31, %c0_32] : memref<5x120x160xf32, #tpu.memory_space<vmem>>, vector<1x120x160xf32>
    %90 = vector.shape_cast %89 : vector<1x120x160xf32> to vector<120x160xf32>
    %cst_33 = arith.constant dense<0.000000e+00> : vector<64x160xf32>
    %91 = tpu.matmul %88, %90, %cst_33 {dimension_numbers = #tpu.dot_dimension_numbers<[1], [0], [0], [1], [0, 0, 1, 1], [], []>} : vector<64x120xf32>, vector<120x160xf32>, vector<64x160xf32> -> vector<64x160xf32>
    %92 = arith.addf %86, %91 : vector<64x160xf32>
    %93 = vector.extract_strided_slice %79 {offsets = [2, 0, 0], sizes = [8, 8, 120], strides = [1, 1, 1]} : vector<12x8x120xf32> to vector<8x8x120xf32>
    %94 = vector.shape_cast %93 : vector<8x8x120xf32> to vector<64x120xf32>
    %c2_34 = arith.constant 2 : index
    %c0_35 = arith.constant 0 : index
    %c0_36 = arith.constant 0 : index
    %95 = vector.load %arg4[%c2_34, %c0_35, %c0_36] : memref<5x120x160xf32, #tpu.memory_space<vmem>>, vector<1x120x160xf32>
    %96 = vector.shape_cast %95 : vector<1x120x160xf32> to vector<120x160xf32>
    %cst_37 = arith.constant dense<0.000000e+00> : vector<64x160xf32>
    %97 = tpu.matmul %94, %96, %cst_37 {dimension_numbers = #tpu.dot_dimension_numbers<[1], [0], [0], [1], [0, 0, 1, 1], [], []>} : vector<64x120xf32>, vector<120x160xf32>, vector<64x160xf32> -> vector<64x160xf32>
    %98 = arith.addf %92, %97 : vector<64x160xf32>
    %99 = vector.extract_strided_slice %79 {offsets = [3, 0, 0], sizes = [8, 8, 120], strides = [1, 1, 1]} : vector<12x8x120xf32> to vector<8x8x120xf32>
    %100 = vector.shape_cast %99 : vector<8x8x120xf32> to vector<64x120xf32>
    %c3_38 = arith.constant 3 : index
    %c0_39 = arith.constant 0 : index
    %c0_40 = arith.constant 0 : index
    %101 = vector.load %arg4[%c3_38, %c0_39, %c0_40] : memref<5x120x160xf32, #tpu.memory_space<vmem>>, vector<1x120x160xf32>
    %102 = vector.shape_cast %101 : vector<1x120x160xf32> to vector<120x160xf32>
    %cst_41 = arith.constant dense<0.000000e+00> : vector<64x160xf32>
    %103 = tpu.matmul %100, %102, %cst_41 {dimension_numbers = #tpu.dot_dimension_numbers<[1], [0], [0], [1], [0, 0, 1, 1], [], []>} : vector<64x120xf32>, vector<120x160xf32>, vector<64x160xf32> -> vector<64x160xf32>
    %104 = arith.addf %98, %103 : vector<64x160xf32>
    %105 = vector.extract_strided_slice %79 {offsets = [4, 0, 0], sizes = [8, 8, 120], strides = [1, 1, 1]} : vector<12x8x120xf32> to vector<8x8x120xf32>
    %106 = vector.shape_cast %105 : vector<8x8x120xf32> to vector<64x120xf32>
    %c4_42 = arith.constant 4 : index
    %c0_43 = arith.constant 0 : index
    %c0_44 = arith.constant 0 : index
    %107 = vector.load %arg4[%c4_42, %c0_43, %c0_44] : memref<5x120x160xf32, #tpu.memory_space<vmem>>, vector<1x120x160xf32>
    %108 = vector.shape_cast %107 : vector<1x120x160xf32> to vector<120x160xf32>
    %cst_45 = arith.constant dense<0.000000e+00> : vector<64x160xf32>
    %109 = tpu.matmul %106, %108, %cst_45 {dimension_numbers = #tpu.dot_dimension_numbers<[1], [0], [0], [1], [0, 0, 1, 1], [], []>} : vector<64x120xf32>, vector<120x160xf32>, vector<64x160xf32> -> vector<64x160xf32>
    %110 = arith.addf %104, %109 : vector<64x160xf32>
    %c0_46 = arith.constant 0 : index
    %c0_47 = arith.constant 0 : index
    %111 = vector.load %arg5[%c0_46, %c0_47] : memref<1x160xf32, #tpu.memory_space<vmem>>, vector<1x160xf32>
    %112 = vector.broadcast %111 : vector<1x160xf32> to vector<64x160xf32>
    %113 = arith.addf %110, %112 : vector<64x160xf32>
    %114 = vector.shape_cast %113 : vector<64x160xf32> to vector<4x2x8x160xf32>
    %cst_48 = arith.constant dense<0xFF800000> : vector<4x8x160xf32>
    %115 = vector.multi_reduction <maximumf>, %114, %cst_48 [1] : vector<4x2x8x160xf32> to vector<4x8x160xf32>
    %116 = vector.shape_cast %115 : vector<4x8x160xf32> to vector<32x160xf32>
    %117 = vector.extract_strided_slice %116 {offsets = [0, 0], sizes = [32, 20], strides = [1, 1]} : vector<32x160xf32> to vector<32x20xf32>
    %118 = vector.extract_strided_slice %116 {offsets = [0, 20], sizes = [32, 20], strides = [1, 1]} : vector<32x160xf32> to vector<32x20xf32>
    %119 = arith.maximumf %117, %118 : vector<32x20xf32>
    %120 = vector.extract_strided_slice %116 {offsets = [0, 40], sizes = [32, 20], strides = [1, 1]} : vector<32x160xf32> to vector<32x20xf32>
    %121 = vector.extract_strided_slice %116 {offsets = [0, 60], sizes = [32, 20], strides = [1, 1]} : vector<32x160xf32> to vector<32x20xf32>
    %122 = arith.maximumf %120, %121 : vector<32x20xf32>
    %123 = vector.extract_strided_slice %116 {offsets = [0, 80], sizes = [32, 20], strides = [1, 1]} : vector<32x160xf32> to vector<32x20xf32>
    %124 = vector.extract_strided_slice %116 {offsets = [0, 100], sizes = [32, 20], strides = [1, 1]} : vector<32x160xf32> to vector<32x20xf32>
    %125 = arith.maximumf %123, %124 : vector<32x20xf32>
    %126 = vector.extract_strided_slice %116 {offsets = [0, 120], sizes = [32, 20], strides = [1, 1]} : vector<32x160xf32> to vector<32x20xf32>
    %127 = vector.extract_strided_slice %116 {offsets = [0, 140], sizes = [32, 20], strides = [1, 1]} : vector<32x160xf32> to vector<32x20xf32>
    %128 = arith.maximumf %126, %127 : vector<32x20xf32>
    %129 = tpu.concatenate %119, %122, %125, %128 in 1 : vector<32x20xf32>, vector<32x20xf32>, vector<32x20xf32>, vector<32x20xf32> -> vector<32x80xf32>
    %cst_49 = arith.constant 0.000000e+00 : f32
    %130 = vector.broadcast %cst_49 : f32 to vector<32x80xf32>
    %131 = arith.maximumf %129, %130 : vector<32x80xf32>
    %132 = vector.shape_cast %131 : vector<32x80xf32> to vector<4x8x80xf32>
    %133 = vector.extract_strided_slice %132 {offsets = [0, 0, 0], sizes = [1, 8, 80], strides = [1, 1, 1]} : vector<4x8x80xf32> to vector<1x8x80xf32>
    %134 = vector.shape_cast %133 : vector<1x8x80xf32> to vector<8x80xf32>
    %135 = vector.extract_strided_slice %132 {offsets = [1, 0, 0], sizes = [1, 8, 80], strides = [1, 1, 1]} : vector<4x8x80xf32> to vector<1x8x80xf32>
    %136 = vector.shape_cast %135 : vector<1x8x80xf32> to vector<8x80xf32>
    %137 = vector.extract_strided_slice %132 {offsets = [2, 0, 0], sizes = [1, 8, 80], strides = [1, 1, 1]} : vector<4x8x80xf32> to vector<1x8x80xf32>
    %138 = vector.shape_cast %137 : vector<1x8x80xf32> to vector<8x80xf32>
    %139 = vector.extract_strided_slice %132 {offsets = [3, 0, 0], sizes = [1, 8, 80], strides = [1, 1, 1]} : vector<4x8x80xf32> to vector<1x8x80xf32>
    %140 = vector.shape_cast %139 : vector<1x8x80xf32> to vector<8x80xf32>
    %141 = tpu.concatenate %134, %136, %138, %140 in 1 : vector<8x80xf32>, vector<8x80xf32>, vector<8x80xf32>, vector<8x80xf32> -> vector<8x320xf32>
    %c0_50 = arith.constant 0 : index
    %c0_51 = arith.constant 0 : index
    %142 = vector.load %arg11[%c0_50, %c0_51] : memref<8x320xf32, #tpu.memory_space<vmem>>, vector<8x320xf32>
    tpu.vector_store %arg11[%c0_50, %c0_51], %141 {strides = array<i32>} : memref<8x320xf32, #tpu.memory_space<vmem>>, vector<8x320xf32>,
    %c0_52 = arith.constant 0 : index
    %c0_53 = arith.constant 0 : index
    %143 = vector.load %arg6[%c0_52, %c0_53] : memref<320x50xf32, #tpu.memory_space<vmem>>, vector<320x50xf32>
    %cst_54 = arith.constant dense<0.000000e+00> : vector<8x50xf32>
    %144 = tpu.matmul %141, %143, %cst_54 {dimension_numbers = #tpu.dot_dimension_numbers<[1], [0], [0], [1], [0, 0, 1, 1], [], []>} : vector<8x320xf32>, vector<320x50xf32>, vector<8x50xf32> -> vector<8x50xf32>
    %c0_55 = arith.constant 0 : index
    %c0_56 = arith.constant 0 : index
    %145 = vector.load %arg7[%c0_55, %c0_56] : memref<1x50xf32, #tpu.memory_space<vmem>>, vector<1x50xf32>
    %146 = vector.broadcast %145 : vector<1x50xf32> to vector<8x50xf32>
    %147 = arith.addf %144, %146 : vector<8x50xf32>
    %cst_57 = arith.constant 0.000000e+00 : f32
    %148 = vector.broadcast %cst_57 : f32 to vector<8x50xf32>
    %149 = arith.maximumf %147, %148 : vector<8x50xf32>
    %c0_58 = arith.constant 0 : index
    %c0_59 = arith.constant 0 : index
    %150 = vector.load %arg12[%c0_58, %c0_59] : memref<8x50xf32, #tpu.memory_space<vmem>>, vector<8x50xf32>
    tpu.vector_store %arg12[%c0_58, %c0_59], %149 {strides = array<i32>} : memref<8x50xf32, #tpu.memory_space<vmem>>, vector<8x50xf32>,
    %c0_60 = arith.constant 0 : index
    %c0_61 = arith.constant 0 : index
    %151 = vector.load %arg8[%c0_60, %c0_61] : memref<50x10xf32, #tpu.memory_space<vmem>>, vector<50x10xf32>
    %cst_62 = arith.constant dense<0.000000e+00> : vector<8x10xf32>
    %152 = tpu.matmul %149, %151, %cst_62 {dimension_numbers = #tpu.dot_dimension_numbers<[1], [0], [0], [1], [0, 0, 1, 1], [], []>} : vector<8x50xf32>, vector<50x10xf32>, vector<8x10xf32> -> vector<8x10xf32>
    %c0_63 = arith.constant 0 : index
    %c0_64 = arith.constant 0 : index
    %153 = vector.load %arg9[%c0_63, %c0_64] : memref<1x10xf32, #tpu.memory_space<vmem>>, vector<1x10xf32>
    %154 = vector.broadcast %153 : vector<1x10xf32> to vector<8x10xf32>
    %155 = arith.addf %152, %154 : vector<8x10xf32>
    %c0_65 = arith.constant 0 : index
    %c0_66 = arith.constant 0 : index
    %156 = vector.load %arg13[%c0_65, %c0_66] : memref<8x10xf32, #tpu.memory_space<vmem>>, vector<8x10xf32>
    tpu.vector_store %arg13[%c0_65, %c0_66], %155 {strides = array<i32>} : memref<8x10xf32, #tpu.memory_space<vmem>>, vector<8x10xf32>,
    %cst_67 = arith.constant dense<0xFF800000> : vector<8xf32>
    %157 = vector.multi_reduction <maximumf>, %155, %cst_67 [1] : vector<8x10xf32> to vector<8xf32>
    %158 = vector.shape_cast %157 : vector<8xf32> to vector<8x1xf32>
    %159 = vector.broadcast %158 : vector<8x1xf32> to vector<8x10xf32>
    %160 = arith.subf %155, %159 : vector<8x10xf32>
    %161 = math.exp %160 : vector<8x10xf32>
    %cst_68 = arith.constant dense<0.000000e+00> : vector<8xf32>
    %162 = vector.multi_reduction <add>, %161, %cst_68 [1] : vector<8x10xf32> to vector<8xf32>
    %163 = vector.shape_cast %162 : vector<8xf32> to vector<8x1xf32>
    %164 = math.log %163 : vector<8x1xf32>
    %165 = vector.broadcast %164 : vector<8x1xf32> to vector<8x10xf32>
    %166 = arith.subf %160, %165 : vector<8x10xf32>
    %c0_69 = arith.constant 0 : index
    %c0_70 = arith.constant 0 : index
    %167 = vector.load %arg14[%c0_69, %c0_70] : memref<8x10xf32, #tpu.memory_space<vmem>>, vector<8x10xf32>
    tpu.vector_store %arg14[%c0_69, %c0_70], %166 {strides = array<i32>} : memref<8x10xf32, #tpu.memory_space<vmem>>, vector<8x10xf32>,
    return
  }
  func.func @transform_0(%arg0: i32) -> (i32, i32, i32) {
    %c0_i32 = arith.constant 0 : i32
    %c0_i32_0 = arith.constant 0 : i32
    %c0_i32_1 = arith.constant 0 : i32
    return %c0_i32, %arg0, %c0_i32_0 : i32, i32, i32
  }
  func.func @transform_1(%arg0: i32) -> (i32, i32, i32) {
    %c0_i32 = arith.constant 0 : i32
    %c0_i32_0 = arith.constant 0 : i32
    %c0_i32_1 = arith.constant 0 : i32
    %c0_i32_2 = arith.constant 0 : i32
    return %c0_i32, %c0_i32_0, %c0_i32_1 : i32, i32, i32
  }
  func.func @transform_2(%arg0: i32) -> (i32, i32) {
    %c0_i32 = arith.constant 0 : i32
    %c0_i32_0 = arith.constant 0 : i32
    %c0_i32_1 = arith.constant 0 : i32
    return %c0_i32, %c0_i32_0 : i32, i32
  }
  func.func @transform_3(%arg0: i32) -> (i32, i32, i32) {
    %c0_i32 = arith.constant 0 : i32
    %c0_i32_0 = arith.constant 0 : i32
    %c0_i32_1 = arith.constant 0 : i32
    %c0_i32_2 = arith.constant 0 : i32
    return %c0_i32, %c0_i32_0, %c0_i32_1 : i32, i32, i32
  }
  func.func @transform_4(%arg0: i32) -> (i32, i32) {
    %c0_i32 = arith.constant 0 : i32
    %c0_i32_0 = arith.constant 0 : i32
    %c0_i32_1 = arith.constant 0 : i32
    return %c0_i32, %c0_i32_0 : i32, i32
  }
  func.func @transform_5(%arg0: i32) -> (i32, i32) {
    %c0_i32 = arith.constant 0 : i32
    %c0_i32_0 = arith.constant 0 : i32
    %c0_i32_1 = arith.constant 0 : i32
    return %c0_i32, %c0_i32_0 : i32, i32
  }
  func.func @transform_6(%arg0: i32) -> (i32, i32) {
    %c0_i32 = arith.constant 0 : i32
    %c0_i32_0 = arith.constant 0 : i32
    %c0_i32_1 = arith.constant 0 : i32
    return %c0_i32, %c0_i32_0 : i32, i32
  }
  func.func @transform_7(%arg0: i32) -> (i32, i32) {
    %c0_i32 = arith.constant 0 : i32
    %c0_i32_0 = arith.constant 0 : i32
    %c0_i32_1 = arith.constant 0 : i32
    return %c0_i32, %c0_i32_0 : i32, i32
  }
  func.func @transform_8(%arg0: i32) -> (i32, i32) {
    %c0_i32 = arith.constant 0 : i32
    %c0_i32_0 = arith.constant 0 : i32
    %c0_i32_1 = arith.constant 0 : i32
    return %c0_i32, %c0_i32_0 : i32, i32
  }
  func.func @transform_9(%arg0: i32) -> (i32, i32, i32) {
    %c0_i32 = arith.constant 0 : i32
    %c0_i32_0 = arith.constant 0 : i32
    %c0_i32_1 = arith.constant 0 : i32
    return %c0_i32, %arg0, %c0_i32_0 : i32, i32, i32
  }
  func.func @transform_10(%arg0: i32) -> (i32, i32) {
    %c0_i32 = arith.constant 0 : i32
    %c0_i32_0 = arith.constant 0 : i32
    return %arg0, %c0_i32 : i32, i32
  }
  func.func @transform_11(%arg0: i32) -> (i32, i32) {
    %c0_i32 = arith.constant 0 : i32
    %c0_i32_0 = arith.constant 0 : i32
    return %arg0, %c0_i32 : i32, i32
  }
  func.func @transform_12(%arg0: i32) -> (i32, i32) {
    %c0_i32 = arith.constant 0 : i32
    %c0_i32_0 = arith.constant 0 : i32
    return %arg0, %c0_i32 : i32, i32
  }
  func.func @transform_13(%arg0: i32) -> (i32, i32) {
    %c0_i32 = arith.constant 0 : i32
    %c0_i32_0 = arith.constant 0 : i32
    return %arg0, %c0_i32 : i32, i32
  }
}

</mosaic_0001>

<llo_original>
// kernel: cnnmnist_forward.1
$region0: #{cnnmnist_forward.1}
  #allocation0 [shape = 'u32[]', space=smem, size = 0x4, offset = 0x4, fixed_abs, tag = 'smem constant byte address 0x4 - core index']
  #allocation1 [shape = 'u32[144,128]{1,0:T(1,128)}', space=vmem, size = 0x12000, scoped, tag = 'internal scratch']
  %s0 = inlined_call_operand.vmem [shape: f32[28,8,28], index: 0, kind: input, shape index: {}]
  %s1 = inlined_call_operand.vmem [shape: f32[5,28,240], index: 1, kind: input, shape index: {}]
  %s2 = inlined_call_operand.vmem [shape: f32[1,240], index: 2, kind: input, shape index: {}]
  %s3 = inlined_call_operand.vmem [shape: f32[5,120,160], index: 3, kind: input, shape index: {}]
  %s4 = inlined_call_operand.vmem [shape: f32[1,160], index: 4, kind: input, shape index: {}]
  %s5 = inlined_call_operand.vmem [shape: f32[320,50], index: 5, kind: input, shape index: {}]
  %s6 = inlined_call_operand.vmem [shape: f32[1,50], index: 6, kind: input, shape index: {}]
  %s7 = inlined_call_operand.vmem [shape: f32[50,10], index: 7, kind: input, shape index: {}]
  %s8 = inlined_call_operand.vmem [shape: f32[1,10], index: 8, kind: input, shape index: {}]
  %s9 = inlined_call_operand.vmem [shape: f32[12,8,120], index: 9, kind: output, shape index: {0}]
  %s10 = inlined_call_operand.vmem [shape: f32[8,320], index: 10, kind: output, shape index: {1}]
  %s11 = inlined_call_operand.vmem [shape: f32[8,50], index: 11, kind: output, shape index: {2}]
  %s12 = inlined_call_operand.vmem [shape: f32[8,10], index: 12, kind: output, shape index: {3}]
  %s13 = inlined_call_operand.vmem [shape: f32[8,10], index: 13, kind: output, shape index: {4}]
  %14 = xla_tuple %s9, %s10, %s11, %s12, %s13
  %s15 = sld [smem:[#allocation0]]
  $region78: #{cnnmnist_forward.1} parent=0
    _
  %s17 = ssub.s32 1, %s15
  %s18 = scalar_select 0, %s17, %s15
  // Predicated region
  $region2: #{cnnmnist_forward.1} parent=0 // pred_check
    _
  $region3: #{cnnmnist_forward.1} parent=0 // pred_check_branch
    %20 = sbr.rel (0) target = $region5
  $region4: #{cnnmnist_forward.1} parent=0 // pred_region
    _
  $region5: #{cnnmnist_forward.1} parent=0 // pred_fallthru
    _
  // Predicated region
  $region6: #{cnnmnist_forward.1} parent=0 // pred_check
    _
  $region7: #{cnnmnist_forward.1} parent=0 // pred_check_branch
    %22 = sbr.rel (0) target = $region9
  $region8: #{cnnmnist_forward.1} parent=0 // pred_region
    _
  $region9: #{cnnmnist_forward.1} parent=0 // pred_fallthru
    _
  // Predicated region
  $region10: #{cnnmnist_forward.1} parent=0 // pred_check
    _
  $region11: #{cnnmnist_forward.1} parent=0 // pred_check_branch
    %24 = sbr.rel (0) target = $region13
  $region12: #{cnnmnist_forward.1} parent=0 // pred_region
    _
  $region13: #{cnnmnist_forward.1} parent=0 // pred_fallthru
    _
  // Predicated region
  $region14: #{cnnmnist_forward.1} parent=0 // pred_check
    _
  $region15: #{cnnmnist_forward.1} parent=0 // pred_check_branch
    %26 = sbr.rel (0) target = $region17
  $region16: #{cnnmnist_forward.1} parent=0 // pred_region
    _
  $region17: #{cnnmnist_forward.1} parent=0 // pred_fallthru
    _
  // Predicated region
  $region18: #{cnnmnist_forward.1} parent=0 // pred_check
    _
  $region19: #{cnnmnist_forward.1} parent=0 // pred_check_branch
    %28 = sbr.rel (0) target = $region21
  $region20: #{cnnmnist_forward.1} parent=0 // pred_region
    _
  $region21: #{cnnmnist_forward.1} parent=0 // pred_fallthru
    _
  // Predicated region
  $region22: #{cnnmnist_forward.1} parent=0 // pred_check
    _
  $region23: #{cnnmnist_forward.1} parent=0 // pred_check_branch
    %30 = sbr.rel (0) target = $region25
  $region24: #{cnnmnist_forward.1} parent=0 // pred_region
    _
  $region25: #{cnnmnist_forward.1} parent=0 // pred_fallthru
    _
  // Predicated region
  $region26: #{cnnmnist_forward.1} parent=0 // pred_check
    _
  $region27: #{cnnmnist_forward.1} parent=0 // pred_check_branch
    %32 = sbr.rel (0) target = $region29
  $region28: #{cnnmnist_forward.1} parent=0 // pred_region
    _
  $region29: #{cnnmnist_forward.1} parent=0 // pred_fallthru
    _
  // Predicated region
  $region30: #{cnnmnist_forward.1} parent=0 // pred_check
    _
  $region31: #{cnnmnist_forward.1} parent=0 // pred_check_branch
    %34 = sbr.rel (0) target = $region33
  $region32: #{cnnmnist_forward.1} parent=0 // pred_region
    _
  $region33: #{cnnmnist_forward.1} parent=0 // pred_fallthru
    _
  // Predicated region
  $region34: #{cnnmnist_forward.1} parent=0 // pred_check
    _
  $region35: #{cnnmnist_forward.1} parent=0 // pred_check_branch
    %36 = sbr.rel (0) target = $region37
  $region36: #{cnnmnist_forward.1} parent=0 // pred_region
    _
  $region37: #{cnnmnist_forward.1} parent=0 // pred_fallthru
    _
  %v37 = vld [vmem:[%s0] sm:$0xff]
  %v38 = vld [vmem:[%s0 + $0x8] sm:$0xff]
  %v39 = vld [vmem:[%s0 + $0x10] sm:$0xff]
  %v40 = vld [vmem:[%s0 + $0x18] sm:$0xff]
  %v41 = vld [vmem:[%s0 + $0x20] sm:$0xff]
  %v42 = vld [vmem:[%s0 + $0x28] sm:$0xff]
  %v43 = vld [vmem:[%s0 + $0x30] sm:$0xff]
  %v44 = vld [vmem:[%s0 + $0x38] sm:$0xff]
  %v45 = vld [vmem:[%s0 + $0x40] sm:$0xff]
  %v46 = vld [vmem:[%s0 + $0x48] sm:$0xff]
  %v47 = vld [vmem:[%s0 + $0x50] sm:$0xff]
  %v48 = vld [vmem:[%s0 + $0x58] sm:$0xff]
  %v49 = vld [vmem:[%s0 + $0x60] sm:$0xff]
  %v50 = vld [vmem:[%s0 + $0x68] sm:$0xff]
  %v51 = vld [vmem:[%s0 + $0x70] sm:$0xff]
  %v52 = vld [vmem:[%s0 + $0x78] sm:$0xff]
  %v53 = vld [vmem:[%s0 + $0x80] sm:$0xff]
  %v54 = vld [vmem:[%s0 + $0x88] sm:$0xff]
  %v55 = vld [vmem:[%s0 + $0x90] sm:$0xff]
  %v56 = vld [vmem:[%s0 + $0x98] sm:$0xff]
  %v57 = vld [vmem:[%s0 + $0xa0] sm:$0xff]
  %v58 = vld [vmem:[%s0 + $0xa8] sm:$0xff]
  %v59 = vld [vmem:[%s0 + $0xb0] sm:$0xff]
  %v60 = vld [vmem:[%s0 + $0xb8] sm:$0xff]
  %v61 = vld [vmem:[%s0 + $0xc0] sm:$0xff]
  %v62 = vld [vmem:[%s0 + $0xc8] sm:$0xff]
  %v63 = vld [vmem:[%s0 + $0xd0] sm:$0xff]
  %v64 = vld [vmem:[%s0 + $0xd8] sm:$0xff]
  %v65 = vld [vmem:[%s1] sm:$0xff]
  %v66 = vld [vmem:[%s1 + $0x8] sm:$0xff]
  %v67 = vld [vmem:[%s1 + $0x10] sm:$0xff]
  %v68 = vld [vmem:[%s1 + $0x18] sm:$0xff]
  %v69 = vld [vmem:[%s1 + $0x20] sm:$0xff]
  %v70 = vld [vmem:[%s1 + $0x28] sm:$0xff]
  %v71 = vld [vmem:[%s1 + $0x30] sm:$0xf]
  %v72 = vld [vmem:[%s1 + $0x38] sm:$0xf]
  %s73 = scalar_lea.vmem %s1, 64
  %v74 = vld [vmem:[%s73] sm:$0xff]
  %v75 = vld [vmem:[%s73 + $0x8] sm:$0xff]
  %v76 = vld [vmem:[%s73 + $0x10] sm:$0xff]
  %v77 = vld [vmem:[%s73 + $0x18] sm:$0xff]
  %v78 = vld [vmem:[%s73 + $0x20] sm:$0xff]
  %v79 = vld [vmem:[%s73 + $0x28] sm:$0xff]
  %v80 = vld [vmem:[%s73 + $0x30] sm:$0xf]
  %v81 = vld [vmem:[%s73 + $0x38] sm:$0xf]
  %vm82 = vcmask 228352
  %v84 = vsel %vm82, %v38, 0
  %v87 = vsel %vm82, %v39, 0
  %v90 = vsel %vm82, %v40, 0
  %v93 = vsel %vm82, %v41, 0
  %v96 = vsel %vm82, %v42, 0
  %v99 = vsel %vm82, %v43, 0
  %v102 = vsel %vm82, %v44, 0
  %v105 = vsel %vm82, %v45, 0
  %v108 = vsel %vm82, %v46, 0
  %v111 = vsel %vm82, %v47, 0
  %v114 = vsel %vm82, %v48, 0
  %v117 = vsel %vm82, %v49, 0
  %v120 = vsel %vm82, %v50, 0
  %v123 = vsel %vm82, %v51, 0
  %v126 = vsel %vm82, %v52, 0
  %v129 = vsel %vm82, %v53, 0
  %v132 = vsel %vm82, %v54, 0
  %v135 = vsel %vm82, %v55, 0
  %v138 = vsel %vm82, %v56, 0
  %v141 = vsel %vm82, %v57, 0
  %v144 = vsel %vm82, %v58, 0
  %v147 = vsel %vm82, %v59, 0
  %v150 = vsel %vm82, %v60, 0
  %v153 = vsel %vm82, %v61, 0
  %vm155 = vcmask 1043456
  %v157 = vsel %vm155, %v80, 0
  %v160 = vsel %vm155, %v81, 0
  %162 = vmatprep.subr.mxu0 0.0
  %163 = vmatpush1.msra.mxu0 0.0
  %164 = vmatprep.subr.mxu0 0.0
  %165 = vmatpush1.msra.mxu0 0.0
  %166 = vmatprep.subr.mxu0 0.0
  %167 = vmatpush1.msra.mxu0 0.0
  %168 = vmatprep.subr.mxu0 0.0
  %169 = vmatpush1.msra.mxu0 0.0
  %170 = vmatprep.subr.mxu0 0.0
  %171 = vmatpush1.msra.mxu0 0.0
  %172 = vmatprep.subr.mxu0 0.0
  %173 = vmatpush1.msra.mxu0 0.0
  %174 = vmatprep.subr.mxu0 0.0
  %175 = vmatpush1.msra.mxu0 0.0
  %176 = vmatprep.subr.mxu0 0.0
  %177 = vmatpush1.msra.mxu0 0.0
  %178 = vmatprep.subr.mxu0 0.0
  %179 = vmatpush1.msra.mxu0 0.0
  %180 = vmatprep.subr.mxu0 0.0
  %181 = vmatpush1.msra.mxu0 0.0
  %182 = vmatprep.subr.mxu0 0.0
  %183 = vmatpush1.msra.mxu0 0.0
  %184 = vmatprep.subr.mxu0 0.0
  %185 = vmatpush1.msra.mxu0 0.0
  %186 = vmatprep.subr.mxu0 %v160
  %187 = vmatpush1.msra.mxu0 %v157
  %188 = vmatprep.subr.mxu0 %v79
  %189 = vmatpush1.msra.mxu0 %v78
  %190 = vmatprep.subr.mxu0 %v77
  %191 = vmatpush1.msra.mxu0 %v76
  %192 = vmatprep.subr.mxu0 %v75
  %193 = vmatpush1.msra.mxu0 %v74
  %194 = vmatprep.subr.mxu0 0.0
  %195 = vmatpush2.msra.mxu0 0.0
  %196 = vmatprep.subr.mxu0 0.0
  %197 = vmatpush2.msra.mxu0 0.0
  %198 = vmatprep.subr.mxu0 0.0
  %199 = vmatpush2.msra.mxu0 0.0
  %200 = vmatprep.subr.mxu0 0.0
  %201 = vmatpush2.msra.mxu0 0.0
  %202 = vmatprep.subr.mxu0 0.0
  %203 = vmatpush2.msra.mxu0 0.0
  %204 = vmatprep.subr.mxu0 0.0
  %205 = vmatpush2.msra.mxu0 0.0
  %206 = vmatprep.subr.mxu0 0.0
  %207 = vmatpush2.msra.mxu0 0.0
  %208 = vmatprep.subr.mxu0 0.0
  %209 = vmatpush2.msra.mxu0 0.0
  %210 = vmatprep.subr.mxu0 0.0
  %211 = vmatpush2.msra.mxu0 0.0
  %212 = vmatprep.subr.mxu0 0.0
  %213 = vmatpush2.msra.mxu0 0.0
  %214 = vmatprep.subr.mxu0 0.0
  %215 = vmatpush2.msra.mxu0 0.0
  %216 = vmatprep.subr.mxu0 0.0
  %217 = vmatpush2.msra.mxu0 0.0
  %218 = vmatprep.subr.mxu0 0.0
  %219 = vmatpush2.msra.mxu0 0.0
  %220 = vmatprep.subr.mxu0 0.0
  %221 = vmatpush2.msra.mxu0 0.0
  %222 = vmatprep.subr.mxu0 0.0
  %223 = vmatpush2.msra.mxu0 0.0
  %224 = vmatprep.subr.mxu0 0.0
  %225 = vmatpush2.msra.mxu0 0.0
  %226 = vmatprep.mubr.f32.mxu0 0.0
  %227 = vmatmul.mubr.f32.gmra.mxu0 %v84
  %v228 = vpop.f32.mrf.mxu0
  %v229 = vadd.f32 0.0, %v228
  %v230 = vpop.f32.mrf.mxu0
  %v231 = vadd.f32 0.0, %v230
  %232 = vmatprep.mubr.f32.mxu0 0.0
  %233 = vmatmul.mubr.f32.gmra.mxu0 %v87
  %v234 = vpop.f32.mrf.mxu0
  %v235 = vadd.f32 0.0, %v234
  %v236 = vpop.f32.mrf.mxu0
  %v237 = vadd.f32 0.0, %v236
  %238 = vmatprep.mubr.f32.mxu0 0.0
  %239 = vmatmul.mubr.f32.gmra.mxu0 %v90
  %v240 = vpop.f32.mrf.mxu0
  %v241 = vadd.f32 0.0, %v240
  %v242 = vpop.f32.mrf.mxu0
  %v243 = vadd.f32 0.0, %v242
  %244 = vmatprep.mubr.f32.mxu0 0.0
  %245 = vmatmul.mubr.f32.gmra.mxu0 %v93
  %v246 = vpop.f32.mrf.mxu0
  %v247 = vadd.f32 0.0, %v246
  %v248 = vpop.f32.mrf.mxu0
  %v249 = vadd.f32 0.0, %v248
  %250 = vmatprep.mubr.f32.mxu0 0.0
  %251 = vmatmul.mubr.f32.gmra.mxu0 %v96
  %v252 = vpop.f32.mrf.mxu0
  %v253 = vadd.f32 0.0, %v252
  %v254 = vpop.f32.mrf.mxu0
  %v255 = vadd.f32 0.0, %v254
  %256 = vmatprep.mubr.f32.mxu0 0.0
  %257 = vmatmul.mubr.f32.gmra.mxu0 %v99
  %v258 = vpop.f32.mrf.mxu0
  %v259 = vadd.f32 0.0, %v258
  %v260 = vpop.f32.mrf.mxu0
  %v261 = vadd.f32 0.0, %v260
  %262 = vmatprep.mubr.f32.mxu0 0.0
  %263 = vmatmul.mubr.f32.gmra.mxu0 %v102
  %v264 = vpop.f32.mrf.mxu0
  %v265 = vadd.f32 0.0, %v264
  %v266 = vpop.f32.mrf.mxu0
  %v267 = vadd.f32 0.0, %v266
  %268 = vmatprep.mubr.f32.mxu0 0.0
  %269 = vmatmul.mubr.f32.gmra.mxu0 %v105
  %v270 = vpop.f32.mrf.mxu0
  %v271 = vadd.f32 0.0, %v270
  %v272 = vpop.f32.mrf.mxu0
  %v273 = vadd.f32 0.0, %v272
  %274 = vmatprep.mubr.f32.mxu0 0.0
  %275 = vmatmul.mubr.f32.gmra.mxu0 %v108
  %v276 = vpop.f32.mrf.mxu0
  %v277 = vadd.f32 0.0, %v276
  %v278 = vpop.f32.mrf.mxu0
  %v279 = vadd.f32 0.0, %v278
  %280 = vmatprep.mubr.f32.mxu0 0.0
  %281 = vmatmul.mubr.f32.gmra.mxu0 %v111
  %v282 = vpop.f32.mrf.mxu0
  %v283 = vadd.f32 0.0, %v282
  %v284 = vpop.f32.mrf.mxu0
  %v285 = vadd.f32 0.0, %v284
  %286 = vmatprep.mubr.f32.mxu0 0.0
  %287 = vmatmul.mubr.f32.gmra.mxu0 %v114
  %v288 = vpop.f32.mrf.mxu0
  %v289 = vadd.f32 0.0, %v288
  %v290 = vpop.f32.mrf.mxu0
  %v291 = vadd.f32 0.0, %v290
  %292 = vmatprep.mubr.f32.mxu0 0.0
  %293 = vmatmul.mubr.f32.gmra.mxu0 %v117
  %v294 = vpop.f32.mrf.mxu0
  %v295 = vadd.f32 0.0, %v294
  %v296 = vpop.f32.mrf.mxu0
  %v297 = vadd.f32 0.0, %v296
  %298 = vmatprep.mubr.f32.mxu0 0.0
  %299 = vmatmul.mubr.f32.gmra.mxu0 %v120
  %v300 = vpop.f32.mrf.mxu0
  %v301 = vadd.f32 0.0, %v300
  %v302 = vpop.f32.mrf.mxu0
  %v303 = vadd.f32 0.0, %v302
  %304 = vmatprep.mubr.f32.mxu0 0.0
  %305 = vmatmul.mubr.f32.gmra.mxu0 %v123
  %v306 = vpop.f32.mrf.mxu0
  %v307 = vadd.f32 0.0, %v306
  %v308 = vpop.f32.mrf.mxu0
  %v309 = vadd.f32 0.0, %v308
  %310 = vmatprep.mubr.f32.mxu0 0.0
  %311 = vmatmul.mubr.f32.gmra.mxu0 %v126
  %v312 = vpop.f32.mrf.mxu0
  %v313 = vadd.f32 0.0, %v312
  %v314 = vpop.f32.mrf.mxu0
  %v315 = vadd.f32 0.0, %v314
  %316 = vmatprep.mubr.f32.mxu0 0.0
  %317 = vmatmul.mubr.f32.gmra.mxu0 %v129
  %v318 = vpop.f32.mrf.mxu0
  %v319 = vadd.f32 0.0, %v318
  %v320 = vpop.f32.mrf.mxu0
  %v321 = vadd.f32 0.0, %v320
  %322 = vmatprep.mubr.f32.mxu0 0.0
  %323 = vmatmul.mubr.f32.gmra.mxu0 %v132
  %v324 = vpop.f32.mrf.mxu0
  %v325 = vadd.f32 0.0, %v324
  %v326 = vpop.f32.mrf.mxu0
  %v327 = vadd.f32 0.0, %v326
  %328 = vmatprep.mubr.f32.mxu0 0.0
  %329 = vmatmul.mubr.f32.gmra.mxu0 %v135
  %v330 = vpop.f32.mrf.mxu0
  %v331 = vadd.f32 0.0, %v330
  %v332 = vpop.f32.mrf.mxu0
  %v333 = vadd.f32 0.0, %v332
  %334 = vmatprep.mubr.f32.mxu0 0.0
  %335 = vmatmul.mubr.f32.gmra.mxu0 %v138
  %v336 = vpop.f32.mrf.mxu0
  %v337 = vadd.f32 0.0, %v336
  %v338 = vpop.f32.mrf.mxu0
  %v339 = vadd.f32 0.0, %v338
  %340 = vmatprep.mubr.f32.mxu0 0.0
  %341 = vmatmul.mubr.f32.gmra.mxu0 %v141
  %v342 = vpop.f32.mrf.mxu0
  %v343 = vadd.f32 0.0, %v342
  %v344 = vpop.f32.mrf.mxu0
  %v345 = vadd.f32 0.0, %v344
  %346 = vmatprep.mubr.f32.mxu0 0.0
  %347 = vmatmul.mubr.f32.gmra.mxu0 %v144
  %v348 = vpop.f32.mrf.mxu0
  %v349 = vadd.f32 0.0, %v348
  %v350 = vpop.f32.mrf.mxu0
  %v351 = vadd.f32 0.0, %v350
  %352 = vmatprep.mubr.f32.mxu0 0.0
  %353 = vmatmul.mubr.f32.gmra.mxu0 %v147
  %v354 = vpop.f32.mrf.mxu0
  %v355 = vadd.f32 0.0, %v354
  %v356 = vpop.f32.mrf.mxu0
  %v357 = vadd.f32 0.0, %v356
  %358 = vmatprep.mubr.f32.mxu0 0.0
  %359 = vmatmul.mubr.f32.gmra.mxu0 %v150
  %v360 = vpop.f32.mrf.mxu0
  %v361 = vadd.f32 0.0, %v360
  %v362 = vpop.f32.mrf.mxu0
  %v363 = vadd.f32 0.0, %v362
  %364 = vmatprep.mubr.f32.mxu0 0.0
  %365 = vmatmul.mubr.f32.gmra.mxu0 %v153
  %v366 = vpop.f32.mrf.mxu0
  %v367 = vadd.f32 0.0, %v366
  %v368 = vpop.f32.mrf.mxu0
  %v369 = vadd.f32 0.0, %v368
  %370 = vdwg.mxu0
  %v372 = vsel %vm82, %v37, 0
  %v375 = vsel %vm155, %v71, 0
  %v378 = vsel %vm155, %v72, 0
  %380 = vmatprep.subr.mxu0 0.0
  %381 = vmatpush1.msra.mxu0 0.0
  %382 = vmatprep.subr.mxu0 0.0
  %383 = vmatpush1.msra.mxu0 0.0
  %384 = vmatprep.subr.mxu0 0.0
  %385 = vmatpush1.msra.mxu0 0.0
  %386 = vmatprep.subr.mxu0 0.0
  %387 = vmatpush1.msra.mxu0 0.0
  %388 = vmatprep.subr.mxu0 0.0
  %389 = vmatpush1.msra.mxu0 0.0
  %390 = vmatprep.subr.mxu0 0.0
  %391 = vmatpush1.msra.mxu0 0.0
  %392 = vmatprep.subr.mxu0 0.0
  %393 = vmatpush1.msra.mxu0 0.0
  %394 = vmatprep.subr.mxu0 0.0
  %395 = vmatpush1.msra.mxu0 0.0
  %396 = vmatprep.subr.mxu0 0.0
  %397 = vmatpush1.msra.mxu0 0.0
  %398 = vmatprep.subr.mxu0 0.0
  %399 = vmatpush1.msra.mxu0 0.0
  %400 = vmatprep.subr.mxu0 0.0
  %401 = vmatpush1.msra.mxu0 0.0
  %402 = vmatprep.subr.mxu0 0.0
  %403 = vmatpush1.msra.mxu0 0.0
  %404 = vmatprep.subr.mxu0 %v378
  %405 = vmatpush1.msra.mxu0 %v375
  %406 = vmatprep.subr.mxu0 %v70
  %407 = vmatpush1.msra.mxu0 %v69
  %408 = vmatprep.subr.mxu0 %v68
  %409 = vmatpush1.msra.mxu0 %v67
  %410 = vmatprep.subr.mxu0 %v66
  %411 = vmatpush1.msra.mxu0 %v65
  %412 = vmatprep.subr.mxu0 0.0
  %413 = vmatpush2.msra.mxu0 0.0
  %414 = vmatprep.subr.mxu0 0.0
  %415 = vmatpush2.msra.mxu0 0.0
  %416 = vmatprep.subr.mxu0 0.0
  %417 = vmatpush2.msra.mxu0 0.0
  %418 = vmatprep.subr.mxu0 0.0
  %419 = vmatpush2.msra.mxu0 0.0
  %420 = vmatprep.subr.mxu0 0.0
  %421 = vmatpush2.msra.mxu0 0.0
  %422 = vmatprep.subr.mxu0 0.0
  %423 = vmatpush2.msra.mxu0 0.0
  %424 = vmatprep.subr.mxu0 0.0
  %425 = vmatpush2.msra.mxu0 0.0
  %426 = vmatprep.subr.mxu0 0.0
  %427 = vmatpush2.msra.mxu0 0.0
  %428 = vmatprep.subr.mxu0 0.0
  %429 = vmatpush2.msra.mxu0 0.0
  %430 = vmatprep.subr.mxu0 0.0
  %431 = vmatpush2.msra.mxu0 0.0
  %432 = vmatprep.subr.mxu0 0.0
  %433 = vmatpush2.msra.mxu0 0.0
  %434 = vmatprep.subr.mxu0 0.0
  %435 = vmatpush2.msra.mxu0 0.0
  %436 = vmatprep.subr.mxu0 0.0
  %437 = vmatpush2.msra.mxu0 0.0
  %438 = vmatprep.subr.mxu0 0.0
  %439 = vmatpush2.msra.mxu0 0.0
  %440 = vmatprep.subr.mxu0 0.0
  %441 = vmatpush2.msra.mxu0 0.0
  %442 = vmatprep.subr.mxu0 0.0
  %443 = vmatpush2.msra.mxu0 0.0
  %444 = vmatprep.mubr.f32.mxu0 0.0
  %445 = vmatmul.mubr.f32.gmra.mxu0 %v372
  %v446 = vpop.f32.mrf.mxu0
  %v447 = vadd.f32 %v229, %v446
  %v448 = vpop.f32.mrf.mxu0
  %v449 = vadd.f32 %v231, %v448
  %450 = vmatprep.mubr.f32.mxu0 0.0
  %451 = vmatmul.mubr.f32.gmra.mxu0 %v84
  %v452 = vpop.f32.mrf.mxu0
  %v453 = vadd.f32 %v235, %v452
  %v454 = vpop.f32.mrf.mxu0
  %v455 = vadd.f32 %v237, %v454
  %456 = vmatprep.mubr.f32.mxu0 0.0
  %457 = vmatmul.mubr.f32.gmra.mxu0 %v87
  %v458 = vpop.f32.mrf.mxu0
  %v459 = vadd.f32 %v241, %v458
  %v460 = vpop.f32.mrf.mxu0
  %v461 = vadd.f32 %v243, %v460
  %462 = vmatprep.mubr.f32.mxu0 0.0
  %463 = vmatmul.mubr.f32.gmra.mxu0 %v90
  %v464 = vpop.f32.mrf.mxu0
  %v465 = vadd.f32 %v247, %v464
  %v466 = vpop.f32.mrf.mxu0
  %v467 = vadd.f32 %v249, %v466
  %468 = vmatprep.mubr.f32.mxu0 0.0
  %469 = vmatmul.mubr.f32.gmra.mxu0 %v93
  %v470 = vpop.f32.mrf.mxu0
  %v471 = vadd.f32 %v253, %v470
  %v472 = vpop.f32.mrf.mxu0
  %v473 = vadd.f32 %v255, %v472
  %474 = vmatprep.mubr.f32.mxu0 0.0
  %475 = vmatmul.mubr.f32.gmra.mxu0 %v96
  %v476 = vpop.f32.mrf.mxu0
  %v477 = vadd.f32 %v259, %v476
  %v478 = vpop.f32.mrf.mxu0
  %v479 = vadd.f32 %v261, %v478
  %480 = vmatprep.mubr.f32.mxu0 0.0
  %481 = vmatmul.mubr.f32.gmra.mxu0 %v99
  %v482 = vpop.f32.mrf.mxu0
  %v483 = vadd.f32 %v265, %v482
  %v484 = vpop.f32.mrf.mxu0
  %v485 = vadd.f32 %v267, %v484
  %486 = vmatprep.mubr.f32.mxu0 0.0
  %487 = vmatmul.mubr.f32.gmra.mxu0 %v102
  %v488 = vpop.f32.mrf.mxu0
  %v489 = vadd.f32 %v271, %v488
  %v490 = vpop.f32.mrf.mxu0
  %v491 = vadd.f32 %v273, %v490
  %492 = vmatprep.mubr.f32.mxu0 0.0
  %493 = vmatmul.mubr.f32.gmra.mxu0 %v105
  %v494 = vpop.f32.mrf.mxu0
  %v495 = vadd.f32 %v277, %v494
  %v496 = vpop.f32.mrf.mxu0
  %v497 = vadd.f32 %v279, %v496
  %498 = vmatprep.mubr.f32.mxu0 0.0
  %499 = vmatmul.mubr.f32.gmra.mxu0 %v108
  %v500 = vpop.f32.mrf.mxu0
  %v501 = vadd.f32 %v283, %v500
  %v502 = vpop.f32.mrf.mxu0
  %v503 = vadd.f32 %v285, %v502
  %504 = vmatprep.mubr.f32.mxu0 0.0
  %505 = vmatmul.mubr.f32.gmra.mxu0 %v111
  %v506 = vpop.f32.mrf.mxu0
  %v507 = vadd.f32 %v289, %v506
  %v508 = vpop.f32.mrf.mxu0
  %v509 = vadd.f32 %v291, %v508
  %510 = vmatprep.mubr.f32.mxu0 0.0
  %511 = vmatmul.mubr.f32.gmra.mxu0 %v114
  %v512 = vpop.f32.mrf.mxu0
  %v513 = vadd.f32 %v295, %v512
  %v514 = vpop.f32.mrf.mxu0
  %v515 = vadd.f32 %v297, %v514
  %516 = vmatprep.mubr.f32.mxu0 0.0
  %517 = vmatmul.mubr.f32.gmra.mxu0 %v117
  %v518 = vpop.f32.mrf.mxu0
  %v519 = vadd.f32 %v301, %v518
  %v520 = vpop.f32.mrf.mxu0
  %v521 = vadd.f32 %v303, %v520
  %522 = vmatprep.mubr.f32.mxu0 0.0
  %523 = vmatmul.mubr.f32.gmra.mxu0 %v120
  %v524 = vpop.f32.mrf.mxu0
  %v525 = vadd.f32 %v307, %v524
  %v526 = vpop.f32.mrf.mxu0
  %v527 = vadd.f32 %v309, %v526
  %528 = vmatprep.mubr.f32.mxu0 0.0
  %529 = vmatmul.mubr.f32.gmra.mxu0 %v123
  %v530 = vpop.f32.mrf.mxu0
  %v531 = vadd.f32 %v313, %v530
  %v532 = vpop.f32.mrf.mxu0
  %v533 = vadd.f32 %v315, %v532
  %534 = vmatprep.mubr.f32.mxu0 0.0
  %535 = vmatmul.mubr.f32.gmra.mxu0 %v126
  %v536 = vpop.f32.mrf.mxu0
  %v537 = vadd.f32 %v319, %v536
  %v538 = vpop.f32.mrf.mxu0
  %v539 = vadd.f32 %v321, %v538
  %540 = vmatprep.mubr.f32.mxu0 0.0
  %541 = vmatmul.mubr.f32.gmra.mxu0 %v129
  %v542 = vpop.f32.mrf.mxu0
  %v543 = vadd.f32 %v325, %v542
  %v544 = vpop.f32.mrf.mxu0
  %v545 = vadd.f32 %v327, %v544
  %546 = vmatprep.mubr.f32.mxu0 0.0
  %547 = vmatmul.mubr.f32.gmra.mxu0 %v132
  %v548 = vpop.f32.mrf.mxu0
  %v549 = vadd.f32 %v331, %v548
  %v550 = vpop.f32.mrf.mxu0
  %v551 = vadd.f32 %v333, %v550
  %552 = vmatprep.mubr.f32.mxu0 0.0
  %553 = vmatmul.mubr.f32.gmra.mxu0 %v135
  %v554 = vpop.f32.mrf.mxu0
  %v555 = vadd.f32 %v337, %v554
  %v556 = vpop.f32.mrf.mxu0
  %v557 = vadd.f32 %v339, %v556
  %558 = vmatprep.mubr.f32.mxu0 0.0
  %559 = vmatmul.mubr.f32.gmra.mxu0 %v138
  %v560 = vpop.f32.mrf.mxu0
  %v561 = vadd.f32 %v343, %v560
  %v562 = vpop.f32.mrf.mxu0
  %v563 = vadd.f32 %v345, %v562
  %564 = vmatprep.mubr.f32.mxu0 0.0
  %565 = vmatmul.mubr.f32.gmra.mxu0 %v141
  %v566 = vpop.f32.mrf.mxu0
  %v567 = vadd.f32 %v349, %v566
  %v568 = vpop.f32.mrf.mxu0
  %v569 = vadd.f32 %v351, %v568
  %570 = vmatprep.mubr.f32.mxu0 0.0
  %571 = vmatmul.mubr.f32.gmra.mxu0 %v144
  %v572 = vpop.f32.mrf.mxu0
  %v573 = vadd.f32 %v355, %v572
  %v574 = vpop.f32.mrf.mxu0
  %v575 = vadd.f32 %v357, %v574
  %576 = vmatprep.mubr.f32.mxu0 0.0
  %577 = vmatmul.mubr.f32.gmra.mxu0 %v147
  %v578 = vpop.f32.mrf.mxu0
  %v579 = vadd.f32 %v361, %v578
  %v580 = vpop.f32.mrf.mxu0
  %v581 = vadd.f32 %v363, %v580
  %582 = vmatprep.mubr.f32.mxu0 0.0
  %583 = vmatmul.mubr.f32.gmra.mxu0 %v150
  %v584 = vpop.f32.mrf.mxu0
  %v585 = vadd.f32 %v367, %v584
  %v586 = vpop.f32.mrf.mxu0
  %v587 = vadd.f32 %v369, %v586
  %588 = vdwg.mxu0
  %s589 = scalar_lea.vmem %s1, 128
  %v590 = vld [vmem:[%s589] sm:$0xff]
  %v591 = vld [vmem:[%s589 + $0x8] sm:$0xff]
  %v592 = vld [vmem:[%s589 + $0x10] sm:$0xff]
  %v593 = vld [vmem:[%s589 + $0x18] sm:$0xff]
  %v594 = vld [vmem:[%s589 + $0x20] sm:$0xff]
  %v595 = vld [vmem:[%s589 + $0x28] sm:$0xff]
  %v596 = vld [vmem:[%s589 + $0x30] sm:$0xf]
  %v597 = vld [vmem:[%s589 + $0x38] sm:$0xf]
  %v599 = vsel %vm82, %v62, 0
  %v602 = vsel %vm155, %v596, 0
  %v605 = vsel %vm155, %v597, 0
  %607 = vmatprep.subr.mxu0 0.0
  %608 = vmatpush1.msra.mxu0 0.0
  %609 = vmatprep.subr.mxu0 0.0
  %610 = vmatpush1.msra.mxu0 0.0
  %611 = vmatprep.subr.mxu0 0.0
  %612 = vmatpush1.msra.mxu0 0.0
  %613 = vmatprep.subr.mxu0 0.0
  %614 = vmatpush1.msra.mxu0 0.0
  %615 = vmatprep.subr.mxu0 0.0
  %616 = vmatpush1.msra.mxu0 0.0
  %617 = vmatprep.subr.mxu0 0.0
  %618 = vmatpush1.msra.mxu0 0.0
  %619 = vmatprep.subr.mxu0 0.0
  %620 = vmatpush1.msra.mxu0 0.0
  %621 = vmatprep.subr.mxu0 0.0
  %622 = vmatpush1.msra.mxu0 0.0
  %623 = vmatprep.subr.mxu0 0.0
  %624 = vmatpush1.msra.mxu0 0.0
  %625 = vmatprep.subr.mxu0 0.0
  %626 = vmatpush1.msra.mxu0 0.0
  %627 = vmatprep.subr.mxu0 0.0
  %628 = vmatpush1.msra.mxu0 0.0
  %629 = vmatprep.subr.mxu0 0.0
  %630 = vmatpush1.msra.mxu0 0.0
  %631 = vmatprep.subr.mxu0 %v605
  %632 = vmatpush1.msra.mxu0 %v602
  %633 = vmatprep.subr.mxu0 %v595
  %634 = vmatpush1.msra.mxu0 %v594
  %635 = vmatprep.subr.mxu0 %v593
  %636 = vmatpush1.msra.mxu0 %v592
  %637 = vmatprep.subr.mxu0 %v591
  %638 = vmatpush1.msra.mxu0 %v590
  %639 = vmatprep.subr.mxu0 0.0
  %640 = vmatpush2.msra.mxu0 0.0
  %641 = vmatprep.subr.mxu0 0.0
  %642 = vmatpush2.msra.mxu0 0.0
  %643 = vmatprep.subr.mxu0 0.0
  %644 = vmatpush2.msra.mxu0 0.0
  %645 = vmatprep.subr.mxu0 0.0
  %646 = vmatpush2.msra.mxu0 0.0
  %647 = vmatprep.subr.mxu0 0.0
  %648 = vmatpush2.msra.mxu0 0.0
  %649 = vmatprep.subr.mxu0 0.0
  %650 = vmatpush2.msra.mxu0 0.0
  %651 = vmatprep.subr.mxu0 0.0
  %652 = vmatpush2.msra.mxu0 0.0
  %653 = vmatprep.subr.mxu0 0.0
  %654 = vmatpush2.msra.mxu0 0.0
  %655 = vmatprep.subr.mxu0 0.0
  %656 = vmatpush2.msra.mxu0 0.0
  %657 = vmatprep.subr.mxu0 0.0
  %658 = vmatpush2.msra.mxu0 0.0
  %659 = vmatprep.subr.mxu0 0.0
  %660 = vmatpush2.msra.mxu0 0.0
  %661 = vmatprep.subr.mxu0 0.0
  %662 = vmatpush2.msra.mxu0 0.0
  %663 = vmatprep.subr.mxu0 0.0
  %664 = vmatpush2.msra.mxu0 0.0
  %665 = vmatprep.subr.mxu0 0.0
  %666 = vmatpush2.msra.mxu0 0.0
  %667 = vmatprep.subr.mxu0 0.0
  %668 = vmatpush2.msra.mxu0 0.0
  %669 = vmatprep.subr.mxu0 0.0
  %670 = vmatpush2.msra.mxu0 0.0
  %671 = vmatprep.mubr.f32.mxu0 0.0
  %672 = vmatmul.mubr.f32.gmra.mxu0 %v87
  %v673 = vpop.f32.mrf.mxu0
  %v674 = vadd.f32 0.0, %v673
  %v675 = vpop.f32.mrf.mxu0
  %v676 = vadd.f32 0.0, %v675
  %677 = vmatprep.mubr.f32.mxu0 0.0
  %678 = vmatmul.mubr.f32.gmra.mxu0 %v90
  %v679 = vpop.f32.mrf.mxu0
  %v680 = vadd.f32 0.0, %v679
  %v681 = vpop.f32.mrf.mxu0
  %v682 = vadd.f32 0.0, %v681
  %683 = vmatprep.mubr.f32.mxu0 0.0
  %684 = vmatmul.mubr.f32.gmra.mxu0 %v93
  %v685 = vpop.f32.mrf.mxu0
  %v686 = vadd.f32 0.0, %v685
  %v687 = vpop.f32.mrf.mxu0
  %v688 = vadd.f32 0.0, %v687
  %689 = vmatprep.mubr.f32.mxu0 0.0
  %690 = vmatmul.mubr.f32.gmra.mxu0 %v96
  %v691 = vpop.f32.mrf.mxu0
  %v692 = vadd.f32 0.0, %v691
  %v693 = vpop.f32.mrf.mxu0
  %v694 = vadd.f32 0.0, %v693
  %695 = vmatprep.mubr.f32.mxu0 0.0
  %696 = vmatmul.mubr.f32.gmra.mxu0 %v99
  %v697 = vpop.f32.mrf.mxu0
  %v698 = vadd.f32 0.0, %v697
  %v699 = vpop.f32.mrf.mxu0
  %v700 = vadd.f32 0.0, %v699
  %701 = vmatprep.mubr.f32.mxu0 0.0
  %702 = vmatmul.mubr.f32.gmra.mxu0 %v102
  %v703 = vpop.f32.mrf.mxu0
  %v704 = vadd.f32 0.0, %v703
  %v705 = vpop.f32.mrf.mxu0
  %v706 = vadd.f32 0.0, %v705
  %707 = vmatprep.mubr.f32.mxu0 0.0
  %708 = vmatmul.mubr.f32.gmra.mxu0 %v105
  %v709 = vpop.f32.mrf.mxu0
  %v710 = vadd.f32 0.0, %v709
  %v711 = vpop.f32.mrf.mxu0
  %v712 = vadd.f32 0.0, %v711
  %713 = vmatprep.mubr.f32.mxu0 0.0
  %714 = vmatmul.mubr.f32.gmra.mxu0 %v108
  %v715 = vpop.f32.mrf.mxu0
  %v716 = vadd.f32 0.0, %v715
  %v717 = vpop.f32.mrf.mxu0
  %v718 = vadd.f32 0.0, %v717
  %719 = vmatprep.mubr.f32.mxu0 0.0
  %720 = vmatmul.mubr.f32.gmra.mxu0 %v111
  %v721 = vpop.f32.mrf.mxu0
  %v722 = vadd.f32 0.0, %v721
  %v723 = vpop.f32.mrf.mxu0
  %v724 = vadd.f32 0.0, %v723
  %725 = vmatprep.mubr.f32.mxu0 0.0
  %726 = vmatmul.mubr.f32.gmra.mxu0 %v114
  %v727 = vpop.f32.mrf.mxu0
  %v728 = vadd.f32 0.0, %v727
  %v729 = vpop.f32.mrf.mxu0
  %v730 = vadd.f32 0.0, %v729
  %731 = vmatprep.mubr.f32.mxu0 0.0
  %732 = vmatmul.mubr.f32.gmra.mxu0 %v117
  %v733 = vpop.f32.mrf.mxu0
  %v734 = vadd.f32 0.0, %v733
  %v735 = vpop.f32.mrf.mxu0
  %v736 = vadd.f32 0.0, %v735
  %737 = vmatprep.mubr.f32.mxu0 0.0
  %738 = vmatmul.mubr.f32.gmra.mxu0 %v120
  %v739 = vpop.f32.mrf.mxu0
  %v740 = vadd.f32 0.0, %v739
  %v741 = vpop.f32.mrf.mxu0
  %v742 = vadd.f32 0.0, %v741
  %743 = vmatprep.mubr.f32.mxu0 0.0
  %744 = vmatmul.mubr.f32.gmra.mxu0 %v123
  %v745 = vpop.f32.mrf.mxu0
  %v746 = vadd.f32 0.0, %v745
  %v747 = vpop.f32.mrf.mxu0
  %v748 = vadd.f32 0.0, %v747
  %749 = vmatprep.mubr.f32.mxu0 0.0
  %750 = vmatmul.mubr.f32.gmra.mxu0 %v126
  %v751 = vpop.f32.mrf.mxu0
  %v752 = vadd.f32 0.0, %v751
  %v753 = vpop.f32.mrf.mxu0
  %v754 = vadd.f32 0.0, %v753
  %755 = vmatprep.mubr.f32.mxu0 0.0
  %756 = vmatmul.mubr.f32.gmra.mxu0 %v129
  %v757 = vpop.f32.mrf.mxu0
  %v758 = vadd.f32 0.0, %v757
  %v759 = vpop.f32.mrf.mxu0
  %v760 = vadd.f32 0.0, %v759
  %761 = vmatprep.mubr.f32.mxu0 0.0
  %762 = vmatmul.mubr.f32.gmra.mxu0 %v132
  %v763 = vpop.f32.mrf.mxu0
  %v764 = vadd.f32 0.0, %v763
  %v765 = vpop.f32.mrf.mxu0
  %v766 = vadd.f32 0.0, %v765
  %767 = vmatprep.mubr.f32.mxu0 0.0
  %768 = vmatmul.mubr.f32.gmra.mxu0 %v135
  %v769 = vpop.f32.mrf.mxu0
  %v770 = vadd.f32 0.0, %v769
  %v771 = vpop.f32.mrf.mxu0
  %v772 = vadd.f32 0.0, %v771
  %773 = vmatprep.mubr.f32.mxu0 0.0
  %774 = vmatmul.mubr.f32.gmra.mxu0 %v138
  %v775 = vpop.f32.mrf.mxu0
  %v776 = vadd.f32 0.0, %v775
  %v777 = vpop.f32.mrf.mxu0
  %v778 = vadd.f32 0.0, %v777
  %779 = vmatprep.mubr.f32.mxu0 0.0
  %780 = vmatmul.mubr.f32.gmra.mxu0 %v141
  %v781 = vpop.f32.mrf.mxu0
  %v782 = vadd.f32 0.0, %v781
  %v783 = vpop.f32.mrf.mxu0
  %v784 = vadd.f32 0.0, %v783
  %785 = vmatprep.mubr.f32.mxu0 0.0
  %786 = vmatmul.mubr.f32.gmra.mxu0 %v144
  %v787 = vpop.f32.mrf.mxu0
  %v788 = vadd.f32 0.0, %v787
  %v789 = vpop.f32.mrf.mxu0
  %v790 = vadd.f32 0.0, %v789
  %791 = vmatprep.mubr.f32.mxu0 0.0
  %792 = vmatmul.mubr.f32.gmra.mxu0 %v147
  %v793 = vpop.f32.mrf.mxu0
  %v794 = vadd.f32 0.0, %v793
  %v795 = vpop.f32.mrf.mxu0
  %v796 = vadd.f32 0.0, %v795
  %797 = vmatprep.mubr.f32.mxu0 0.0
  %798 = vmatmul.mubr.f32.gmra.mxu0 %v150
  %v799 = vpop.f32.mrf.mxu0
  %v800 = vadd.f32 0.0, %v799
  %v801 = vpop.f32.mrf.mxu0
  %v802 = vadd.f32 0.0, %v801
  %803 = vmatprep.mubr.f32.mxu0 0.0
  %804 = vmatmul.mubr.f32.gmra.mxu0 %v153
  %v805 = vpop.f32.mrf.mxu0
  %v806 = vadd.f32 0.0, %v805
  %v807 = vpop.f32.mrf.mxu0
  %v808 = vadd.f32 0.0, %v807
  %809 = vmatprep.mubr.f32.mxu0 0.0
  %810 = vmatmul.mubr.f32.gmra.mxu0 %v599
  %v811 = vpop.f32.mrf.mxu0
  %v812 = vadd.f32 0.0, %v811
  %v813 = vpop.f32.mrf.mxu0
  %v814 = vadd.f32 0.0, %v813
  %815 = vdwg.mxu0
  %v816 = vadd.f32 %v447, %v674
  %v817 = vadd.f32 %v449, %v676
  %v818 = vadd.f32 %v453, %v680
  %v819 = vadd.f32 %v455, %v682
  %v820 = vadd.f32 %v459, %v686
  %v821 = vadd.f32 %v461, %v688
  %v822 = vadd.f32 %v465, %v692
  %v823 = vadd.f32 %v467, %v694
  %v824 = vadd.f32 %v471, %v698
  %v825 = vadd.f32 %v473, %v700
  %v826 = vadd.f32 %v477, %v704
  %v827 = vadd.f32 %v479, %v706
  %v828 = vadd.f32 %v483, %v710
  %v829 = vadd.f32 %v485, %v712
  %v830 = vadd.f32 %v489, %v716
  %v831 = vadd.f32 %v491, %v718
  %v832 = vadd.f32 %v495, %v722
  %v833 = vadd.f32 %v497, %v724
  %v834 = vadd.f32 %v501, %v728
  %v835 = vadd.f32 %v503, %v730
  %v836 = vadd.f32 %v507, %v734
  %v837 = vadd.f32 %v509, %v736
  %v838 = vadd.f32 %v513, %v740
  %v839 = vadd.f32 %v515, %v742
  %v840 = vadd.f32 %v519, %v746
  %v841 = vadd.f32 %v521, %v748
  %v842 = vadd.f32 %v525, %v752
  %v843 = vadd.f32 %v527, %v754
  %v844 = vadd.f32 %v531, %v758
  %v845 = vadd.f32 %v533, %v760
  %v846 = vadd.f32 %v537, %v764
  %v847 = vadd.f32 %v539, %v766
  %v848 = vadd.f32 %v543, %v770
  %v849 = vadd.f32 %v545, %v772
  %v850 = vadd.f32 %v549, %v776
  %v851 = vadd.f32 %v551, %v778
  %v852 = vadd.f32 %v555, %v782
  %v853 = vadd.f32 %v557, %v784
  %v854 = vadd.f32 %v561, %v788
  %v855 = vadd.f32 %v563, %v790
  %v856 = vadd.f32 %v567, %v794
  %v857 = vadd.f32 %v569, %v796
  %v858 = vadd.f32 %v573, %v800
  %v859 = vadd.f32 %v575, %v802
  %v860 = vadd.f32 %v579, %v806
  %v861 = vadd.f32 %v581, %v808
  %v862 = vadd.f32 %v585, %v812
  %v863 = vadd.f32 %v587, %v814
  %s864 = scalar_lea.vmem %s1, 192
  %v865 = vld [vmem:[%s864] sm:$0xff]
  %v866 = vld [vmem:[%s864 + $0x8] sm:$0xff]
  %v867 = vld [vmem:[%s864 + $0x10] sm:$0xff]
  %v868 = vld [vmem:[%s864 + $0x18] sm:$0xff]
  %v869 = vld [vmem:[%s864 + $0x20] sm:$0xff]
  %v870 = vld [vmem:[%s864 + $0x28] sm:$0xff]
  %v871 = vld [vmem:[%s864 + $0x30] sm:$0xf]
  %v872 = vld [vmem:[%s864 + $0x38] sm:$0xf]
  %v874 = vsel %vm82, %v63, 0
  %v877 = vsel %vm155, %v871, 0
  %v880 = vsel %vm155, %v872, 0
  %882 = vmatprep.subr.mxu0 0.0
  %883 = vmatpush1.msra.mxu0 0.0
  %884 = vmatprep.subr.mxu0 0.0
  %885 = vmatpush1.msra.mxu0 0.0
  %886 = vmatprep.subr.mxu0 0.0
  %887 = vmatpush1.msra.mxu0 0.0
  %888 = vmatprep.subr.mxu0 0.0
  %889 = vmatpush1.msra.mxu0 0.0
  %890 = vmatprep.subr.mxu0 0.0
  %891 = vmatpush1.msra.mxu0 0.0
  %892 = vmatprep.subr.mxu0 0.0
  %893 = vmatpush1.msra.mxu0 0.0
  %894 = vmatprep.subr.mxu0 0.0
  %895 = vmatpush1.msra.mxu0 0.0
  %896 = vmatprep.subr.mxu0 0.0
  %897 = vmatpush1.msra.mxu0 0.0
  %898 = vmatprep.subr.mxu0 0.0
  %899 = vmatpush1.msra.mxu0 0.0
  %900 = vmatprep.subr.mxu0 0.0
  %901 = vmatpush1.msra.mxu0 0.0
  %902 = vmatprep.subr.mxu0 0.0
  %903 = vmatpush1.msra.mxu0 0.0
  %904 = vmatprep.subr.mxu0 0.0
  %905 = vmatpush1.msra.mxu0 0.0
  %906 = vmatprep.subr.mxu0 %v880
  %907 = vmatpush1.msra.mxu0 %v877
  %908 = vmatprep.subr.mxu0 %v870
  %909 = vmatpush1.msra.mxu0 %v869
  %910 = vmatprep.subr.mxu0 %v868
  %911 = vmatpush1.msra.mxu0 %v867
  %912 = vmatprep.subr.mxu0 %v866
  %913 = vmatpush1.msra.mxu0 %v865
  %914 = vmatprep.subr.mxu0 0.0
  %915 = vmatpush2.msra.mxu0 0.0
  %916 = vmatprep.subr.mxu0 0.0
  %917 = vmatpush2.msra.mxu0 0.0
  %918 = vmatprep.subr.mxu0 0.0
  %919 = vmatpush2.msra.mxu0 0.0
  %920 = vmatprep.subr.mxu0 0.0
  %921 = vmatpush2.msra.mxu0 0.0
  %922 = vmatprep.subr.mxu0 0.0
  %923 = vmatpush2.msra.mxu0 0.0
  %924 = vmatprep.subr.mxu0 0.0
  %925 = vmatpush2.msra.mxu0 0.0
  %926 = vmatprep.subr.mxu0 0.0
  %927 = vmatpush2.msra.mxu0 0.0
  %928 = vmatprep.subr.mxu0 0.0
  %929 = vmatpush2.msra.mxu0 0.0
  %930 = vmatprep.subr.mxu0 0.0
  %931 = vmatpush2.msra.mxu0 0.0
  %932 = vmatprep.subr.mxu0 0.0
  %933 = vmatpush2.msra.mxu0 0.0
  %934 = vmatprep.subr.mxu0 0.0
  %935 = vmatpush2.msra.mxu0 0.0
  %936 = vmatprep.subr.mxu0 0.0
  %937 = vmatpush2.msra.mxu0 0.0
  %938 = vmatprep.subr.mxu0 0.0
  %939 = vmatpush2.msra.mxu0 0.0
  %940 = vmatprep.subr.mxu0 0.0
  %941 = vmatpush2.msra.mxu0 0.0
  %942 = vmatprep.subr.mxu0 0.0
  %943 = vmatpush2.msra.mxu0 0.0
  %944 = vmatprep.subr.mxu0 0.0
  %945 = vmatpush2.msra.mxu0 0.0
  %946 = vmatprep.mubr.f32.mxu0 0.0
  %947 = vmatmul.mubr.f32.gmra.mxu0 %v90
  %v948 = vpop.f32.mrf.mxu0
  %v949 = vadd.f32 0.0, %v948
  %v950 = vpop.f32.mrf.mxu0
  %v951 = vadd.f32 0.0, %v950
  %952 = vmatprep.mubr.f32.mxu0 0.0
  %953 = vmatmul.mubr.f32.gmra.mxu0 %v93
  %v954 = vpop.f32.mrf.mxu0
  %v955 = vadd.f32 0.0, %v954
  %v956 = vpop.f32.mrf.mxu0
  %v957 = vadd.f32 0.0, %v956
  %958 = vmatprep.mubr.f32.mxu0 0.0
  %959 = vmatmul.mubr.f32.gmra.mxu0 %v96
  %v960 = vpop.f32.mrf.mxu0
  %v961 = vadd.f32 0.0, %v960
  %v962 = vpop.f32.mrf.mxu0
  %v963 = vadd.f32 0.0, %v962
  %964 = vmatprep.mubr.f32.mxu0 0.0
  %965 = vmatmul.mubr.f32.gmra.mxu0 %v99
  %v966 = vpop.f32.mrf.mxu0
  %v967 = vadd.f32 0.0, %v966
  %v968 = vpop.f32.mrf.mxu0
  %v969 = vadd.f32 0.0, %v968
  %970 = vmatprep.mubr.f32.mxu0 0.0
  %971 = vmatmul.mubr.f32.gmra.mxu0 %v102
  %v972 = vpop.f32.mrf.mxu0
  %v973 = vadd.f32 0.0, %v972
  %v974 = vpop.f32.mrf.mxu0
  %v975 = vadd.f32 0.0, %v974
  %976 = vmatprep.mubr.f32.mxu0 0.0
  %977 = vmatmul.mubr.f32.gmra.mxu0 %v105
  %v978 = vpop.f32.mrf.mxu0
  %v979 = vadd.f32 0.0, %v978
  %v980 = vpop.f32.mrf.mxu0
  %v981 = vadd.f32 0.0, %v980
  %982 = vmatprep.mubr.f32.mxu0 0.0
  %983 = vmatmul.mubr.f32.gmra.mxu0 %v108
  %v984 = vpop.f32.mrf.mxu0
  %v985 = vadd.f32 0.0, %v984
  %v986 = vpop.f32.mrf.mxu0
  %v987 = vadd.f32 0.0, %v986
  %988 = vmatprep.mubr.f32.mxu0 0.0
  %989 = vmatmul.mubr.f32.gmra.mxu0 %v111
  %v990 = vpop.f32.mrf.mxu0
  %v991 = vadd.f32 0.0, %v990
  %v992 = vpop.f32.mrf.mxu0
  %v993 = vadd.f32 0.0, %v992
  %994 = vmatprep.mubr.f32.mxu0 0.0
  %995 = vmatmul.mubr.f32.gmra.mxu0 %v114
  %v996 = vpop.f32.mrf.mxu0
  %v997 = vadd.f32 0.0, %v996
  %v998 = vpop.f32.mrf.mxu0
  %v999 = vadd.f32 0.0, %v998
  %1000 = vmatprep.mubr.f32.mxu0 0.0
  %1001 = vmatmul.mubr.f32.gmra.mxu0 %v117
  %v1002 = vpop.f32.mrf.mxu0
  %v1003 = vadd.f32 0.0, %v1002
  %v1004 = vpop.f32.mrf.mxu0
  %v1005 = vadd.f32 0.0, %v1004
  %1006 = vmatprep.mubr.f32.mxu0 0.0
  %1007 = vmatmul.mubr.f32.gmra.mxu0 %v120
  %v1008 = vpop.f32.mrf.mxu0
  %v1009 = vadd.f32 0.0, %v1008
  %v1010 = vpop.f32.mrf.mxu0
  %v1011 = vadd.f32 0.0, %v1010
  %1012 = vmatprep.mubr.f32.mxu0 0.0
  %1013 = vmatmul.mubr.f32.gmra.mxu0 %v123
  %v1014 = vpop.f32.mrf.mxu0
  %v1015 = vadd.f32 0.0, %v1014
  %v1016 = vpop.f32.mrf.mxu0
  %v1017 = vadd.f32 0.0, %v1016
  %1018 = vmatprep.mubr.f32.mxu0 0.0
  %1019 = vmatmul.mubr.f32.gmra.mxu0 %v126
  %v1020 = vpop.f32.mrf.mxu0
  %v1021 = vadd.f32 0.0, %v1020
  %v1022 = vpop.f32.mrf.mxu0
  %v1023 = vadd.f32 0.0, %v1022
  %1024 = vmatprep.mubr.f32.mxu0 0.0
  %1025 = vmatmul.mubr.f32.gmra.mxu0 %v129
  %v1026 = vpop.f32.mrf.mxu0
  %v1027 = vadd.f32 0.0, %v1026
  %v1028 = vpop.f32.mrf.mxu0
  %v1029 = vadd.f32 0.0, %v1028
  %1030 = vmatprep.mubr.f32.mxu0 0.0
  %1031 = vmatmul.mubr.f32.gmra.mxu0 %v132
  %v1032 = vpop.f32.mrf.mxu0
  %v1033 = vadd.f32 0.0, %v1032
  %v1034 = vpop.f32.mrf.mxu0
  %v1035 = vadd.f32 0.0, %v1034
  %1036 = vmatprep.mubr.f32.mxu0 0.0
  %1037 = vmatmul.mubr.f32.gmra.mxu0 %v135
  %v1038 = vpop.f32.mrf.mxu0
  %v1039 = vadd.f32 0.0, %v1038
  %v1040 = vpop.f32.mrf.mxu0
  %v1041 = vadd.f32 0.0, %v1040
  %1042 = vmatprep.mubr.f32.mxu0 0.0
  %1043 = vmatmul.mubr.f32.gmra.mxu0 %v138
  %v1044 = vpop.f32.mrf.mxu0
  %v1045 = vadd.f32 0.0, %v1044
  %v1046 = vpop.f32.mrf.mxu0
  %v1047 = vadd.f32 0.0, %v1046
  %1048 = vmatprep.mubr.f32.mxu0 0.0
  %1049 = vmatmul.mubr.f32.gmra.mxu0 %v141
  %v1050 = vpop.f32.mrf.mxu0
  %v1051 = vadd.f32 0.0, %v1050
  %v1052 = vpop.f32.mrf.mxu0
  %v1053 = vadd.f32 0.0, %v1052
  %1054 = vmatprep.mubr.f32.mxu0 0.0
  %1055 = vmatmul.mubr.f32.gmra.mxu0 %v144
  %v1056 = vpop.f32.mrf.mxu0
  %v1057 = vadd.f32 0.0, %v1056
  %v1058 = vpop.f32.mrf.mxu0
  %v1059 = vadd.f32 0.0, %v1058
  %1060 = vmatprep.mubr.f32.mxu0 0.0
  %1061 = vmatmul.mubr.f32.gmra.mxu0 %v147
  %v1062 = vpop.f32.mrf.mxu0
  %v1063 = vadd.f32 0.0, %v1062
  %v1064 = vpop.f32.mrf.mxu0
  %v1065 = vadd.f32 0.0, %v1064
  %1066 = vmatprep.mubr.f32.mxu0 0.0
  %1067 = vmatmul.mubr.f32.gmra.mxu0 %v150
  %v1068 = vpop.f32.mrf.mxu0
  %v1069 = vadd.f32 0.0, %v1068
  %v1070 = vpop.f32.mrf.mxu0
  %v1071 = vadd.f32 0.0, %v1070
  %1072 = vmatprep.mubr.f32.mxu0 0.0
  %1073 = vmatmul.mubr.f32.gmra.mxu0 %v153
  %v1074 = vpop.f32.mrf.mxu0
  %v1075 = vadd.f32 0.0, %v1074
  %v1076 = vpop.f32.mrf.mxu0
  %v1077 = vadd.f32 0.0, %v1076
  %1078 = vmatprep.mubr.f32.mxu0 0.0
  %1079 = vmatmul.mubr.f32.gmra.mxu0 %v599
  %v1080 = vpop.f32.mrf.mxu0
  %v1081 = vadd.f32 0.0, %v1080
  %v1082 = vpop.f32.mrf.mxu0
  %v1083 = vadd.f32 0.0, %v1082
  %1084 = vmatprep.mubr.f32.mxu0 0.0
  %1085 = vmatmul.mubr.f32.gmra.mxu0 %v874
  %v1086 = vpop.f32.mrf.mxu0
  %v1087 = vadd.f32 0.0, %v1086
  %v1088 = vpop.f32.mrf.mxu0
  %v1089 = vadd.f32 0.0, %v1088
  %1090 = vdwg.mxu0
  %v1091 = vadd.f32 %v816, %v949
  %v1092 = vadd.f32 %v817, %v951
  %v1093 = vadd.f32 %v818, %v955
  %v1094 = vadd.f32 %v819, %v957
  %v1095 = vadd.f32 %v820, %v961
  %v1096 = vadd.f32 %v821, %v963
  %v1097 = vadd.f32 %v822, %v967
  %v1098 = vadd.f32 %v823, %v969
  %v1099 = vadd.f32 %v824, %v973
  %v1100 = vadd.f32 %v825, %v975
  %v1101 = vadd.f32 %v826, %v979
  %v1102 = vadd.f32 %v827, %v981
  %v1103 = vadd.f32 %v828, %v985
  %v1104 = vadd.f32 %v829, %v987
  %v1105 = vadd.f32 %v830, %v991
  %v1106 = vadd.f32 %v831, %v993
  %v1107 = vadd.f32 %v832, %v997
  %v1108 = vadd.f32 %v833, %v999
  %v1109 = vadd.f32 %v834, %v1003
  %v1110 = vadd.f32 %v835, %v1005
  %v1111 = vadd.f32 %v836, %v1009
  %v1112 = vadd.f32 %v837, %v1011
  %v1113 = vadd.f32 %v838, %v1015
  %v1114 = vadd.f32 %v839, %v1017
  %v1115 = vadd.f32 %v840, %v1021
  %v1116 = vadd.f32 %v841, %v1023
  %v1117 = vadd.f32 %v842, %v1027
  %v1118 = vadd.f32 %v843, %v1029
  %v1119 = vadd.f32 %v844, %v1033
  %v1120 = vadd.f32 %v845, %v1035
  %v1121 = vadd.f32 %v846, %v1039
  %v1122 = vadd.f32 %v847, %v1041
  %v1123 = vadd.f32 %v848, %v1045
  %v1124 = vadd.f32 %v849, %v1047
  %v1125 = vadd.f32 %v850, %v1051
  %v1126 = vadd.f32 %v851, %v1053
  %v1127 = vadd.f32 %v852, %v1057
  %v1128 = vadd.f32 %v853, %v1059
  %v1129 = vadd.f32 %v854, %v1063
  %v1130 = vadd.f32 %v855, %v1065
  %v1131 = vadd.f32 %v856, %v1069
  %v1132 = vadd.f32 %v857, %v1071
  %v1133 = vadd.f32 %v858, %v1075
  %v1134 = vadd.f32 %v859, %v1077
  %v1135 = vadd.f32 %v860, %v1081
  %v1136 = vadd.f32 %v861, %v1083
  %v1137 = vadd.f32 %v862, %v1087
  %v1138 = vadd.f32 %v863, %v1089
  %s1139 = scalar_lea.vmem %s1, 256
  %v1140 = vld [vmem:[%s1139] sm:$0xff]
  %v1141 = vld [vmem:[%s1139 + $0x8] sm:$0xff]
  %v1142 = vld [vmem:[%s1139 + $0x10] sm:$0xff]
  %v1143 = vld [vmem:[%s1139 + $0x18] sm:$0xff]
  %v1144 = vld [vmem:[%s1139 + $0x20] sm:$0xff]
  %v1145 = vld [vmem:[%s1139 + $0x28] sm:$0xff]
  %v1146 = vld [vmem:[%s1139 + $0x30] sm:$0xf]
  %v1147 = vld [vmem:[%s1139 + $0x38] sm:$0xf]
  %v1149 = vsel %vm82, %v64, 0
  %v1152 = vsel %vm155, %v1146, 0
  %v1155 = vsel %vm155, %v1147, 0
  %1157 = vmatprep.subr.mxu0 0.0
  %1158 = vmatpush1.msra.mxu0 0.0
  %1159 = vmatprep.subr.mxu0 0.0
  %1160 = vmatpush1.msra.mxu0 0.0
  %1161 = vmatprep.subr.mxu0 0.0
  %1162 = vmatpush1.msra.mxu0 0.0
  %1163 = vmatprep.subr.mxu0 0.0
  %1164 = vmatpush1.msra.mxu0 0.0
  %1165 = vmatprep.subr.mxu0 0.0
  %1166 = vmatpush1.msra.mxu0 0.0
  %1167 = vmatprep.subr.mxu0 0.0
  %1168 = vmatpush1.msra.mxu0 0.0
  %1169 = vmatprep.subr.mxu0 0.0
  %1170 = vmatpush1.msra.mxu0 0.0
  %1171 = vmatprep.subr.mxu0 0.0
  %1172 = vmatpush1.msra.mxu0 0.0
  %1173 = vmatprep.subr.mxu0 0.0
  %1174 = vmatpush1.msra.mxu0 0.0
  %1175 = vmatprep.subr.mxu0 0.0
  %1176 = vmatpush1.msra.mxu0 0.0
  %1177 = vmatprep.subr.mxu0 0.0
  %1178 = vmatpush1.msra.mxu0 0.0
  %1179 = vmatprep.subr.mxu0 0.0
  %1180 = vmatpush1.msra.mxu0 0.0
  %1181 = vmatprep.subr.mxu0 %v1155
  %1182 = vmatpush1.msra.mxu0 %v1152
  %1183 = vmatprep.subr.mxu0 %v1145
  %1184 = vmatpush1.msra.mxu0 %v1144
  %1185 = vmatprep.subr.mxu0 %v1143
  %1186 = vmatpush1.msra.mxu0 %v1142
  %1187 = vmatprep.subr.mxu0 %v1141
  %1188 = vmatpush1.msra.mxu0 %v1140
  %1189 = vmatprep.subr.mxu0 0.0
  %1190 = vmatpush2.msra.mxu0 0.0
  %1191 = vmatprep.subr.mxu0 0.0
  %1192 = vmatpush2.msra.mxu0 0.0
  %1193 = vmatprep.subr.mxu0 0.0
  %1194 = vmatpush2.msra.mxu0 0.0
  %1195 = vmatprep.subr.mxu0 0.0
  %1196 = vmatpush2.msra.mxu0 0.0
  %1197 = vmatprep.subr.mxu0 0.0
  %1198 = vmatpush2.msra.mxu0 0.0
  %1199 = vmatprep.subr.mxu0 0.0
  %1200 = vmatpush2.msra.mxu0 0.0
  %1201 = vmatprep.subr.mxu0 0.0
  %1202 = vmatpush2.msra.mxu0 0.0
  %1203 = vmatprep.subr.mxu0 0.0
  %1204 = vmatpush2.msra.mxu0 0.0
  %1205 = vmatprep.subr.mxu0 0.0
  %1206 = vmatpush2.msra.mxu0 0.0
  %1207 = vmatprep.subr.mxu0 0.0
  %1208 = vmatpush2.msra.mxu0 0.0
  %1209 = vmatprep.subr.mxu0 0.0
  %1210 = vmatpush2.msra.mxu0 0.0
  %1211 = vmatprep.subr.mxu0 0.0
  %1212 = vmatpush2.msra.mxu0 0.0
  %1213 = vmatprep.subr.mxu0 0.0
  %1214 = vmatpush2.msra.mxu0 0.0
  %1215 = vmatprep.subr.mxu0 0.0
  %1216 = vmatpush2.msra.mxu0 0.0
  %1217 = vmatprep.subr.mxu0 0.0
  %1218 = vmatpush2.msra.mxu0 0.0
  %1219 = vmatprep.subr.mxu0 0.0
  %1220 = vmatpush2.msra.mxu0 0.0
  %1221 = vmatprep.mubr.f32.mxu0 0.0
  %1222 = vmatmul.mubr.f32.gmra.mxu0 %v93
  %v1223 = vpop.f32.mrf.mxu0
  %v1224 = vadd.f32 0.0, %v1223
  %v1225 = vpop.f32.mrf.mxu0
  %v1226 = vadd.f32 0.0, %v1225
  %1227 = vmatprep.mubr.f32.mxu0 0.0
  %1228 = vmatmul.mubr.f32.gmra.mxu0 %v96
  %v1229 = vpop.f32.mrf.mxu0
  %v1230 = vadd.f32 0.0, %v1229
  %v1231 = vpop.f32.mrf.mxu0
  %v1232 = vadd.f32 0.0, %v1231
  %1233 = vmatprep.mubr.f32.mxu0 0.0
  %1234 = vmatmul.mubr.f32.gmra.mxu0 %v99
  %v1235 = vpop.f32.mrf.mxu0
  %v1236 = vadd.f32 0.0, %v1235
  %v1237 = vpop.f32.mrf.mxu0
  %v1238 = vadd.f32 0.0, %v1237
  %1239 = vmatprep.mubr.f32.mxu0 0.0
  %1240 = vmatmul.mubr.f32.gmra.mxu0 %v102
  %v1241 = vpop.f32.mrf.mxu0
  %v1242 = vadd.f32 0.0, %v1241
  %v1243 = vpop.f32.mrf.mxu0
  %v1244 = vadd.f32 0.0, %v1243
  %1245 = vmatprep.mubr.f32.mxu0 0.0
  %1246 = vmatmul.mubr.f32.gmra.mxu0 %v105
  %v1247 = vpop.f32.mrf.mxu0
  %v1248 = vadd.f32 0.0, %v1247
  %v1249 = vpop.f32.mrf.mxu0
  %v1250 = vadd.f32 0.0, %v1249
  %1251 = vmatprep.mubr.f32.mxu0 0.0
  %1252 = vmatmul.mubr.f32.gmra.mxu0 %v108
  %v1253 = vpop.f32.mrf.mxu0
  %v1254 = vadd.f32 0.0, %v1253
  %v1255 = vpop.f32.mrf.mxu0
  %v1256 = vadd.f32 0.0, %v1255
  %1257 = vmatprep.mubr.f32.mxu0 0.0
  %1258 = vmatmul.mubr.f32.gmra.mxu0 %v111
  %v1259 = vpop.f32.mrf.mxu0
  %v1260 = vadd.f32 0.0, %v1259
  %v1261 = vpop.f32.mrf.mxu0
  %v1262 = vadd.f32 0.0, %v1261
  %1263 = vmatprep.mubr.f32.mxu0 0.0
  %1264 = vmatmul.mubr.f32.gmra.mxu0 %v114
  %v1265 = vpop.f32.mrf.mxu0
  %v1266 = vadd.f32 0.0, %v1265
  %v1267 = vpop.f32.mrf.mxu0
  %v1268 = vadd.f32 0.0, %v1267
  %1269 = vmatprep.mubr.f32.mxu0 0.0
  %1270 = vmatmul.mubr.f32.gmra.mxu0 %v117
  %v1271 = vpop.f32.mrf.mxu0
  %v1272 = vadd.f32 0.0, %v1271
  %v1273 = vpop.f32.mrf.mxu0
  %v1274 = vadd.f32 0.0, %v1273
  %1275 = vmatprep.mubr.f32.mxu0 0.0
  %1276 = vmatmul.mubr.f32.gmra.mxu0 %v120
  %v1277 = vpop.f32.mrf.mxu0
  %v1278 = vadd.f32 0.0, %v1277
  %v1279 = vpop.f32.mrf.mxu0
  %v1280 = vadd.f32 0.0, %v1279
  %1281 = vmatprep.mubr.f32.mxu0 0.0
  %1282 = vmatmul.mubr.f32.gmra.mxu0 %v123
  %v1283 = vpop.f32.mrf.mxu0
  %v1284 = vadd.f32 0.0, %v1283
  %v1285 = vpop.f32.mrf.mxu0
  %v1286 = vadd.f32 0.0, %v1285
  %1287 = vmatprep.mubr.f32.mxu0 0.0
  %1288 = vmatmul.mubr.f32.gmra.mxu0 %v126
  %v1289 = vpop.f32.mrf.mxu0
  %v1290 = vadd.f32 0.0, %v1289
  %v1291 = vpop.f32.mrf.mxu0
  %v1292 = vadd.f32 0.0, %v1291
  %1293 = vmatprep.mubr.f32.mxu0 0.0
  %1294 = vmatmul.mubr.f32.gmra.mxu0 %v129
  %v1295 = vpop.f32.mrf.mxu0
  %v1296 = vadd.f32 0.0, %v1295
  %v1297 = vpop.f32.mrf.mxu0
  %v1298 = vadd.f32 0.0, %v1297
  %1299 = vmatprep.mubr.f32.mxu0 0.0
  %1300 = vmatmul.mubr.f32.gmra.mxu0 %v132
  %v1301 = vpop.f32.mrf.mxu0
  %v1302 = vadd.f32 0.0, %v1301
  %v1303 = vpop.f32.mrf.mxu0
  %v1304 = vadd.f32 0.0, %v1303
  %1305 = vmatprep.mubr.f32.mxu0 0.0
  %1306 = vmatmul.mubr.f32.gmra.mxu0 %v135
  %v1307 = vpop.f32.mrf.mxu0
  %v1308 = vadd.f32 0.0, %v1307
  %v1309 = vpop.f32.mrf.mxu0
  %v1310 = vadd.f32 0.0, %v1309
  %1311 = vmatprep.mubr.f32.mxu0 0.0
  %1312 = vmatmul.mubr.f32.gmra.mxu0 %v138
  %v1313 = vpop.f32.mrf.mxu0
  %v1314 = vadd.f32 0.0, %v1313
  %v1315 = vpop.f32.mrf.mxu0
  %v1316 = vadd.f32 0.0, %v1315
  %1317 = vmatprep.mubr.f32.mxu0 0.0
  %1318 = vmatmul.mubr.f32.gmra.mxu0 %v141
  %v1319 = vpop.f32.mrf.mxu0
  %v1320 = vadd.f32 0.0, %v1319
  %v1321 = vpop.f32.mrf.mxu0
  %v1322 = vadd.f32 0.0, %v1321
  %1323 = vmatprep.mubr.f32.mxu0 0.0
  %1324 = vmatmul.mubr.f32.gmra.mxu0 %v144
  %v1325 = vpop.f32.mrf.mxu0
  %v1326 = vadd.f32 0.0, %v1325
  %v1327 = vpop.f32.mrf.mxu0
  %v1328 = vadd.f32 0.0, %v1327
  %1329 = vmatprep.mubr.f32.mxu0 0.0
  %1330 = vmatmul.mubr.f32.gmra.mxu0 %v147
  %v1331 = vpop.f32.mrf.mxu0
  %v1332 = vadd.f32 0.0, %v1331
  %v1333 = vpop.f32.mrf.mxu0
  %v1334 = vadd.f32 0.0, %v1333
  %1335 = vmatprep.mubr.f32.mxu0 0.0
  %1336 = vmatmul.mubr.f32.gmra.mxu0 %v150
  %v1337 = vpop.f32.mrf.mxu0
  %v1338 = vadd.f32 0.0, %v1337
  %v1339 = vpop.f32.mrf.mxu0
  %v1340 = vadd.f32 0.0, %v1339
  %1341 = vmatprep.mubr.f32.mxu0 0.0
  %1342 = vmatmul.mubr.f32.gmra.mxu0 %v153
  %v1343 = vpop.f32.mrf.mxu0
  %v1344 = vadd.f32 0.0, %v1343
  %v1345 = vpop.f32.mrf.mxu0
  %v1346 = vadd.f32 0.0, %v1345
  %1347 = vmatprep.mubr.f32.mxu0 0.0
  %1348 = vmatmul.mubr.f32.gmra.mxu0 %v599
  %v1349 = vpop.f32.mrf.mxu0
  %v1350 = vadd.f32 0.0, %v1349
  %v1351 = vpop.f32.mrf.mxu0
  %v1352 = vadd.f32 0.0, %v1351
  %1353 = vmatprep.mubr.f32.mxu0 0.0
  %1354 = vmatmul.mubr.f32.gmra.mxu0 %v874
  %v1355 = vpop.f32.mrf.mxu0
  %v1356 = vadd.f32 0.0, %v1355
  %v1357 = vpop.f32.mrf.mxu0
  %v1358 = vadd.f32 0.0, %v1357
  %1359 = vmatprep.mubr.f32.mxu0 0.0
  %1360 = vmatmul.mubr.f32.gmra.mxu0 %v1149
  %v1361 = vpop.f32.mrf.mxu0
  %v1362 = vadd.f32 0.0, %v1361
  %v1363 = vpop.f32.mrf.mxu0
  %v1364 = vadd.f32 0.0, %v1363
  %1365 = vdwg.mxu0
  %v1366 = vadd.f32 %v1091, %v1224
  %v1367 = vadd.f32 %v1092, %v1226
  %v1368 = vadd.f32 %v1093, %v1230
  %v1369 = vadd.f32 %v1094, %v1232
  %v1370 = vadd.f32 %v1095, %v1236
  %v1371 = vadd.f32 %v1096, %v1238
  %v1372 = vadd.f32 %v1097, %v1242
  %v1373 = vadd.f32 %v1098, %v1244
  %v1374 = vadd.f32 %v1099, %v1248
  %v1375 = vadd.f32 %v1100, %v1250
  %v1376 = vadd.f32 %v1101, %v1254
  %v1377 = vadd.f32 %v1102, %v1256
  %v1378 = vadd.f32 %v1103, %v1260
  %v1379 = vadd.f32 %v1104, %v1262
  %v1380 = vadd.f32 %v1105, %v1266
  %v1381 = vadd.f32 %v1106, %v1268
  %v1382 = vadd.f32 %v1107, %v1272
  %v1383 = vadd.f32 %v1108, %v1274
  %v1384 = vadd.f32 %v1109, %v1278
  %v1385 = vadd.f32 %v1110, %v1280
  %v1386 = vadd.f32 %v1111, %v1284
  %v1387 = vadd.f32 %v1112, %v1286
  %v1388 = vadd.f32 %v1113, %v1290
  %v1389 = vadd.f32 %v1114, %v1292
  %v1390 = vadd.f32 %v1115, %v1296
  %v1391 = vadd.f32 %v1116, %v1298
  %v1392 = vadd.f32 %v1117, %v1302
  %v1393 = vadd.f32 %v1118, %v1304
  %v1394 = vadd.f32 %v1119, %v1308
  %v1395 = vadd.f32 %v1120, %v1310
  %v1396 = vadd.f32 %v1121, %v1314
  %v1397 = vadd.f32 %v1122, %v1316
  %v1398 = vadd.f32 %v1123, %v1320
  %v1399 = vadd.f32 %v1124, %v1322
  %v1400 = vadd.f32 %v1125, %v1326
  %v1401 = vadd.f32 %v1126, %v1328
  %v1402 = vadd.f32 %v1127, %v1332
  %v1403 = vadd.f32 %v1128, %v1334
  %v1404 = vadd.f32 %v1129, %v1338
  %v1405 = vadd.f32 %v1130, %v1340
  %v1406 = vadd.f32 %v1131, %v1344
  %v1407 = vadd.f32 %v1132, %v1346
  %v1408 = vadd.f32 %v1133, %v1350
  %v1409 = vadd.f32 %v1134, %v1352
  %v1410 = vadd.f32 %v1135, %v1356
  %v1411 = vadd.f32 %v1136, %v1358
  %v1412 = vadd.f32 %v1137, %v1362
  %v1413 = vadd.f32 %v1138, %v1364
  %v1414 = vld [vmem:[%s2] sm:$0x3]
  %v1416 = vlaneseq
  %v1417 = vshrl.u32 %v1416, 7
  %v1418 = vsub.s32 0, %v1417
  %v1419 = vrot.slane %v1414, %v1418
  %v1420 = vlaneseq
  %v1421 = vshrl.u32 %v1420, 7
  %v1422 = vsub.s32 1, %v1421
  %v1423 = vrot.slane %v1414, %v1422
  %v1426 = vadd.f32 %v1366, %v1419
  %v1427 = vadd.f32 %v1367, %v1423
  %v1428 = vadd.f32 %v1368, %v1419
  %v1429 = vadd.f32 %v1369, %v1423
  %v1430 = vadd.f32 %v1370, %v1419
  %v1431 = vadd.f32 %v1371, %v1423
  %v1432 = vadd.f32 %v1372, %v1419
  %v1433 = vadd.f32 %v1373, %v1423
  %v1434 = vadd.f32 %v1374, %v1419
  %v1435 = vadd.f32 %v1375, %v1423
  %v1436 = vadd.f32 %v1376, %v1419
  %v1437 = vadd.f32 %v1377, %v1423
  %v1438 = vadd.f32 %v1378, %v1419
  %v1439 = vadd.f32 %v1379, %v1423
  %v1440 = vadd.f32 %v1380, %v1419
  %v1441 = vadd.f32 %v1381, %v1423
  %v1442 = vadd.f32 %v1382, %v1419
  %v1443 = vadd.f32 %v1383, %v1423
  %v1444 = vadd.f32 %v1384, %v1419
  %v1445 = vadd.f32 %v1385, %v1423
  %v1446 = vadd.f32 %v1386, %v1419
  %v1447 = vadd.f32 %v1387, %v1423
  %v1448 = vadd.f32 %v1388, %v1419
  %v1449 = vadd.f32 %v1389, %v1423
  %v1450 = vadd.f32 %v1390, %v1419
  %v1451 = vadd.f32 %v1391, %v1423
  %v1452 = vadd.f32 %v1392, %v1419
  %v1453 = vadd.f32 %v1393, %v1423
  %v1454 = vadd.f32 %v1394, %v1419
  %v1455 = vadd.f32 %v1395, %v1423
  %v1456 = vadd.f32 %v1396, %v1419
  %v1457 = vadd.f32 %v1397, %v1423
  %v1458 = vadd.f32 %v1398, %v1419
  %v1459 = vadd.f32 %v1399, %v1423
  %v1460 = vadd.f32 %v1400, %v1419
  %v1461 = vadd.f32 %v1401, %v1423
  %v1462 = vadd.f32 %v1402, %v1419
  %v1463 = vadd.f32 %v1403, %v1423
  %v1464 = vadd.f32 %v1404, %v1419
  %v1465 = vadd.f32 %v1405, %v1423
  %v1466 = vadd.f32 %v1406, %v1419
  %v1467 = vadd.f32 %v1407, %v1423
  %v1468 = vadd.f32 %v1408, %v1419
  %v1469 = vadd.f32 %v1409, %v1423
  %v1470 = vadd.f32 %v1410, %v1419
  %v1471 = vadd.f32 %v1411, %v1423
  %v1472 = vadd.f32 %v1412, %v1419
  %v1473 = vadd.f32 %v1413, %v1423
  %v1474 = vmax.f32 %v1426, %v1428
  %vm1475 = vcmask 916480
  %v1476 = vsel %vm1475, %v1427, -inf
  %v1477 = vsel %vm1475, %v1429, -inf
  %v1478 = vmax.f32 %v1476, %v1477
  %v1479 = vmax.f32 %v1430, %v1432
  %v1480 = vsel %vm1475, %v1431, -inf
  %v1481 = vsel %vm1475, %v1433, -inf
  %v1482 = vmax.f32 %v1480, %v1481
  %v1483 = vmax.f32 %v1434, %v1436
  %v1484 = vsel %vm1475, %v1435, -inf
  %v1485 = vsel %vm1475, %v1437, -inf
  %v1486 = vmax.f32 %v1484, %v1485
  %v1487 = vmax.f32 %v1438, %v1440
  %v1488 = vsel %vm1475, %v1439, -inf
  %v1489 = vsel %vm1475, %v1441, -inf
  %v1490 = vmax.f32 %v1488, %v1489
  %v1491 = vmax.f32 %v1442, %v1444
  %v1492 = vsel %vm1475, %v1443, -inf
  %v1493 = vsel %vm1475, %v1445, -inf
  %v1494 = vmax.f32 %v1492, %v1493
  %v1495 = vmax.f32 %v1446, %v1448
  %v1496 = vsel %vm1475, %v1447, -inf
  %v1497 = vsel %vm1475, %v1449, -inf
  %v1498 = vmax.f32 %v1496, %v1497
  %v1499 = vmax.f32 %v1450, %v1452
  %v1500 = vsel %vm1475, %v1451, -inf
  %v1501 = vsel %vm1475, %v1453, -inf
  %v1502 = vmax.f32 %v1500, %v1501
  %v1503 = vmax.f32 %v1454, %v1456
  %v1504 = vsel %vm1475, %v1455, -inf
  %v1505 = vsel %vm1475, %v1457, -inf
  %v1506 = vmax.f32 %v1504, %v1505
  %v1507 = vmax.f32 %v1458, %v1460
  %v1508 = vsel %vm1475, %v1459, -inf
  %v1509 = vsel %vm1475, %v1461, -inf
  %v1510 = vmax.f32 %v1508, %v1509
  %v1511 = vmax.f32 %v1462, %v1464
  %v1512 = vsel %vm1475, %v1463, -inf
  %v1513 = vsel %vm1475, %v1465, -inf
  %v1514 = vmax.f32 %v1512, %v1513
  %v1515 = vmax.f32 %v1466, %v1468
  %v1516 = vsel %vm1475, %v1467, -inf
  %v1517 = vsel %vm1475, %v1469, -inf
  %v1518 = vmax.f32 %v1516, %v1517
  %v1519 = vmax.f32 %v1470, %v1472
  %v1520 = vsel %vm1475, %v1471, -inf
  %v1521 = vsel %vm1475, %v1473, -inf
  %v1522 = vmax.f32 %v1520, %v1521
  %1535 = vrot.lane.b32.xlu0 %v1474, 118
  %v1536 = vpop.permute.xlu0 %1535
  %1537 = vrot.lane.b32.xlu0 %v1479, 118
  %v1538 = vpop.permute.xlu0 %1537
  %1539 = vrot.lane.b32.xlu0 %v1483, 118
  %v1540 = vpop.permute.xlu0 %1539
  %1541 = vrot.lane.b32.xlu0 %v1487, 118
  %v1542 = vpop.permute.xlu0 %1541
  %1543 = vrot.lane.b32.xlu0 %v1491, 118
  %v1544 = vpop.permute.xlu0 %1543
  %1545 = vrot.lane.b32.xlu0 %v1495, 118
  %v1546 = vpop.permute.xlu0 %1545
  %1547 = vrot.lane.b32.xlu0 %v1499, 118
  %v1548 = vpop.permute.xlu0 %1547
  %1549 = vrot.lane.b32.xlu0 %v1503, 118
  %v1550 = vpop.permute.xlu0 %1549
  %1551 = vrot.lane.b32.xlu0 %v1507, 118
  %v1552 = vpop.permute.xlu0 %1551
  %1553 = vrot.lane.b32.xlu0 %v1511, 118
  %v1554 = vpop.permute.xlu0 %1553
  %1555 = vrot.lane.b32.xlu0 %v1515, 118
  %v1556 = vpop.permute.xlu0 %1555
  %1557 = vrot.lane.b32.xlu0 %v1519, 118
  %v1558 = vpop.permute.xlu0 %1557
  %v1571 = vmax.f32 %v1474, %v1536
  %v1572 = vmax.f32 %v1479, %v1538
  %v1573 = vmax.f32 %v1483, %v1540
  %v1574 = vmax.f32 %v1487, %v1542
  %v1575 = vmax.f32 %v1491, %v1544
  %v1576 = vmax.f32 %v1495, %v1546
  %v1577 = vmax.f32 %v1499, %v1548
  %v1578 = vmax.f32 %v1503, %v1550
  %v1579 = vmax.f32 %v1507, %v1552
  %v1580 = vmax.f32 %v1511, %v1554
  %v1581 = vmax.f32 %v1515, %v1556
  %v1582 = vmax.f32 %v1519, %v1558
  %1595 = vrot.lane.b32.xlu0 %v1478, 118
  %v1596 = vpop.permute.xlu0 %1595
  %1597 = vrot.lane.b32.xlu0 %v1482, 118
  %v1598 = vpop.permute.xlu0 %1597
  %1599 = vrot.lane.b32.xlu0 %v1486, 118
  %v1600 = vpop.permute.xlu0 %1599
  %1601 = vrot.lane.b32.xlu0 %v1490, 118
  %v1602 = vpop.permute.xlu0 %1601
  %1603 = vrot.lane.b32.xlu0 %v1494, 118
  %v1604 = vpop.permute.xlu0 %1603
  %1605 = vrot.lane.b32.xlu0 %v1498, 118
  %v1606 = vpop.permute.xlu0 %1605
  %1607 = vrot.lane.b32.xlu0 %v1502, 118
  %v1608 = vpop.permute.xlu0 %1607
  %1609 = vrot.lane.b32.xlu0 %v1506, 118
  %v1610 = vpop.permute.xlu0 %1609
  %1611 = vrot.lane.b32.xlu0 %v1510, 118
  %v1612 = vpop.permute.xlu0 %1611
  %1613 = vrot.lane.b32.xlu0 %v1514, 118
  %v1614 = vpop.permute.xlu0 %1613
  %1615 = vrot.lane.b32.xlu0 %v1518, 118
  %v1616 = vpop.permute.xlu0 %1615
  %1617 = vrot.lane.b32.xlu0 %v1522, 118
  %v1618 = vpop.permute.xlu0 %1617
  %v1631 = vmax.f32 %v1474, %v1596
  %v1632 = vmax.f32 %v1478, %v1596
  %v1633 = vmax.f32 %v1479, %v1598
  %v1634 = vmax.f32 %v1482, %v1598
  %v1635 = vmax.f32 %v1483, %v1600
  %v1636 = vmax.f32 %v1486, %v1600
  %v1637 = vmax.f32 %v1487, %v1602
  %v1638 = vmax.f32 %v1490, %v1602
  %v1639 = vmax.f32 %v1491, %v1604
  %v1640 = vmax.f32 %v1494, %v1604
  %v1641 = vmax.f32 %v1495, %v1606
  %v1642 = vmax.f32 %v1498, %v1606
  %v1643 = vmax.f32 %v1499, %v1608
  %v1644 = vmax.f32 %v1502, %v1608
  %v1645 = vmax.f32 %v1503, %v1610
  %v1646 = vmax.f32 %v1506, %v1610
  %v1647 = vmax.f32 %v1507, %v1612
  %v1648 = vmax.f32 %v1510, %v1612
  %v1649 = vmax.f32 %v1511, %v1614
  %v1650 = vmax.f32 %v1514, %v1614
  %v1651 = vmax.f32 %v1515, %v1616
  %v1652 = vmax.f32 %v1518, %v1616
  %v1653 = vmax.f32 %v1519, %v1618
  %v1654 = vmax.f32 %v1522, %v1618
  %1667 = vrot.lane.b32.xlu0 %v1571, 118
  %v1668 = vpop.permute.xlu0 %1667
  %1669 = vrot.lane.b32.xlu0 %v1572, 118
  %v1670 = vpop.permute.xlu0 %1669
  %1671 = vrot.lane.b32.xlu0 %v1573, 118
  %v1672 = vpop.permute.xlu0 %1671
  %1673 = vrot.lane.b32.xlu0 %v1574, 118
  %v1674 = vpop.permute.xlu0 %1673
  %1675 = vrot.lane.b32.xlu0 %v1575, 118
  %v1676 = vpop.permute.xlu0 %1675
  %1677 = vrot.lane.b32.xlu0 %v1576, 118
  %v1678 = vpop.permute.xlu0 %1677
  %1679 = vrot.lane.b32.xlu0 %v1577, 118
  %v1680 = vpop.permute.xlu0 %1679
  %1681 = vrot.lane.b32.xlu0 %v1578, 118
  %v1682 = vpop.permute.xlu0 %1681
  %1683 = vrot.lane.b32.xlu0 %v1579, 118
  %v1684 = vpop.permute.xlu0 %1683
  %1685 = vrot.lane.b32.xlu0 %v1580, 118
  %v1686 = vpop.permute.xlu0 %1685
  %1687 = vrot.lane.b32.xlu0 %v1581, 118
  %v1688 = vpop.permute.xlu0 %1687
  %1689 = vrot.lane.b32.xlu0 %v1582, 118
  %v1690 = vpop.permute.xlu0 %1689
  %1703 = vrot.lane.b32.xlu0 %v1571, 108
  %v1704 = vpop.permute.xlu0 %1703
  %1705 = vrot.lane.b32.xlu0 %v1572, 108
  %v1706 = vpop.permute.xlu0 %1705
  %1707 = vrot.lane.b32.xlu0 %v1573, 108
  %v1708 = vpop.permute.xlu0 %1707
  %1709 = vrot.lane.b32.xlu0 %v1574, 108
  %v1710 = vpop.permute.xlu0 %1709
  %1711 = vrot.lane.b32.xlu0 %v1575, 108
  %v1712 = vpop.permute.xlu0 %1711
  %1713 = vrot.lane.b32.xlu0 %v1576, 108
  %v1714 = vpop.permute.xlu0 %1713
  %1715 = vrot.lane.b32.xlu0 %v1577, 108
  %v1716 = vpop.permute.xlu0 %1715
  %1717 = vrot.lane.b32.xlu0 %v1578, 108
  %v1718 = vpop.permute.xlu0 %1717
  %1719 = vrot.lane.b32.xlu0 %v1579, 108
  %v1720 = vpop.permute.xlu0 %1719
  %1721 = vrot.lane.b32.xlu0 %v1580, 108
  %v1722 = vpop.permute.xlu0 %1721
  %1723 = vrot.lane.b32.xlu0 %v1581, 108
  %v1724 = vpop.permute.xlu0 %1723
  %1725 = vrot.lane.b32.xlu0 %v1582, 108
  %v1726 = vpop.permute.xlu0 %1725
  %1739 = vrot.lane.b32.xlu0 %v1571, 98
  %v1740 = vpop.permute.xlu0 %1739
  %1741 = vrot.lane.b32.xlu0 %v1572, 98
  %v1742 = vpop.permute.xlu0 %1741
  %1743 = vrot.lane.b32.xlu0 %v1573, 98
  %v1744 = vpop.permute.xlu0 %1743
  %1745 = vrot.lane.b32.xlu0 %v1574, 98
  %v1746 = vpop.permute.xlu0 %1745
  %1747 = vrot.lane.b32.xlu0 %v1575, 98
  %v1748 = vpop.permute.xlu0 %1747
  %1749 = vrot.lane.b32.xlu0 %v1576, 98
  %v1750 = vpop.permute.xlu0 %1749
  %1751 = vrot.lane.b32.xlu0 %v1577, 98
  %v1752 = vpop.permute.xlu0 %1751
  %1753 = vrot.lane.b32.xlu0 %v1578, 98
  %v1754 = vpop.permute.xlu0 %1753
  %1755 = vrot.lane.b32.xlu0 %v1579, 98
  %v1756 = vpop.permute.xlu0 %1755
  %1757 = vrot.lane.b32.xlu0 %v1580, 98
  %v1758 = vpop.permute.xlu0 %1757
  %1759 = vrot.lane.b32.xlu0 %v1581, 98
  %v1760 = vpop.permute.xlu0 %1759
  %1761 = vrot.lane.b32.xlu0 %v1582, 98
  %v1762 = vpop.permute.xlu0 %1761
  %1775 = vrot.lane.b32.xlu0 %v1571, 88
  %v1776 = vpop.permute.xlu0 %1775
  %1777 = vrot.lane.b32.xlu0 %v1572, 88
  %v1778 = vpop.permute.xlu0 %1777
  %1779 = vrot.lane.b32.xlu0 %v1573, 88
  %v1780 = vpop.permute.xlu0 %1779
  %1781 = vrot.lane.b32.xlu0 %v1574, 88
  %v1782 = vpop.permute.xlu0 %1781
  %1783 = vrot.lane.b32.xlu0 %v1575, 88
  %v1784 = vpop.permute.xlu0 %1783
  %1785 = vrot.lane.b32.xlu0 %v1576, 88
  %v1786 = vpop.permute.xlu0 %1785
  %1787 = vrot.lane.b32.xlu0 %v1577, 88
  %v1788 = vpop.permute.xlu0 %1787
  %1789 = vrot.lane.b32.xlu0 %v1578, 88
  %v1790 = vpop.permute.xlu0 %1789
  %1791 = vrot.lane.b32.xlu0 %v1579, 88
  %v1792 = vpop.permute.xlu0 %1791
  %1793 = vrot.lane.b32.xlu0 %v1580, 88
  %v1794 = vpop.permute.xlu0 %1793
  %1795 = vrot.lane.b32.xlu0 %v1581, 88
  %v1796 = vpop.permute.xlu0 %1795
  %1797 = vrot.lane.b32.xlu0 %v1582, 88
  %v1798 = vpop.permute.xlu0 %1797
  %1811 = vrot.lane.b32.xlu0 %v1571, 78
  %v1812 = vpop.permute.xlu0 %1811
  %1813 = vrot.lane.b32.xlu0 %v1572, 78
  %v1814 = vpop.permute.xlu0 %1813
  %1815 = vrot.lane.b32.xlu0 %v1573, 78
  %v1816 = vpop.permute.xlu0 %1815
  %1817 = vrot.lane.b32.xlu0 %v1574, 78
  %v1818 = vpop.permute.xlu0 %1817
  %1819 = vrot.lane.b32.xlu0 %v1575, 78
  %v1820 = vpop.permute.xlu0 %1819
  %1821 = vrot.lane.b32.xlu0 %v1576, 78
  %v1822 = vpop.permute.xlu0 %1821
  %1823 = vrot.lane.b32.xlu0 %v1577, 78
  %v1824 = vpop.permute.xlu0 %1823
  %1825 = vrot.lane.b32.xlu0 %v1578, 78
  %v1826 = vpop.permute.xlu0 %1825
  %1827 = vrot.lane.b32.xlu0 %v1579, 78
  %v1828 = vpop.permute.xlu0 %1827
  %1829 = vrot.lane.b32.xlu0 %v1580, 78
  %v1830 = vpop.permute.xlu0 %1829
  %1831 = vrot.lane.b32.xlu0 %v1581, 78
  %v1832 = vpop.permute.xlu0 %1831
  %1833 = vrot.lane.b32.xlu0 %v1582, 78
  %v1834 = vpop.permute.xlu0 %1833
  %1871 = vrot.lane.b32.xlu0 %v1631, 68
  %v1872 = vpop.permute.xlu0 %1871
  %1873 = vrot.lane.b32.xlu0 %v1632, 68
  %v1874 = vpop.permute.xlu0 %1873
  %1875 = vrot.lane.b32.xlu0 %v1633, 68
  %v1876 = vpop.permute.xlu0 %1875
  %1877 = vrot.lane.b32.xlu0 %v1634, 68
  %v1878 = vpop.permute.xlu0 %1877
  %1879 = vrot.lane.b32.xlu0 %v1635, 68
  %v1880 = vpop.permute.xlu0 %1879
  %1881 = vrot.lane.b32.xlu0 %v1636, 68
  %v1882 = vpop.permute.xlu0 %1881
  %1883 = vrot.lane.b32.xlu0 %v1637, 68
  %v1884 = vpop.permute.xlu0 %1883
  %1885 = vrot.lane.b32.xlu0 %v1638, 68
  %v1886 = vpop.permute.xlu0 %1885
  %1887 = vrot.lane.b32.xlu0 %v1639, 68
  %v1888 = vpop.permute.xlu0 %1887
  %1889 = vrot.lane.b32.xlu0 %v1640, 68
  %v1890 = vpop.permute.xlu0 %1889
  %1891 = vrot.lane.b32.xlu0 %v1641, 68
  %v1892 = vpop.permute.xlu0 %1891
  %1893 = vrot.lane.b32.xlu0 %v1642, 68
  %v1894 = vpop.permute.xlu0 %1893
  %1895 = vrot.lane.b32.xlu0 %v1643, 68
  %v1896 = vpop.permute.xlu0 %1895
  %1897 = vrot.lane.b32.xlu0 %v1644, 68
  %v1898 = vpop.permute.xlu0 %1897
  %1899 = vrot.lane.b32.xlu0 %v1645, 68
  %v1900 = vpop.permute.xlu0 %1899
  %1901 = vrot.lane.b32.xlu0 %v1646, 68
  %v1902 = vpop.permute.xlu0 %1901
  %1903 = vrot.lane.b32.xlu0 %v1647, 68
  %v1904 = vpop.permute.xlu0 %1903
  %1905 = vrot.lane.b32.xlu0 %v1648, 68
  %v1906 = vpop.permute.xlu0 %1905
  %1907 = vrot.lane.b32.xlu0 %v1649, 68
  %v1908 = vpop.permute.xlu0 %1907
  %1909 = vrot.lane.b32.xlu0 %v1650, 68
  %v1910 = vpop.permute.xlu0 %1909
  %1911 = vrot.lane.b32.xlu0 %v1651, 68
  %v1912 = vpop.permute.xlu0 %1911
  %1913 = vrot.lane.b32.xlu0 %v1652, 68
  %v1914 = vpop.permute.xlu0 %1913
  %1915 = vrot.lane.b32.xlu0 %v1653, 68
  %v1916 = vpop.permute.xlu0 %1915
  %1917 = vrot.lane.b32.xlu0 %v1654, 68
  %v1918 = vpop.permute.xlu0 %1917
  %vm1919 = vcmask 556032
  %v1920 = vsel %vm1919, %v1872, %v1874
  %v1921 = vsel %vm1919, %v1876, %v1878
  %v1922 = vsel %vm1919, %v1880, %v1882
  %v1923 = vsel %vm1919, %v1884, %v1886
  %v1924 = vsel %vm1919, %v1888, %v1890
  %v1925 = vsel %vm1919, %v1892, %v1894
  %v1926 = vsel %vm1919, %v1896, %v1898
  %v1927 = vsel %vm1919, %v1900, %v1902
  %v1928 = vsel %vm1919, %v1904, %v1906
  %v1929 = vsel %vm1919, %v1908, %v1910
  %v1930 = vsel %vm1919, %v1912, %v1914
  %v1931 = vsel %vm1919, %v1916, %v1918
  %1944 = vrot.lane.b32.xlu0 %v1632, 58
  %v1945 = vpop.permute.xlu0 %1944
  %1946 = vrot.lane.b32.xlu0 %v1634, 58
  %v1947 = vpop.permute.xlu0 %1946
  %1948 = vrot.lane.b32.xlu0 %v1636, 58
  %v1949 = vpop.permute.xlu0 %1948
  %1950 = vrot.lane.b32.xlu0 %v1638, 58
  %v1951 = vpop.permute.xlu0 %1950
  %1952 = vrot.lane.b32.xlu0 %v1640, 58
  %v1953 = vpop.permute.xlu0 %1952
  %1954 = vrot.lane.b32.xlu0 %v1642, 58
  %v1955 = vpop.permute.xlu0 %1954
  %1956 = vrot.lane.b32.xlu0 %v1644, 58
  %v1957 = vpop.permute.xlu0 %1956
  %1958 = vrot.lane.b32.xlu0 %v1646, 58
  %v1959 = vpop.permute.xlu0 %1958
  %1960 = vrot.lane.b32.xlu0 %v1648, 58
  %v1961 = vpop.permute.xlu0 %1960
  %1962 = vrot.lane.b32.xlu0 %v1650, 58
  %v1963 = vpop.permute.xlu0 %1962
  %1964 = vrot.lane.b32.xlu0 %v1652, 58
  %v1965 = vpop.permute.xlu0 %1964
  %1966 = vrot.lane.b32.xlu0 %v1654, 58
  %v1967 = vpop.permute.xlu0 %1966
  %1980 = vrot.lane.b32.xlu0 %v1632, 48
  %v1981 = vpop.permute.xlu0 %1980
  %1982 = vrot.lane.b32.xlu0 %v1634, 48
  %v1983 = vpop.permute.xlu0 %1982
  %1984 = vrot.lane.b32.xlu0 %v1636, 48
  %v1985 = vpop.permute.xlu0 %1984
  %1986 = vrot.lane.b32.xlu0 %v1638, 48
  %v1987 = vpop.permute.xlu0 %1986
  %1988 = vrot.lane.b32.xlu0 %v1640, 48
  %v1989 = vpop.permute.xlu0 %1988
  %1990 = vrot.lane.b32.xlu0 %v1642, 48
  %v1991 = vpop.permute.xlu0 %1990
  %1992 = vrot.lane.b32.xlu0 %v1644, 48
  %v1993 = vpop.permute.xlu0 %1992
  %1994 = vrot.lane.b32.xlu0 %v1646, 48
  %v1995 = vpop.permute.xlu0 %1994
  %1996 = vrot.lane.b32.xlu0 %v1648, 48
  %v1997 = vpop.permute.xlu0 %1996
  %1998 = vrot.lane.b32.xlu0 %v1650, 48
  %v1999 = vpop.permute.xlu0 %1998
  %2000 = vrot.lane.b32.xlu0 %v1652, 48
  %v2001 = vpop.permute.xlu0 %2000
  %2002 = vrot.lane.b32.xlu0 %v1654, 48
  %v2003 = vpop.permute.xlu0 %2002
  %2016 = vrot.lane.b32.xlu0 %v1632, 38
  %v2017 = vpop.permute.xlu0 %2016
  %2018 = vrot.lane.b32.xlu0 %v1634, 38
  %v2019 = vpop.permute.xlu0 %2018
  %2020 = vrot.lane.b32.xlu0 %v1636, 38
  %v2021 = vpop.permute.xlu0 %2020
  %2022 = vrot.lane.b32.xlu0 %v1638, 38
  %v2023 = vpop.permute.xlu0 %2022
  %2024 = vrot.lane.b32.xlu0 %v1640, 38
  %v2025 = vpop.permute.xlu0 %2024
  %2026 = vrot.lane.b32.xlu0 %v1642, 38
  %v2027 = vpop.permute.xlu0 %2026
  %2028 = vrot.lane.b32.xlu0 %v1644, 38
  %v2029 = vpop.permute.xlu0 %2028
  %2030 = vrot.lane.b32.xlu0 %v1646, 38
  %v2031 = vpop.permute.xlu0 %2030
  %2032 = vrot.lane.b32.xlu0 %v1648, 38
  %v2033 = vpop.permute.xlu0 %2032
  %2034 = vrot.lane.b32.xlu0 %v1650, 38
  %v2035 = vpop.permute.xlu0 %2034
  %2036 = vrot.lane.b32.xlu0 %v1652, 38
  %v2037 = vpop.permute.xlu0 %2036
  %2038 = vrot.lane.b32.xlu0 %v1654, 38
  %v2039 = vpop.permute.xlu0 %2038
  %2052 = vrot.lane.b32.xlu0 %v1632, 28
  %v2053 = vpop.permute.xlu0 %2052
  %2054 = vrot.lane.b32.xlu0 %v1634, 28
  %v2055 = vpop.permute.xlu0 %2054
  %2056 = vrot.lane.b32.xlu0 %v1636, 28
  %v2057 = vpop.permute.xlu0 %2056
  %2058 = vrot.lane.b32.xlu0 %v1638, 28
  %v2059 = vpop.permute.xlu0 %2058
  %2060 = vrot.lane.b32.xlu0 %v1640, 28
  %v2061 = vpop.permute.xlu0 %2060
  %2062 = vrot.lane.b32.xlu0 %v1642, 28
  %v2063 = vpop.permute.xlu0 %2062
  %2064 = vrot.lane.b32.xlu0 %v1644, 28
  %v2065 = vpop.permute.xlu0 %2064
  %2066 = vrot.lane.b32.xlu0 %v1646, 28
  %v2067 = vpop.permute.xlu0 %2066
  %2068 = vrot.lane.b32.xlu0 %v1648, 28
  %v2069 = vpop.permute.xlu0 %2068
  %2070 = vrot.lane.b32.xlu0 %v1650, 28
  %v2071 = vpop.permute.xlu0 %2070
  %2072 = vrot.lane.b32.xlu0 %v1652, 28
  %v2073 = vpop.permute.xlu0 %2072
  %2074 = vrot.lane.b32.xlu0 %v1654, 28
  %v2075 = vpop.permute.xlu0 %2074
  %2088 = vrot.lane.b32.xlu0 %v1632, 18
  %v2089 = vpop.permute.xlu0 %2088
  %2090 = vrot.lane.b32.xlu0 %v1634, 18
  %v2091 = vpop.permute.xlu0 %2090
  %2092 = vrot.lane.b32.xlu0 %v1636, 18
  %v2093 = vpop.permute.xlu0 %2092
  %2094 = vrot.lane.b32.xlu0 %v1638, 18
  %v2095 = vpop.permute.xlu0 %2094
  %2096 = vrot.lane.b32.xlu0 %v1640, 18
  %v2097 = vpop.permute.xlu0 %2096
  %2098 = vrot.lane.b32.xlu0 %v1642, 18
  %v2099 = vpop.permute.xlu0 %2098
  %2100 = vrot.lane.b32.xlu0 %v1644, 18
  %v2101 = vpop.permute.xlu0 %2100
  %2102 = vrot.lane.b32.xlu0 %v1646, 18
  %v2103 = vpop.permute.xlu0 %2102
  %2104 = vrot.lane.b32.xlu0 %v1648, 18
  %v2105 = vpop.permute.xlu0 %2104
  %2106 = vrot.lane.b32.xlu0 %v1650, 18
  %v2107 = vpop.permute.xlu0 %2106
  %2108 = vrot.lane.b32.xlu0 %v1652, 18
  %v2109 = vpop.permute.xlu0 %2108
  %2110 = vrot.lane.b32.xlu0 %v1654, 18
  %v2111 = vpop.permute.xlu0 %2110
  %vm2124 = vcmask 80896
  %v2125 = vsel %vm2124, %v1571, %v1668
  %v2126 = vsel %vm2124, %v1572, %v1670
  %v2127 = vsel %vm2124, %v1573, %v1672
  %v2128 = vsel %vm2124, %v1574, %v1674
  %v2129 = vsel %vm2124, %v1575, %v1676
  %v2130 = vsel %vm2124, %v1576, %v1678
  %v2131 = vsel %vm2124, %v1577, %v1680
  %v2132 = vsel %vm2124, %v1578, %v1682
  %v2133 = vsel %vm2124, %v1579, %v1684
  %v2134 = vsel %vm2124, %v1580, %v1686
  %v2135 = vsel %vm2124, %v1581, %v1688
  %v2136 = vsel %vm2124, %v1582, %v1690
  %vm2137 = vcmask 162816
  %v2138 = vsel %vm2137, %v2125, %v1704
  %v2139 = vsel %vm2137, %v2126, %v1706
  %v2140 = vsel %vm2137, %v2127, %v1708
  %v2141 = vsel %vm2137, %v2128, %v1710
  %v2142 = vsel %vm2137, %v2129, %v1712
  %v2143 = vsel %vm2137, %v2130, %v1714
  %v2144 = vsel %vm2137, %v2131, %v1716
  %v2145 = vsel %vm2137, %v2132, %v1718
  %v2146 = vsel %vm2137, %v2133, %v1720
  %v2147 = vsel %vm2137, %v2134, %v1722
  %v2148 = vsel %vm2137, %v2135, %v1724
  %v2149 = vsel %vm2137, %v2136, %v1726
  %vm2150 = vcmask 244736
  %v2151 = vsel %vm2150, %v2138, %v1740
  %v2152 = vsel %vm2150, %v2139, %v1742
  %v2153 = vsel %vm2150, %v2140, %v1744
  %v2154 = vsel %vm2150, %v2141, %v1746
  %v2155 = vsel %vm2150, %v2142, %v1748
  %v2156 = vsel %vm2150, %v2143, %v1750
  %v2157 = vsel %vm2150, %v2144, %v1752
  %v2158 = vsel %vm2150, %v2145, %v1754
  %v2159 = vsel %vm2150, %v2146, %v1756
  %v2160 = vsel %vm2150, %v2147, %v1758
  %v2161 = vsel %vm2150, %v2148, %v1760
  %v2162 = vsel %vm2150, %v2149, %v1762
  %vm2163 = vcmask 326656
  %v2164 = vsel %vm2163, %v2151, %v1776
  %v2165 = vsel %vm2163, %v2152, %v1778
  %v2166 = vsel %vm2163, %v2153, %v1780
  %v2167 = vsel %vm2163, %v2154, %v1782
  %v2168 = vsel %vm2163, %v2155, %v1784
  %v2169 = vsel %vm2163, %v2156, %v1786
  %v2170 = vsel %vm2163, %v2157, %v1788
  %v2171 = vsel %vm2163, %v2158, %v1790
  %v2172 = vsel %vm2163, %v2159, %v1792
  %v2173 = vsel %vm2163, %v2160, %v1794
  %v2174 = vsel %vm2163, %v2161, %v1796
  %v2175 = vsel %vm2163, %v2162, %v1798
  %vm2176 = vcmask 408576
  %v2177 = vsel %vm2176, %v2164, %v1812
  %v2178 = vsel %vm2176, %v2165, %v1814
  %v2179 = vsel %vm2176, %v2166, %v1816
  %v2180 = vsel %vm2176, %v2167, %v1818
  %v2181 = vsel %vm2176, %v2168, %v1820
  %v2182 = vsel %vm2176, %v2169, %v1822
  %v2183 = vsel %vm2176, %v2170, %v1824
  %v2184 = vsel %vm2176, %v2171, %v1826
  %v2185 = vsel %vm2176, %v2172, %v1828
  %v2186 = vsel %vm2176, %v2173, %v1830
  %v2187 = vsel %vm2176, %v2174, %v1832
  %v2188 = vsel %vm2176, %v2175, %v1834
  %vm2189 = vcmask 490496
  %v2190 = vsel %vm2189, %v2177, %v1920
  %v2191 = vsel %vm2189, %v2178, %v1921
  %v2192 = vsel %vm2189, %v2179, %v1922
  %v2193 = vsel %vm2189, %v2180, %v1923
  %v2194 = vsel %vm2189, %v2181, %v1924
  %v2195 = vsel %vm2189, %v2182, %v1925
  %v2196 = vsel %vm2189, %v2183, %v1926
  %v2197 = vsel %vm2189, %v2184, %v1927
  %v2198 = vsel %vm2189, %v2185, %v1928
  %v2199 = vsel %vm2189, %v2186, %v1929
  %v2200 = vsel %vm2189, %v2187, %v1930
  %v2201 = vsel %vm2189, %v2188, %v1931
  %vm2202 = vcmask 572416
  %v2203 = vsel %vm2202, %v2190, %v1945
  %v2204 = vsel %vm2202, %v2191, %v1947
  %v2205 = vsel %vm2202, %v2192, %v1949
  %v2206 = vsel %vm2202, %v2193, %v1951
  %v2207 = vsel %vm2202, %v2194, %v1953
  %v2208 = vsel %vm2202, %v2195, %v1955
  %v2209 = vsel %vm2202, %v2196, %v1957
  %v2210 = vsel %vm2202, %v2197, %v1959
  %v2211 = vsel %vm2202, %v2198, %v1961
  %v2212 = vsel %vm2202, %v2199, %v1963
  %v2213 = vsel %vm2202, %v2200, %v1965
  %v2214 = vsel %vm2202, %v2201, %v1967
  %vm2215 = vcmask 654336
  %v2216 = vsel %vm2215, %v2203, %v1981
  %v2217 = vsel %vm2215, %v2204, %v1983
  %v2218 = vsel %vm2215, %v2205, %v1985
  %v2219 = vsel %vm2215, %v2206, %v1987
  %v2220 = vsel %vm2215, %v2207, %v1989
  %v2221 = vsel %vm2215, %v2208, %v1991
  %v2222 = vsel %vm2215, %v2209, %v1993
  %v2223 = vsel %vm2215, %v2210, %v1995
  %v2224 = vsel %vm2215, %v2211, %v1997
  %v2225 = vsel %vm2215, %v2212, %v1999
  %v2226 = vsel %vm2215, %v2213, %v2001
  %v2227 = vsel %vm2215, %v2214, %v2003
  %vm2228 = vcmask 736256
  %v2229 = vsel %vm2228, %v2216, %v2017
  %v2230 = vsel %vm2228, %v2217, %v2019
  %v2231 = vsel %vm2228, %v2218, %v2021
  %v2232 = vsel %vm2228, %v2219, %v2023
  %v2233 = vsel %vm2228, %v2220, %v2025
  %v2234 = vsel %vm2228, %v2221, %v2027
  %v2235 = vsel %vm2228, %v2222, %v2029
  %v2236 = vsel %vm2228, %v2223, %v2031
  %v2237 = vsel %vm2228, %v2224, %v2033
  %v2238 = vsel %vm2228, %v2225, %v2035
  %v2239 = vsel %vm2228, %v2226, %v2037
  %v2240 = vsel %vm2228, %v2227, %v2039
  %vm2241 = vcmask 818176
  %v2242 = vsel %vm2241, %v2229, %v2053
  %v2243 = vsel %vm2241, %v2230, %v2055
  %v2244 = vsel %vm2241, %v2231, %v2057
  %v2245 = vsel %vm2241, %v2232, %v2059
  %v2246 = vsel %vm2241, %v2233, %v2061
  %v2247 = vsel %vm2241, %v2234, %v2063
  %v2248 = vsel %vm2241, %v2235, %v2065
  %v2249 = vsel %vm2241, %v2236, %v2067
  %v2250 = vsel %vm2241, %v2237, %v2069
  %v2251 = vsel %vm2241, %v2238, %v2071
  %v2252 = vsel %vm2241, %v2239, %v2073
  %v2253 = vsel %vm2241, %v2240, %v2075
  %vm2254 = vcmask 900096
  %v2255 = vsel %vm2254, %v2242, %v2089
  %v2256 = vsel %vm2254, %v2243, %v2091
  %v2257 = vsel %vm2254, %v2244, %v2093
  %v2258 = vsel %vm2254, %v2245, %v2095
  %v2259 = vsel %vm2254, %v2246, %v2097
  %v2260 = vsel %vm2254, %v2247, %v2099
  %v2261 = vsel %vm2254, %v2248, %v2101
  %v2262 = vsel %vm2254, %v2249, %v2103
  %v2263 = vsel %vm2254, %v2250, %v2105
  %v2264 = vsel %vm2254, %v2251, %v2107
  %v2265 = vsel %vm2254, %v2252, %v2109
  %v2266 = vsel %vm2254, %v2253, %v2111
  %v2267 = vmax.f32 %v2255, 0.0
  %v2268 = vmax.f32 %v2256, 0.0
  %v2269 = vmax.f32 %v2257, 0.0
  %v2270 = vmax.f32 %v2258, 0.0
  %v2271 = vmax.f32 %v2259, 0.0
  %v2272 = vmax.f32 %v2260, 0.0
  %v2273 = vmax.f32 %v2261, 0.0
  %v2274 = vmax.f32 %v2262, 0.0
  %v2275 = vmax.f32 %v2263, 0.0
  %v2276 = vmax.f32 %v2264, 0.0
  %v2277 = vmax.f32 %v2265, 0.0
  %v2278 = vmax.f32 %v2266, 0.0
  %vm2279 = vcmask 982016
  %2280 = vst.msk [vmem:[%s9] sm:$0xff] %vm2279, %v2267
  %2281 = vst.msk [vmem:[%s9 + $0x8] sm:$0xff] %vm2279, %v2268
  %2282 = vst.msk [vmem:[%s9 + $0x10] sm:$0xff] %vm2279, %v2269
  %2283 = vst.msk [vmem:[%s9 + $0x18] sm:$0xff] %vm2279, %v2270
  %2284 = vst.msk [vmem:[%s9 + $0x20] sm:$0xff] %vm2279, %v2271
  %2285 = vst.msk [vmem:[%s9 + $0x28] sm:$0xff] %vm2279, %v2272
  %2286 = vst.msk [vmem:[%s9 + $0x30] sm:$0xff] %vm2279, %v2273
  %2287 = vst.msk [vmem:[%s9 + $0x38] sm:$0xff] %vm2279, %v2274
  %2288 = vst.msk [vmem:[%s9 + $0x40] sm:$0xff] %vm2279, %v2275
  %2289 = vst.msk [vmem:[%s9 + $0x48] sm:$0xff] %vm2279, %v2276
  %2290 = vst.msk [vmem:[%s9 + $0x50] sm:$0xff] %vm2279, %v2277
  %2291 = vst.msk [vmem:[%s9 + $0x58] sm:$0xff] %vm2279, %v2278
  %v2292 = vld [vmem:[%s3] sm:$0xff]
  %v2293 = vld [vmem:[%s3 + $0x8] sm:$0xff]
  %v2294 = vld [vmem:[%s3 + $0x10] sm:$0xff]
  %v2295 = vld [vmem:[%s3 + $0x18] sm:$0xff]
  %v2296 = vld [vmem:[%s3 + $0x20] sm:$0xff]
  %v2297 = vld [vmem:[%s3 + $0x28] sm:$0xff]
  %v2298 = vld [vmem:[%s3 + $0x30] sm:$0xff]
  %v2299 = vld [vmem:[%s3 + $0x38] sm:$0xff]
  %v2300 = vld [vmem:[%s3 + $0x40] sm:$0xff]
  %v2301 = vld [vmem:[%s3 + $0x48] sm:$0xff]
  %v2302 = vld [vmem:[%s3 + $0x50] sm:$0xff]
  %v2303 = vld [vmem:[%s3 + $0x58] sm:$0xff]
  %v2304 = vld [vmem:[%s3 + $0x60] sm:$0xff]
  %v2305 = vld [vmem:[%s3 + $0x68] sm:$0xff]
  %v2306 = vld [vmem:[%s3 + $0x70] sm:$0xff]
  %v2307 = vld [vmem:[%s3 + $0x78] sm:$0xff]
  %v2308 = vld [vmem:[%s3 + $0x80] sm:$0xff]
  %v2309 = vld [vmem:[%s3 + $0x88] sm:$0xff]
  %v2310 = vld [vmem:[%s3 + $0x90] sm:$0xff]
  %v2311 = vld [vmem:[%s3 + $0x98] sm:$0xff]
  %v2312 = vld [vmem:[%s3 + $0xa0] sm:$0xff]
  %v2313 = vld [vmem:[%s3 + $0xa8] sm:$0xff]
  %v2314 = vld [vmem:[%s3 + $0xb0] sm:$0xff]
  %v2315 = vld [vmem:[%s3 + $0xb8] sm:$0xff]
  %v2316 = vld [vmem:[%s3 + $0xc0] sm:$0xff]
  %v2317 = vld [vmem:[%s3 + $0xc8] sm:$0xff]
  %v2318 = vld [vmem:[%s3 + $0xd0] sm:$0xff]
  %v2319 = vld [vmem:[%s3 + $0xd8] sm:$0xff]
  %v2320 = vld [vmem:[%s3 + $0xe0] sm:$0xff]
  %v2321 = vld [vmem:[%s3 + $0xe8] sm:$0xff]
  %s2322 = scalar_lea.vmem %s3, 240
  %v2323 = vld [vmem:[%s2322] sm:$0xff]
  %v2324 = vld [vmem:[%s2322 + $0x8] sm:$0xff]
  %v2325 = vld [vmem:[%s2322 + $0x10] sm:$0xff]
  %v2326 = vld [vmem:[%s2322 + $0x18] sm:$0xff]
  %v2327 = vld [vmem:[%s2322 + $0x20] sm:$0xff]
  %v2328 = vld [vmem:[%s2322 + $0x28] sm:$0xff]
  %v2329 = vld [vmem:[%s2322 + $0x30] sm:$0xff]
  %v2330 = vld [vmem:[%s2322 + $0x38] sm:$0xff]
  %v2331 = vld [vmem:[%s2322 + $0x40] sm:$0xff]
  %v2332 = vld [vmem:[%s2322 + $0x48] sm:$0xff]
  %v2333 = vld [vmem:[%s2322 + $0x50] sm:$0xff]
  %v2334 = vld [vmem:[%s2322 + $0x58] sm:$0xff]
  %v2335 = vld [vmem:[%s2322 + $0x60] sm:$0xff]
  %v2336 = vld [vmem:[%s2322 + $0x68] sm:$0xff]
  %v2337 = vld [vmem:[%s2322 + $0x70] sm:$0xff]
  %v2338 = vld [vmem:[%s2322 + $0x78] sm:$0xff]
  %v2339 = vld [vmem:[%s2322 + $0x80] sm:$0xff]
  %v2340 = vld [vmem:[%s2322 + $0x88] sm:$0xff]
  %v2341 = vld [vmem:[%s2322 + $0x90] sm:$0xff]
  %v2342 = vld [vmem:[%s2322 + $0x98] sm:$0xff]
  %v2343 = vld [vmem:[%s2322 + $0xa0] sm:$0xff]
  %v2344 = vld [vmem:[%s2322 + $0xa8] sm:$0xff]
  %v2345 = vld [vmem:[%s2322 + $0xb0] sm:$0xff]
  %v2346 = vld [vmem:[%s2322 + $0xb8] sm:$0xff]
  %v2347 = vld [vmem:[%s2322 + $0xc0] sm:$0xff]
  %v2348 = vld [vmem:[%s2322 + $0xc8] sm:$0xff]
  %v2349 = vld [vmem:[%s2322 + $0xd0] sm:$0xff]
  %v2350 = vld [vmem:[%s2322 + $0xd8] sm:$0xff]
  %v2351 = vld [vmem:[%s2322 + $0xe0] sm:$0xff]
  %v2352 = vld [vmem:[%s2322 + $0xe8] sm:$0xff]
  %v2354 = vsel %vm2279, %v2268, 0
  %v2357 = vsel %vm2279, %v2269, 0
  %v2360 = vsel %vm2279, %v2270, 0
  %v2363 = vsel %vm2279, %v2271, 0
  %v2366 = vsel %vm2279, %v2272, 0
  %v2369 = vsel %vm2279, %v2273, 0
  %v2372 = vsel %vm2279, %v2274, 0
  %v2375 = vsel %vm2279, %v2275, 0
  %2377 = vmatprep.subr.mxu0 0.0
  %2378 = vmatpush1.msra.mxu0 0.0
  %2379 = vmatprep.subr.mxu0 %v2352
  %2380 = vmatpush1.msra.mxu0 %v2351
  %2381 = vmatprep.subr.mxu0 %v2350
  %2382 = vmatpush1.msra.mxu0 %v2349
  %2383 = vmatprep.subr.mxu0 %v2348
  %2384 = vmatpush1.msra.mxu0 %v2347
  %2385 = vmatprep.subr.mxu0 %v2346
  %2386 = vmatpush1.msra.mxu0 %v2345
  %2387 = vmatprep.subr.mxu0 %v2344
  %2388 = vmatpush1.msra.mxu0 %v2343
  %2389 = vmatprep.subr.mxu0 %v2342
  %2390 = vmatpush1.msra.mxu0 %v2341
  %2391 = vmatprep.subr.mxu0 %v2340
  %2392 = vmatpush1.msra.mxu0 %v2339
  %2393 = vmatprep.subr.mxu0 %v2338
  %2394 = vmatpush1.msra.mxu0 %v2337
  %2395 = vmatprep.subr.mxu0 %v2336
  %2396 = vmatpush1.msra.mxu0 %v2335
  %2397 = vmatprep.subr.mxu0 %v2334
  %2398 = vmatpush1.msra.mxu0 %v2333
  %2399 = vmatprep.subr.mxu0 %v2332
  %2400 = vmatpush1.msra.mxu0 %v2331
  %2401 = vmatprep.subr.mxu0 %v2330
  %2402 = vmatpush1.msra.mxu0 %v2329
  %2403 = vmatprep.subr.mxu0 %v2328
  %2404 = vmatpush1.msra.mxu0 %v2327
  %2405 = vmatprep.subr.mxu0 %v2326
  %2406 = vmatpush1.msra.mxu0 %v2325
  %2407 = vmatprep.subr.mxu0 %v2324
  %2408 = vmatpush1.msra.mxu0 %v2323
  %2409 = vmatprep.subr.mxu0 0.0
  %2410 = vmatpush2.msra.mxu0 0.0
  %2411 = vmatprep.subr.mxu0 0.0
  %2412 = vmatpush2.msra.mxu0 0.0
  %2413 = vmatprep.subr.mxu0 0.0
  %2414 = vmatpush2.msra.mxu0 0.0
  %2415 = vmatprep.subr.mxu0 0.0
  %2416 = vmatpush2.msra.mxu0 0.0
  %2417 = vmatprep.subr.mxu0 0.0
  %2418 = vmatpush2.msra.mxu0 0.0
  %2419 = vmatprep.subr.mxu0 0.0
  %2420 = vmatpush2.msra.mxu0 0.0
  %2421 = vmatprep.subr.mxu0 0.0
  %2422 = vmatpush2.msra.mxu0 0.0
  %2423 = vmatprep.subr.mxu0 0.0
  %2424 = vmatpush2.msra.mxu0 0.0
  %2425 = vmatprep.subr.mxu0 0.0
  %2426 = vmatpush2.msra.mxu0 0.0
  %2427 = vmatprep.subr.mxu0 0.0
  %2428 = vmatpush2.msra.mxu0 0.0
  %2429 = vmatprep.subr.mxu0 0.0
  %2430 = vmatpush2.msra.mxu0 0.0
  %2431 = vmatprep.subr.mxu0 0.0
  %2432 = vmatpush2.msra.mxu0 0.0
  %2433 = vmatprep.subr.mxu0 0.0
  %2434 = vmatpush2.msra.mxu0 0.0
  %2435 = vmatprep.subr.mxu0 0.0
  %2436 = vmatpush2.msra.mxu0 0.0
  %2437 = vmatprep.subr.mxu0 0.0
  %2438 = vmatpush2.msra.mxu0 0.0
  %2439 = vmatprep.subr.mxu0 0.0
  %2440 = vmatpush2.msra.mxu0 0.0
  %2441 = vmatprep.mubr.f32.mxu0 0.0
  %2442 = vmatmul.mubr.f32.gmra.mxu0 %v2354
  %v2443 = vpop.f32.mrf.mxu0
  %v2444 = vadd.f32 0.0, %v2443
  %v2445 = vpop.f32.mrf.mxu0
  %v2446 = vadd.f32 0.0, %v2445
  %2447 = vmatprep.mubr.f32.mxu0 0.0
  %2448 = vmatmul.mubr.f32.gmra.mxu0 %v2357
  %v2449 = vpop.f32.mrf.mxu0
  %v2450 = vadd.f32 0.0, %v2449
  %v2451 = vpop.f32.mrf.mxu0
  %v2452 = vadd.f32 0.0, %v2451
  %2453 = vmatprep.mubr.f32.mxu0 0.0
  %2454 = vmatmul.mubr.f32.gmra.mxu0 %v2360
  %v2455 = vpop.f32.mrf.mxu0
  %v2456 = vadd.f32 0.0, %v2455
  %v2457 = vpop.f32.mrf.mxu0
  %v2458 = vadd.f32 0.0, %v2457
  %2459 = vmatprep.mubr.f32.mxu0 0.0
  %2460 = vmatmul.mubr.f32.gmra.mxu0 %v2363
  %v2461 = vpop.f32.mrf.mxu0
  %v2462 = vadd.f32 0.0, %v2461
  %v2463 = vpop.f32.mrf.mxu0
  %v2464 = vadd.f32 0.0, %v2463
  %2465 = vmatprep.mubr.f32.mxu0 0.0
  %2466 = vmatmul.mubr.f32.gmra.mxu0 %v2366
  %v2467 = vpop.f32.mrf.mxu0
  %v2468 = vadd.f32 0.0, %v2467
  %v2469 = vpop.f32.mrf.mxu0
  %v2470 = vadd.f32 0.0, %v2469
  %2471 = vmatprep.mubr.f32.mxu0 0.0
  %2472 = vmatmul.mubr.f32.gmra.mxu0 %v2369
  %v2473 = vpop.f32.mrf.mxu0
  %v2474 = vadd.f32 0.0, %v2473
  %v2475 = vpop.f32.mrf.mxu0
  %v2476 = vadd.f32 0.0, %v2475
  %2477 = vmatprep.mubr.f32.mxu0 0.0
  %2478 = vmatmul.mubr.f32.gmra.mxu0 %v2372
  %v2479 = vpop.f32.mrf.mxu0
  %v2480 = vadd.f32 0.0, %v2479
  %v2481 = vpop.f32.mrf.mxu0
  %v2482 = vadd.f32 0.0, %v2481
  %2483 = vmatprep.mubr.f32.mxu0 0.0
  %2484 = vmatmul.mubr.f32.gmra.mxu0 %v2375
  %v2485 = vpop.f32.mrf.mxu0
  %v2486 = vadd.f32 0.0, %v2485
  %v2487 = vpop.f32.mrf.mxu0
  %v2488 = vadd.f32 0.0, %v2487
  %2489 = vdwg.mxu0
  %v2491 = vsel %vm2279, %v2267, 0
  %2493 = vmatprep.subr.mxu0 0.0
  %2494 = vmatpush1.msra.mxu0 0.0
  %2495 = vmatprep.subr.mxu0 %v2321
  %2496 = vmatpush1.msra.mxu0 %v2320
  %2497 = vmatprep.subr.mxu0 %v2319
  %2498 = vmatpush1.msra.mxu0 %v2318
  %2499 = vmatprep.subr.mxu0 %v2317
  %2500 = vmatpush1.msra.mxu0 %v2316
  %2501 = vmatprep.subr.mxu0 %v2315
  %2502 = vmatpush1.msra.mxu0 %v2314
  %2503 = vmatprep.subr.mxu0 %v2313
  %2504 = vmatpush1.msra.mxu0 %v2312
  %2505 = vmatprep.subr.mxu0 %v2311
  %2506 = vmatpush1.msra.mxu0 %v2310
  %2507 = vmatprep.subr.mxu0 %v2309
  %2508 = vmatpush1.msra.mxu0 %v2308
  %2509 = vmatprep.subr.mxu0 %v2307
  %2510 = vmatpush1.msra.mxu0 %v2306
  %2511 = vmatprep.subr.mxu0 %v2305
  %2512 = vmatpush1.msra.mxu0 %v2304
  %2513 = vmatprep.subr.mxu0 %v2303
  %2514 = vmatpush1.msra.mxu0 %v2302
  %2515 = vmatprep.subr.mxu0 %v2301
  %2516 = vmatpush1.msra.mxu0 %v2300
  %2517 = vmatprep.subr.mxu0 %v2299
  %2518 = vmatpush1.msra.mxu0 %v2298
  %2519 = vmatprep.subr.mxu0 %v2297
  %2520 = vmatpush1.msra.mxu0 %v2296
  %2521 = vmatprep.subr.mxu0 %v2295
  %2522 = vmatpush1.msra.mxu0 %v2294
  %2523 = vmatprep.subr.mxu0 %v2293
  %2524 = vmatpush1.msra.mxu0 %v2292
  %2525 = vmatprep.subr.mxu0 0.0
  %2526 = vmatpush2.msra.mxu0 0.0
  %2527 = vmatprep.subr.mxu0 0.0
  %2528 = vmatpush2.msra.mxu0 0.0
  %2529 = vmatprep.subr.mxu0 0.0
  %2530 = vmatpush2.msra.mxu0 0.0
  %2531 = vmatprep.subr.mxu0 0.0
  %2532 = vmatpush2.msra.mxu0 0.0
  %2533 = vmatprep.subr.mxu0 0.0
  %2534 = vmatpush2.msra.mxu0 0.0
  %2535 = vmatprep.subr.mxu0 0.0
  %2536 = vmatpush2.msra.mxu0 0.0
  %2537 = vmatprep.subr.mxu0 0.0
  %2538 = vmatpush2.msra.mxu0 0.0
  %2539 = vmatprep.subr.mxu0 0.0
  %2540 = vmatpush2.msra.mxu0 0.0
  %2541 = vmatprep.subr.mxu0 0.0
  %2542 = vmatpush2.msra.mxu0 0.0
  %2543 = vmatprep.subr.mxu0 0.0
  %2544 = vmatpush2.msra.mxu0 0.0
  %2545 = vmatprep.subr.mxu0 0.0
  %2546 = vmatpush2.msra.mxu0 0.0
  %2547 = vmatprep.subr.mxu0 0.0
  %2548 = vmatpush2.msra.mxu0 0.0
  %2549 = vmatprep.subr.mxu0 0.0
  %2550 = vmatpush2.msra.mxu0 0.0
  %2551 = vmatprep.subr.mxu0 0.0
  %2552 = vmatpush2.msra.mxu0 0.0
  %2553 = vmatprep.subr.mxu0 0.0
  %2554 = vmatpush2.msra.mxu0 0.0
  %2555 = vmatprep.subr.mxu0 0.0
  %2556 = vmatpush2.msra.mxu0 0.0
  %2557 = vmatprep.mubr.f32.mxu0 0.0
  %2558 = vmatmul.mubr.f32.gmra.mxu0 %v2491
  %v2559 = vpop.f32.mrf.mxu0
  %v2560 = vadd.f32 %v2444, %v2559
  %v2561 = vpop.f32.mrf.mxu0
  %v2562 = vadd.f32 %v2446, %v2561
  %2563 = vmatprep.mubr.f32.mxu0 0.0
  %2564 = vmatmul.mubr.f32.gmra.mxu0 %v2354
  %v2565 = vpop.f32.mrf.mxu0
  %v2566 = vadd.f32 %v2450, %v2565
  %v2567 = vpop.f32.mrf.mxu0
  %v2568 = vadd.f32 %v2452, %v2567
  %2569 = vmatprep.mubr.f32.mxu0 0.0
  %2570 = vmatmul.mubr.f32.gmra.mxu0 %v2357
  %v2571 = vpop.f32.mrf.mxu0
  %v2572 = vadd.f32 %v2456, %v2571
  %v2573 = vpop.f32.mrf.mxu0
  %v2574 = vadd.f32 %v2458, %v2573
  %2575 = vmatprep.mubr.f32.mxu0 0.0
  %2576 = vmatmul.mubr.f32.gmra.mxu0 %v2360
  %v2577 = vpop.f32.mrf.mxu0
  %v2578 = vadd.f32 %v2462, %v2577
  %v2579 = vpop.f32.mrf.mxu0
  %v2580 = vadd.f32 %v2464, %v2579
  %2581 = vmatprep.mubr.f32.mxu0 0.0
  %2582 = vmatmul.mubr.f32.gmra.mxu0 %v2363
  %v2583 = vpop.f32.mrf.mxu0
  %v2584 = vadd.f32 %v2468, %v2583
  %v2585 = vpop.f32.mrf.mxu0
  %v2586 = vadd.f32 %v2470, %v2585
  %2587 = vmatprep.mubr.f32.mxu0 0.0
  %2588 = vmatmul.mubr.f32.gmra.mxu0 %v2366
  %v2589 = vpop.f32.mrf.mxu0
  %v2590 = vadd.f32 %v2474, %v2589
  %v2591 = vpop.f32.mrf.mxu0
  %v2592 = vadd.f32 %v2476, %v2591
  %2593 = vmatprep.mubr.f32.mxu0 0.0
  %2594 = vmatmul.mubr.f32.gmra.mxu0 %v2369
  %v2595 = vpop.f32.mrf.mxu0
  %v2596 = vadd.f32 %v2480, %v2595
  %v2597 = vpop.f32.mrf.mxu0
  %v2598 = vadd.f32 %v2482, %v2597
  %2599 = vmatprep.mubr.f32.mxu0 0.0
  %2600 = vmatmul.mubr.f32.gmra.mxu0 %v2372
  %v2601 = vpop.f32.mrf.mxu0
  %v2602 = vadd.f32 %v2486, %v2601
  %v2603 = vpop.f32.mrf.mxu0
  %v2604 = vadd.f32 %v2488, %v2603
  %2605 = vdwg.mxu0
  %s2606 = scalar_lea.vmem %s3, 480
  %v2607 = vld [vmem:[%s2606] sm:$0xff]
  %v2608 = vld [vmem:[%s2606 + $0x8] sm:$0xff]
  %v2609 = vld [vmem:[%s2606 + $0x10] sm:$0xff]
  %v2610 = vld [vmem:[%s2606 + $0x18] sm:$0xff]
  %v2611 = vld [vmem:[%s2606 + $0x20] sm:$0xff]
  %v2612 = vld [vmem:[%s2606 + $0x28] sm:$0xff]
  %v2613 = vld [vmem:[%s2606 + $0x30] sm:$0xff]
  %v2614 = vld [vmem:[%s2606 + $0x38] sm:$0xff]
  %v2615 = vld [vmem:[%s2606 + $0x40] sm:$0xff]
  %v2616 = vld [vmem:[%s2606 + $0x48] sm:$0xff]
  %v2617 = vld [vmem:[%s2606 + $0x50] sm:$0xff]
  %v2618 = vld [vmem:[%s2606 + $0x58] sm:$0xff]
  %v2619 = vld [vmem:[%s2606 + $0x60] sm:$0xff]
  %v2620 = vld [vmem:[%s2606 + $0x68] sm:$0xff]
  %v2621 = vld [vmem:[%s2606 + $0x70] sm:$0xff]
  %v2622 = vld [vmem:[%s2606 + $0x78] sm:$0xff]
  %v2623 = vld [vmem:[%s2606 + $0x80] sm:$0xff]
  %v2624 = vld [vmem:[%s2606 + $0x88] sm:$0xff]
  %v2625 = vld [vmem:[%s2606 + $0x90] sm:$0xff]
  %v2626 = vld [vmem:[%s2606 + $0x98] sm:$0xff]
  %v2627 = vld [vmem:[%s2606 + $0xa0] sm:$0xff]
  %v2628 = vld [vmem:[%s2606 + $0xa8] sm:$0xff]
  %v2629 = vld [vmem:[%s2606 + $0xb0] sm:$0xff]
  %v2630 = vld [vmem:[%s2606 + $0xb8] sm:$0xff]
  %v2631 = vld [vmem:[%s2606 + $0xc0] sm:$0xff]
  %v2632 = vld [vmem:[%s2606 + $0xc8] sm:$0xff]
  %v2633 = vld [vmem:[%s2606 + $0xd0] sm:$0xff]
  %v2634 = vld [vmem:[%s2606 + $0xd8] sm:$0xff]
  %v2635 = vld [vmem:[%s2606 + $0xe0] sm:$0xff]
  %v2636 = vld [vmem:[%s2606 + $0xe8] sm:$0xff]
  %v2638 = vsel %vm2279, %v2276, 0
  %2640 = vmatprep.subr.mxu0 0.0
  %2641 = vmatpush1.msra.mxu0 0.0
  %2642 = vmatprep.subr.mxu0 %v2636
  %2643 = vmatpush1.msra.mxu0 %v2635
  %2644 = vmatprep.subr.mxu0 %v2634
  %2645 = vmatpush1.msra.mxu0 %v2633
  %2646 = vmatprep.subr.mxu0 %v2632
  %2647 = vmatpush1.msra.mxu0 %v2631
  %2648 = vmatprep.subr.mxu0 %v2630
  %2649 = vmatpush1.msra.mxu0 %v2629
  %2650 = vmatprep.subr.mxu0 %v2628
  %2651 = vmatpush1.msra.mxu0 %v2627
  %2652 = vmatprep.subr.mxu0 %v2626
  %2653 = vmatpush1.msra.mxu0 %v2625
  %2654 = vmatprep.subr.mxu0 %v2624
  %2655 = vmatpush1.msra.mxu0 %v2623
  %2656 = vmatprep.subr.mxu0 %v2622
  %2657 = vmatpush1.msra.mxu0 %v2621
  %2658 = vmatprep.subr.mxu0 %v2620
  %2659 = vmatpush1.msra.mxu0 %v2619
  %2660 = vmatprep.subr.mxu0 %v2618
  %2661 = vmatpush1.msra.mxu0 %v2617
  %2662 = vmatprep.subr.mxu0 %v2616
  %2663 = vmatpush1.msra.mxu0 %v2615
  %2664 = vmatprep.subr.mxu0 %v2614
  %2665 = vmatpush1.msra.mxu0 %v2613
  %2666 = vmatprep.subr.mxu0 %v2612
  %2667 = vmatpush1.msra.mxu0 %v2611
  %2668 = vmatprep.subr.mxu0 %v2610
  %2669 = vmatpush1.msra.mxu0 %v2609
  %2670 = vmatprep.subr.mxu0 %v2608
  %2671 = vmatpush1.msra.mxu0 %v2607
  %2672 = vmatprep.subr.mxu0 0.0
  %2673 = vmatpush2.msra.mxu0 0.0
  %2674 = vmatprep.subr.mxu0 0.0
  %2675 = vmatpush2.msra.mxu0 0.0
  %2676 = vmatprep.subr.mxu0 0.0
  %2677 = vmatpush2.msra.mxu0 0.0
  %2678 = vmatprep.subr.mxu0 0.0
  %2679 = vmatpush2.msra.mxu0 0.0
  %2680 = vmatprep.subr.mxu0 0.0
  %2681 = vmatpush2.msra.mxu0 0.0
  %2682 = vmatprep.subr.mxu0 0.0
  %2683 = vmatpush2.msra.mxu0 0.0
  %2684 = vmatprep.subr.mxu0 0.0
  %2685 = vmatpush2.msra.mxu0 0.0
  %2686 = vmatprep.subr.mxu0 0.0
  %2687 = vmatpush2.msra.mxu0 0.0
  %2688 = vmatprep.subr.mxu0 0.0
  %2689 = vmatpush2.msra.mxu0 0.0
  %2690 = vmatprep.subr.mxu0 0.0
  %2691 = vmatpush2.msra.mxu0 0.0
  %2692 = vmatprep.subr.mxu0 0.0
  %2693 = vmatpush2.msra.mxu0 0.0
  %2694 = vmatprep.subr.mxu0 0.0
  %2695 = vmatpush2.msra.mxu0 0.0
  %2696 = vmatprep.subr.mxu0 0.0
  %2697 = vmatpush2.msra.mxu0 0.0
  %2698 = vmatprep.subr.mxu0 0.0
  %2699 = vmatpush2.msra.mxu0 0.0
  %2700 = vmatprep.subr.mxu0 0.0
  %2701 = vmatpush2.msra.mxu0 0.0
  %2702 = vmatprep.subr.mxu0 0.0
  %2703 = vmatpush2.msra.mxu0 0.0
  %2704 = vmatprep.mubr.f32.mxu0 0.0
  %2705 = vmatmul.mubr.f32.gmra.mxu0 %v2357
  %v2706 = vpop.f32.mrf.mxu0
  %v2707 = vadd.f32 0.0, %v2706
  %v2708 = vpop.f32.mrf.mxu0
  %v2709 = vadd.f32 0.0, %v2708
  %2710 = vmatprep.mubr.f32.mxu0 0.0
  %2711 = vmatmul.mubr.f32.gmra.mxu0 %v2360
  %v2712 = vpop.f32.mrf.mxu0
  %v2713 = vadd.f32 0.0, %v2712
  %v2714 = vpop.f32.mrf.mxu0
  %v2715 = vadd.f32 0.0, %v2714
  %2716 = vmatprep.mubr.f32.mxu0 0.0
  %2717 = vmatmul.mubr.f32.gmra.mxu0 %v2363
  %v2718 = vpop.f32.mrf.mxu0
  %v2719 = vadd.f32 0.0, %v2718
  %v2720 = vpop.f32.mrf.mxu0
  %v2721 = vadd.f32 0.0, %v2720
  %2722 = vmatprep.mubr.f32.mxu0 0.0
  %2723 = vmatmul.mubr.f32.gmra.mxu0 %v2366
  %v2724 = vpop.f32.mrf.mxu0
  %v2725 = vadd.f32 0.0, %v2724
  %v2726 = vpop.f32.mrf.mxu0
  %v2727 = vadd.f32 0.0, %v2726
  %2728 = vmatprep.mubr.f32.mxu0 0.0
  %2729 = vmatmul.mubr.f32.gmra.mxu0 %v2369
  %v2730 = vpop.f32.mrf.mxu0
  %v2731 = vadd.f32 0.0, %v2730
  %v2732 = vpop.f32.mrf.mxu0
  %v2733 = vadd.f32 0.0, %v2732
  %2734 = vmatprep.mubr.f32.mxu0 0.0
  %2735 = vmatmul.mubr.f32.gmra.mxu0 %v2372
  %v2736 = vpop.f32.mrf.mxu0
  %v2737 = vadd.f32 0.0, %v2736
  %v2738 = vpop.f32.mrf.mxu0
  %v2739 = vadd.f32 0.0, %v2738
  %2740 = vmatprep.mubr.f32.mxu0 0.0
  %2741 = vmatmul.mubr.f32.gmra.mxu0 %v2375
  %v2742 = vpop.f32.mrf.mxu0
  %v2743 = vadd.f32 0.0, %v2742
  %v2744 = vpop.f32.mrf.mxu0
  %v2745 = vadd.f32 0.0, %v2744
  %2746 = vmatprep.mubr.f32.mxu0 0.0
  %2747 = vmatmul.mubr.f32.gmra.mxu0 %v2638
  %v2748 = vpop.f32.mrf.mxu0
  %v2749 = vadd.f32 0.0, %v2748
  %v2750 = vpop.f32.mrf.mxu0
  %v2751 = vadd.f32 0.0, %v2750
  %2752 = vdwg.mxu0
  %v2753 = vadd.f32 %v2560, %v2707
  %v2754 = vadd.f32 %v2562, %v2709
  %v2755 = vadd.f32 %v2566, %v2713
  %v2756 = vadd.f32 %v2568, %v2715
  %v2757 = vadd.f32 %v2572, %v2719
  %v2758 = vadd.f32 %v2574, %v2721
  %v2759 = vadd.f32 %v2578, %v2725
  %v2760 = vadd.f32 %v2580, %v2727
  %v2761 = vadd.f32 %v2584, %v2731
  %v2762 = vadd.f32 %v2586, %v2733
  %v2763 = vadd.f32 %v2590, %v2737
  %v2764 = vadd.f32 %v2592, %v2739
  %v2765 = vadd.f32 %v2596, %v2743
  %v2766 = vadd.f32 %v2598, %v2745
  %v2767 = vadd.f32 %v2602, %v2749
  %v2768 = vadd.f32 %v2604, %v2751
  %s2769 = scalar_lea.vmem %s3, 720
  %v2770 = vld [vmem:[%s2769] sm:$0xff]
  %v2771 = vld [vmem:[%s2769 + $0x8] sm:$0xff]
  %v2772 = vld [vmem:[%s2769 + $0x10] sm:$0xff]
  %v2773 = vld [vmem:[%s2769 + $0x18] sm:$0xff]
  %v2774 = vld [vmem:[%s2769 + $0x20] sm:$0xff]
  %v2775 = vld [vmem:[%s2769 + $0x28] sm:$0xff]
  %v2776 = vld [vmem:[%s2769 + $0x30] sm:$0xff]
  %v2777 = vld [vmem:[%s2769 + $0x38] sm:$0xff]
  %v2778 = vld [vmem:[%s2769 + $0x40] sm:$0xff]
  %v2779 = vld [vmem:[%s2769 + $0x48] sm:$0xff]
  %v2780 = vld [vmem:[%s2769 + $0x50] sm:$0xff]
  %v2781 = vld [vmem:[%s2769 + $0x58] sm:$0xff]
  %v2782 = vld [vmem:[%s2769 + $0x60] sm:$0xff]
  %v2783 = vld [vmem:[%s2769 + $0x68] sm:$0xff]
  %v2784 = vld [vmem:[%s2769 + $0x70] sm:$0xff]
  %v2785 = vld [vmem:[%s2769 + $0x78] sm:$0xff]
  %v2786 = vld [vmem:[%s2769 + $0x80] sm:$0xff]
  %v2787 = vld [vmem:[%s2769 + $0x88] sm:$0xff]
  %v2788 = vld [vmem:[%s2769 + $0x90] sm:$0xff]
  %v2789 = vld [vmem:[%s2769 + $0x98] sm:$0xff]
  %v2790 = vld [vmem:[%s2769 + $0xa0] sm:$0xff]
  %v2791 = vld [vmem:[%s2769 + $0xa8] sm:$0xff]
  %v2792 = vld [vmem:[%s2769 + $0xb0] sm:$0xff]
  %v2793 = vld [vmem:[%s2769 + $0xb8] sm:$0xff]
  %v2794 = vld [vmem:[%s2769 + $0xc0] sm:$0xff]
  %v2795 = vld [vmem:[%s2769 + $0xc8] sm:$0xff]
  %v2796 = vld [vmem:[%s2769 + $0xd0] sm:$0xff]
  %v2797 = vld [vmem:[%s2769 + $0xd8] sm:$0xff]
  %v2798 = vld [vmem:[%s2769 + $0xe0] sm:$0xff]
  %v2799 = vld [vmem:[%s2769 + $0xe8] sm:$0xff]
  %v2801 = vsel %vm2279, %v2277, 0
  %2803 = vmatprep.subr.mxu0 0.0
  %2804 = vmatpush1.msra.mxu0 0.0
  %2805 = vmatprep.subr.mxu0 %v2799
  %2806 = vmatpush1.msra.mxu0 %v2798
  %2807 = vmatprep.subr.mxu0 %v2797
  %2808 = vmatpush1.msra.mxu0 %v2796
  %2809 = vmatprep.subr.mxu0 %v2795
  %2810 = vmatpush1.msra.mxu0 %v2794
  %2811 = vmatprep.subr.mxu0 %v2793
  %2812 = vmatpush1.msra.mxu0 %v2792
  %2813 = vmatprep.subr.mxu0 %v2791
  %2814 = vmatpush1.msra.mxu0 %v2790
  %2815 = vmatprep.subr.mxu0 %v2789
  %2816 = vmatpush1.msra.mxu0 %v2788
  %2817 = vmatprep.subr.mxu0 %v2787
  %2818 = vmatpush1.msra.mxu0 %v2786
  %2819 = vmatprep.subr.mxu0 %v2785
  %2820 = vmatpush1.msra.mxu0 %v2784
  %2821 = vmatprep.subr.mxu0 %v2783
  %2822 = vmatpush1.msra.mxu0 %v2782
  %2823 = vmatprep.subr.mxu0 %v2781
  %2824 = vmatpush1.msra.mxu0 %v2780
  %2825 = vmatprep.subr.mxu0 %v2779
  %2826 = vmatpush1.msra.mxu0 %v2778
  %2827 = vmatprep.subr.mxu0 %v2777
  %2828 = vmatpush1.msra.mxu0 %v2776
  %2829 = vmatprep.subr.mxu0 %v2775
  %2830 = vmatpush1.msra.mxu0 %v2774
  %2831 = vmatprep.subr.mxu0 %v2773
  %2832 = vmatpush1.msra.mxu0 %v2772
  %2833 = vmatprep.subr.mxu0 %v2771
  %2834 = vmatpush1.msra.mxu0 %v2770
  %2835 = vmatprep.subr.mxu0 0.0
  %2836 = vmatpush2.msra.mxu0 0.0
  %2837 = vmatprep.subr.mxu0 0.0
  %2838 = vmatpush2.msra.mxu0 0.0
  %2839 = vmatprep.subr.mxu0 0.0
  %2840 = vmatpush2.msra.mxu0 0.0
  %2841 = vmatprep.subr.mxu0 0.0
  %2842 = vmatpush2.msra.mxu0 0.0
  %2843 = vmatprep.subr.mxu0 0.0
  %2844 = vmatpush2.msra.mxu0 0.0
  %2845 = vmatprep.subr.mxu0 0.0
  %2846 = vmatpush2.msra.mxu0 0.0
  %2847 = vmatprep.subr.mxu0 0.0
  %2848 = vmatpush2.msra.mxu0 0.0
  %2849 = vmatprep.subr.mxu0 0.0
  %2850 = vmatpush2.msra.mxu0 0.0
  %2851 = vmatprep.subr.mxu0 0.0
  %2852 = vmatpush2.msra.mxu0 0.0
  %2853 = vmatprep.subr.mxu0 0.0
  %2854 = vmatpush2.msra.mxu0 0.0
  %2855 = vmatprep.subr.mxu0 0.0
  %2856 = vmatpush2.msra.mxu0 0.0
  %2857 = vmatprep.subr.mxu0 0.0
  %2858 = vmatpush2.msra.mxu0 0.0
  %2859 = vmatprep.subr.mxu0 0.0
  %2860 = vmatpush2.msra.mxu0 0.0
  %2861 = vmatprep.subr.mxu0 0.0
  %2862 = vmatpush2.msra.mxu0 0.0
  %2863 = vmatprep.subr.mxu0 0.0
  %2864 = vmatpush2.msra.mxu0 0.0
  %2865 = vmatprep.subr.mxu0 0.0
  %2866 = vmatpush2.msra.mxu0 0.0
  %2867 = vmatprep.mubr.f32.mxu0 0.0
  %2868 = vmatmul.mubr.f32.gmra.mxu0 %v2360
  %v2869 = vpop.f32.mrf.mxu0
  %v2870 = vadd.f32 0.0, %v2869
  %v2871 = vpop.f32.mrf.mxu0
  %v2872 = vadd.f32 0.0, %v2871
  %2873 = vmatprep.mubr.f32.mxu0 0.0
  %2874 = vmatmul.mubr.f32.gmra.mxu0 %v2363
  %v2875 = vpop.f32.mrf.mxu0
  %v2876 = vadd.f32 0.0, %v2875
  %v2877 = vpop.f32.mrf.mxu0
  %v2878 = vadd.f32 0.0, %v2877
  %2879 = vmatprep.mubr.f32.mxu0 0.0
  %2880 = vmatmul.mubr.f32.gmra.mxu0 %v2366
  %v2881 = vpop.f32.mrf.mxu0
  %v2882 = vadd.f32 0.0, %v2881
  %v2883 = vpop.f32.mrf.mxu0
  %v2884 = vadd.f32 0.0, %v2883
  %2885 = vmatprep.mubr.f32.mxu0 0.0
  %2886 = vmatmul.mubr.f32.gmra.mxu0 %v2369
  %v2887 = vpop.f32.mrf.mxu0
  %v2888 = vadd.f32 0.0, %v2887
  %v2889 = vpop.f32.mrf.mxu0
  %v2890 = vadd.f32 0.0, %v2889
  %2891 = vmatprep.mubr.f32.mxu0 0.0
  %2892 = vmatmul.mubr.f32.gmra.mxu0 %v2372
  %v2893 = vpop.f32.mrf.mxu0
  %v2894 = vadd.f32 0.0, %v2893
  %v2895 = vpop.f32.mrf.mxu0
  %v2896 = vadd.f32 0.0, %v2895
  %2897 = vmatprep.mubr.f32.mxu0 0.0
  %2898 = vmatmul.mubr.f32.gmra.mxu0 %v2375
  %v2899 = vpop.f32.mrf.mxu0
  %v2900 = vadd.f32 0.0, %v2899
  %v2901 = vpop.f32.mrf.mxu0
  %v2902 = vadd.f32 0.0, %v2901
  %2903 = vmatprep.mubr.f32.mxu0 0.0
  %2904 = vmatmul.mubr.f32.gmra.mxu0 %v2638
  %v2905 = vpop.f32.mrf.mxu0
  %v2906 = vadd.f32 0.0, %v2905
  %v2907 = vpop.f32.mrf.mxu0
  %v2908 = vadd.f32 0.0, %v2907
  %2909 = vmatprep.mubr.f32.mxu0 0.0
  %2910 = vmatmul.mubr.f32.gmra.mxu0 %v2801
  %v2911 = vpop.f32.mrf.mxu0
  %v2912 = vadd.f32 0.0, %v2911
  %v2913 = vpop.f32.mrf.mxu0
  %v2914 = vadd.f32 0.0, %v2913
  %2915 = vdwg.mxu0
  %v2916 = vadd.f32 %v2753, %v2870
  %v2917 = vadd.f32 %v2754, %v2872
  %v2918 = vadd.f32 %v2755, %v2876
  %v2919 = vadd.f32 %v2756, %v2878
  %v2920 = vadd.f32 %v2757, %v2882
  %v2921 = vadd.f32 %v2758, %v2884
  %v2922 = vadd.f32 %v2759, %v2888
  %v2923 = vadd.f32 %v2760, %v2890
  %v2924 = vadd.f32 %v2761, %v2894
  %v2925 = vadd.f32 %v2762, %v2896
  %v2926 = vadd.f32 %v2763, %v2900
  %v2927 = vadd.f32 %v2764, %v2902
  %v2928 = vadd.f32 %v2765, %v2906
  %v2929 = vadd.f32 %v2766, %v2908
  %v2930 = vadd.f32 %v2767, %v2912
  %v2931 = vadd.f32 %v2768, %v2914
  %s2932 = scalar_lea.vmem %s3, 960
  %v2933 = vld [vmem:[%s2932] sm:$0xff]
  %v2934 = vld [vmem:[%s2932 + $0x8] sm:$0xff]
  %v2935 = vld [vmem:[%s2932 + $0x10] sm:$0xff]
  %v2936 = vld [vmem:[%s2932 + $0x18] sm:$0xff]
  %v2937 = vld [vmem:[%s2932 + $0x20] sm:$0xff]
  %v2938 = vld [vmem:[%s2932 + $0x28] sm:$0xff]
  %v2939 = vld [vmem:[%s2932 + $0x30] sm:$0xff]
  %v2940 = vld [vmem:[%s2932 + $0x38] sm:$0xff]
  %v2941 = vld [vmem:[%s2932 + $0x40] sm:$0xff]
  %v2942 = vld [vmem:[%s2932 + $0x48] sm:$0xff]
  %v2943 = vld [vmem:[%s2932 + $0x50] sm:$0xff]
  %v2944 = vld [vmem:[%s2932 + $0x58] sm:$0xff]
  %v2945 = vld [vmem:[%s2932 + $0x60] sm:$0xff]
  %v2946 = vld [vmem:[%s2932 + $0x68] sm:$0xff]
  %v2947 = vld [vmem:[%s2932 + $0x70] sm:$0xff]
  %v2948 = vld [vmem:[%s2932 + $0x78] sm:$0xff]
  %v2949 = vld [vmem:[%s2932 + $0x80] sm:$0xff]
  %v2950 = vld [vmem:[%s2932 + $0x88] sm:$0xff]
  %v2951 = vld [vmem:[%s2932 + $0x90] sm:$0xff]
  %v2952 = vld [vmem:[%s2932 + $0x98] sm:$0xff]
  %v2953 = vld [vmem:[%s2932 + $0xa0] sm:$0xff]
  %v2954 = vld [vmem:[%s2932 + $0xa8] sm:$0xff]
  %v2955 = vld [vmem:[%s2932 + $0xb0] sm:$0xff]
  %v2956 = vld [vmem:[%s2932 + $0xb8] sm:$0xff]
  %v2957 = vld [vmem:[%s2932 + $0xc0] sm:$0xff]
  %v2958 = vld [vmem:[%s2932 + $0xc8] sm:$0xff]
  %v2959 = vld [vmem:[%s2932 + $0xd0] sm:$0xff]
  %v2960 = vld [vmem:[%s2932 + $0xd8] sm:$0xff]
  %v2961 = vld [vmem:[%s2932 + $0xe0] sm:$0xff]
  %v2962 = vld [vmem:[%s2932 + $0xe8] sm:$0xff]
  %v2964 = vsel %vm2279, %v2278, 0
  %2966 = vmatprep.subr.mxu0 0.0
  %2967 = vmatpush1.msra.mxu0 0.0
  %2968 = vmatprep.subr.mxu0 %v2962
  %2969 = vmatpush1.msra.mxu0 %v2961
  %2970 = vmatprep.subr.mxu0 %v2960
  %2971 = vmatpush1.msra.mxu0 %v2959
  %2972 = vmatprep.subr.mxu0 %v2958
  %2973 = vmatpush1.msra.mxu0 %v2957
  %2974 = vmatprep.subr.mxu0 %v2956
  %2975 = vmatpush1.msra.mxu0 %v2955
  %2976 = vmatprep.subr.mxu0 %v2954
  %2977 = vmatpush1.msra.mxu0 %v2953
  %2978 = vmatprep.subr.mxu0 %v2952
  %2979 = vmatpush1.msra.mxu0 %v2951
  %2980 = vmatprep.subr.mxu0 %v2950
  %2981 = vmatpush1.msra.mxu0 %v2949
  %2982 = vmatprep.subr.mxu0 %v2948
  %2983 = vmatpush1.msra.mxu0 %v2947
  %2984 = vmatprep.subr.mxu0 %v2946
  %2985 = vmatpush1.msra.mxu0 %v2945
  %2986 = vmatprep.subr.mxu0 %v2944
  %2987 = vmatpush1.msra.mxu0 %v2943
  %2988 = vmatprep.subr.mxu0 %v2942
  %2989 = vmatpush1.msra.mxu0 %v2941
  %2990 = vmatprep.subr.mxu0 %v2940
  %2991 = vmatpush1.msra.mxu0 %v2939
  %2992 = vmatprep.subr.mxu0 %v2938
  %2993 = vmatpush1.msra.mxu0 %v2937
  %2994 = vmatprep.subr.mxu0 %v2936
  %2995 = vmatpush1.msra.mxu0 %v2935
  %2996 = vmatprep.subr.mxu0 %v2934
  %2997 = vmatpush1.msra.mxu0 %v2933
  %2998 = vmatprep.subr.mxu0 0.0
  %2999 = vmatpush2.msra.mxu0 0.0
  %3000 = vmatprep.subr.mxu0 0.0
  %3001 = vmatpush2.msra.mxu0 0.0
  %3002 = vmatprep.subr.mxu0 0.0
  %3003 = vmatpush2.msra.mxu0 0.0
  %3004 = vmatprep.subr.mxu0 0.0
  %3005 = vmatpush2.msra.mxu0 0.0
  %3006 = vmatprep.subr.mxu0 0.0
  %3007 = vmatpush2.msra.mxu0 0.0
  %3008 = vmatprep.subr.mxu0 0.0
  %3009 = vmatpush2.msra.mxu0 0.0
  %3010 = vmatprep.subr.mxu0 0.0
  %3011 = vmatpush2.msra.mxu0 0.0
  %3012 = vmatprep.subr.mxu0 0.0
  %3013 = vmatpush2.msra.mxu0 0.0
  %3014 = vmatprep.subr.mxu0 0.0
  %3015 = vmatpush2.msra.mxu0 0.0
  %3016 = vmatprep.subr.mxu0 0.0
  %3017 = vmatpush2.msra.mxu0 0.0
  %3018 = vmatprep.subr.mxu0 0.0
  %3019 = vmatpush2.msra.mxu0 0.0
  %3020 = vmatprep.subr.mxu0 0.0
  %3021 = vmatpush2.msra.mxu0 0.0
  %3022 = vmatprep.subr.mxu0 0.0
  %3023 = vmatpush2.msra.mxu0 0.0
  %3024 = vmatprep.subr.mxu0 0.0
  %3025 = vmatpush2.msra.mxu0 0.0
  %3026 = vmatprep.subr.mxu0 0.0
  %3027 = vmatpush2.msra.mxu0 0.0
  %3028 = vmatprep.subr.mxu0 0.0
  %3029 = vmatpush2.msra.mxu0 0.0
  %3030 = vmatprep.mubr.f32.mxu0 0.0
  %3031 = vmatmul.mubr.f32.gmra.mxu0 %v2363
  %v3032 = vpop.f32.mrf.mxu0
  %v3033 = vadd.f32 0.0, %v3032
  %v3034 = vpop.f32.mrf.mxu0
  %v3035 = vadd.f32 0.0, %v3034
  %3036 = vmatprep.mubr.f32.mxu0 0.0
  %3037 = vmatmul.mubr.f32.gmra.mxu0 %v2366
  %v3038 = vpop.f32.mrf.mxu0
  %v3039 = vadd.f32 0.0, %v3038
  %v3040 = vpop.f32.mrf.mxu0
  %v3041 = vadd.f32 0.0, %v3040
  %3042 = vmatprep.mubr.f32.mxu0 0.0
  %3043 = vmatmul.mubr.f32.gmra.mxu0 %v2369
  %v3044 = vpop.f32.mrf.mxu0
  %v3045 = vadd.f32 0.0, %v3044
  %v3046 = vpop.f32.mrf.mxu0
  %v3047 = vadd.f32 0.0, %v3046
  %3048 = vmatprep.mubr.f32.mxu0 0.0
  %3049 = vmatmul.mubr.f32.gmra.mxu0 %v2372
  %v3050 = vpop.f32.mrf.mxu0
  %v3051 = vadd.f32 0.0, %v3050
  %v3052 = vpop.f32.mrf.mxu0
  %v3053 = vadd.f32 0.0, %v3052
  %3054 = vmatprep.mubr.f32.mxu0 0.0
  %3055 = vmatmul.mubr.f32.gmra.mxu0 %v2375
  %v3056 = vpop.f32.mrf.mxu0
  %v3057 = vadd.f32 0.0, %v3056
  %v3058 = vpop.f32.mrf.mxu0
  %v3059 = vadd.f32 0.0, %v3058
  %3060 = vmatprep.mubr.f32.mxu0 0.0
  %3061 = vmatmul.mubr.f32.gmra.mxu0 %v2638
  %v3062 = vpop.f32.mrf.mxu0
  %v3063 = vadd.f32 0.0, %v3062
  %v3064 = vpop.f32.mrf.mxu0
  %v3065 = vadd.f32 0.0, %v3064
  %3066 = vmatprep.mubr.f32.mxu0 0.0
  %3067 = vmatmul.mubr.f32.gmra.mxu0 %v2801
  %v3068 = vpop.f32.mrf.mxu0
  %v3069 = vadd.f32 0.0, %v3068
  %v3070 = vpop.f32.mrf.mxu0
  %v3071 = vadd.f32 0.0, %v3070
  %3072 = vmatprep.mubr.f32.mxu0 0.0
  %3073 = vmatmul.mubr.f32.gmra.mxu0 %v2964
  %v3074 = vpop.f32.mrf.mxu0
  %v3075 = vadd.f32 0.0, %v3074
  %v3076 = vpop.f32.mrf.mxu0
  %v3077 = vadd.f32 0.0, %v3076
  %3078 = vdwg.mxu0
  %v3079 = vadd.f32 %v2916, %v3033
  %v3080 = vadd.f32 %v2917, %v3035
  %v3081 = vadd.f32 %v2918, %v3039
  %v3082 = vadd.f32 %v2919, %v3041
  %v3083 = vadd.f32 %v2920, %v3045
  %v3084 = vadd.f32 %v2921, %v3047
  %v3085 = vadd.f32 %v2922, %v3051
  %v3086 = vadd.f32 %v2923, %v3053
  %v3087 = vadd.f32 %v2924, %v3057
  %v3088 = vadd.f32 %v2925, %v3059
  %v3089 = vadd.f32 %v2926, %v3063
  %v3090 = vadd.f32 %v2927, %v3065
  %v3091 = vadd.f32 %v2928, %v3069
  %v3092 = vadd.f32 %v2929, %v3071
  %v3093 = vadd.f32 %v2930, %v3075
  %v3094 = vadd.f32 %v2931, %v3077
  %v3095 = vld [vmem:[%s4] sm:$0x3]
  %v3097 = vlaneseq
  %v3098 = vshrl.u32 %v3097, 7
  %v3099 = vsub.s32 0, %v3098
  %v3100 = vrot.slane %v3095, %v3099
  %v3101 = vlaneseq
  %v3102 = vshrl.u32 %v3101, 7
  %v3103 = vsub.s32 1, %v3102
  %v3104 = vrot.slane %v3095, %v3103
  %v3107 = vadd.f32 %v3079, %v3100
  %v3108 = vadd.f32 %v3080, %v3104
  %v3109 = vadd.f32 %v3081, %v3100
  %v3110 = vadd.f32 %v3082, %v3104
  %v3111 = vadd.f32 %v3083, %v3100
  %v3112 = vadd.f32 %v3084, %v3104
  %v3113 = vadd.f32 %v3085, %v3100
  %v3114 = vadd.f32 %v3086, %v3104
  %v3115 = vadd.f32 %v3087, %v3100
  %v3116 = vadd.f32 %v3088, %v3104
  %v3117 = vadd.f32 %v3089, %v3100
  %v3118 = vadd.f32 %v3090, %v3104
  %v3119 = vadd.f32 %v3091, %v3100
  %v3120 = vadd.f32 %v3092, %v3104
  %v3121 = vadd.f32 %v3093, %v3100
  %v3122 = vadd.f32 %v3094, %v3104
  %v3123 = vmax.f32 %v3107, %v3109
  %vm3124 = vcmask 261120
  %v3125 = vsel %vm3124, %v3108, -inf
  %v3126 = vsel %vm3124, %v3110, -inf
  %v3127 = vmax.f32 %v3125, %v3126
  %v3128 = vmax.f32 %v3111, %v3113
  %v3129 = vsel %vm3124, %v3112, -inf
  %v3130 = vsel %vm3124, %v3114, -inf
  %v3131 = vmax.f32 %v3129, %v3130
  %v3132 = vmax.f32 %v3115, %v3117
  %v3133 = vsel %vm3124, %v3116, -inf
  %v3134 = vsel %vm3124, %v3118, -inf
  %v3135 = vmax.f32 %v3133, %v3134
  %v3136 = vmax.f32 %v3119, %v3121
  %v3137 = vsel %vm3124, %v3120, -inf
  %v3138 = vsel %vm3124, %v3122, -inf
  %v3139 = vmax.f32 %v3137, %v3138
  %3144 = vrot.lane.b32.xlu0 %v3123, 108
  %v3145 = vpop.permute.xlu0 %3144
  %3146 = vrot.lane.b32.xlu0 %v3128, 108
  %v3147 = vpop.permute.xlu0 %3146
  %3148 = vrot.lane.b32.xlu0 %v3132, 108
  %v3149 = vpop.permute.xlu0 %3148
  %3150 = vrot.lane.b32.xlu0 %v3136, 108
  %v3151 = vpop.permute.xlu0 %3150
  %v3156 = vmax.f32 %v3123, %v3145
  %v3157 = vmax.f32 %v3128, %v3147
  %v3158 = vmax.f32 %v3132, %v3149
  %v3159 = vmax.f32 %v3136, %v3151
  %3164 = vrot.lane.b32.xlu0 %v3127, 108
  %v3165 = vpop.permute.xlu0 %3164
  %3166 = vrot.lane.b32.xlu0 %v3131, 108
  %v3167 = vpop.permute.xlu0 %3166
  %3168 = vrot.lane.b32.xlu0 %v3135, 108
  %v3169 = vpop.permute.xlu0 %3168
  %3170 = vrot.lane.b32.xlu0 %v3139, 108
  %v3171 = vpop.permute.xlu0 %3170
  %v3176 = vmax.f32 %v3123, %v3165
  %v3177 = vmax.f32 %v3127, %v3165
  %v3178 = vmax.f32 %v3128, %v3167
  %v3179 = vmax.f32 %v3131, %v3167
  %v3180 = vmax.f32 %v3132, %v3169
  %v3181 = vmax.f32 %v3135, %v3169
  %v3182 = vmax.f32 %v3136, %v3171
  %v3183 = vmax.f32 %v3139, %v3171
  %3188 = vrot.lane.b32.xlu0 %v3156, 108
  %v3189 = vpop.permute.xlu0 %3188
  %3190 = vrot.lane.b32.xlu0 %v3157, 108
  %v3191 = vpop.permute.xlu0 %3190
  %3192 = vrot.lane.b32.xlu0 %v3158, 108
  %v3193 = vpop.permute.xlu0 %3192
  %3194 = vrot.lane.b32.xlu0 %v3159, 108
  %v3195 = vpop.permute.xlu0 %3194
  %3200 = vrot.lane.b32.xlu0 %v3156, 88
  %v3201 = vpop.permute.xlu0 %3200
  %3202 = vrot.lane.b32.xlu0 %v3157, 88
  %v3203 = vpop.permute.xlu0 %3202
  %3204 = vrot.lane.b32.xlu0 %v3158, 88
  %v3205 = vpop.permute.xlu0 %3204
  %3206 = vrot.lane.b32.xlu0 %v3159, 88
  %v3207 = vpop.permute.xlu0 %3206
  %3220 = vrot.lane.b32.xlu0 %v3176, 68
  %v3221 = vpop.permute.xlu0 %3220
  %3222 = vrot.lane.b32.xlu0 %v3177, 68
  %v3223 = vpop.permute.xlu0 %3222
  %3224 = vrot.lane.b32.xlu0 %v3178, 68
  %v3225 = vpop.permute.xlu0 %3224
  %3226 = vrot.lane.b32.xlu0 %v3179, 68
  %v3227 = vpop.permute.xlu0 %3226
  %3228 = vrot.lane.b32.xlu0 %v3180, 68
  %v3229 = vpop.permute.xlu0 %3228
  %3230 = vrot.lane.b32.xlu0 %v3181, 68
  %v3231 = vpop.permute.xlu0 %3230
  %3232 = vrot.lane.b32.xlu0 %v3182, 68
  %v3233 = vpop.permute.xlu0 %3232
  %3234 = vrot.lane.b32.xlu0 %v3183, 68
  %v3235 = vpop.permute.xlu0 %3234
  %v3236 = vsel %vm1919, %v3221, %v3223
  %v3237 = vsel %vm1919, %v3225, %v3227
  %v3238 = vsel %vm1919, %v3229, %v3231
  %v3239 = vsel %vm1919, %v3233, %v3235
  %v3244 = vsel %vm2137, %v3156, %v3189
  %v3245 = vsel %vm2137, %v3157, %v3191
  %v3246 = vsel %vm2137, %v3158, %v3193
  %v3247 = vsel %vm2137, %v3159, %v3195
  %v3248 = vsel %vm2163, %v3244, %v3201
  %v3249 = vsel %vm2163, %v3245, %v3203
  %v3250 = vsel %vm2163, %v3246, %v3205
  %v3251 = vsel %vm2163, %v3247, %v3207
  %v3252 = vsel %vm2189, %v3248, %v3236
  %v3253 = vsel %vm2189, %v3249, %v3237
  %v3254 = vsel %vm2189, %v3250, %v3238
  %v3255 = vsel %vm2189, %v3251, %v3239
  %v3256 = vmax.f32 %v3252, 0.0
  %v3257 = vmax.f32 %v3253, 0.0
  %v3258 = vmax.f32 %v3254, 0.0
  %v3259 = vmax.f32 %v3255, 0.0
  %3261 = vrot.lane.b32.xlu0 %v3257, 80
  %v3262 = vpop.permute.xlu0 %3261
  %3265 = vrot.lane.b32.xlu0 %v3258, 32
  %v3266 = vpop.permute.xlu0 %3265
  %3269 = vrot.lane.b32.xlu0 %v3259, 112
  %v3270 = vpop.permute.xlu0 %3269
  %v3272 = vsel %vm2215, %v3256, %v3262
  %v3273 = vsel %vm3124, %v3262, %v3266
  %v3274 = vsel %vm1475, %v3273, %v3270
  %3275 = vst [vmem:[%s10] sm:$0xff] %v3272
  %3276 = vst [vmem:[%s10 + $0x8] sm:$0xff] %v3274
  %vm3277 = vcmask 523264
  %3278 = vst.msk [vmem:[%s10 + $0x10] sm:$0xff] %vm3277, %v3270
  %v3279 = vld [vmem:[%s5] sm:$0xff]
  %v3280 = vld [vmem:[%s5 + $0x8] sm:$0xff]
  %v3281 = vld [vmem:[%s5 + $0x10] sm:$0xff]
  %v3282 = vld [vmem:[%s5 + $0x18] sm:$0xff]
  %v3283 = vld [vmem:[%s5 + $0x20] sm:$0xff]
  %v3284 = vld [vmem:[%s5 + $0x28] sm:$0xff]
  %v3285 = vld [vmem:[%s5 + $0x30] sm:$0xff]
  %v3286 = vld [vmem:[%s5 + $0x38] sm:$0xff]
  %v3287 = vld [vmem:[%s5 + $0x40] sm:$0xff]
  %v3288 = vld [vmem:[%s5 + $0x48] sm:$0xff]
  %v3289 = vld [vmem:[%s5 + $0x50] sm:$0xff]
  %v3290 = vld [vmem:[%s5 + $0x58] sm:$0xff]
  %v3291 = vld [vmem:[%s5 + $0x60] sm:$0xff]
  %v3292 = vld [vmem:[%s5 + $0x68] sm:$0xff]
  %v3293 = vld [vmem:[%s5 + $0x70] sm:$0xff]
  %v3294 = vld [vmem:[%s5 + $0x78] sm:$0xff]
  %v3295 = vld [vmem:[%s5 + $0x80] sm:$0xff]
  %v3296 = vld [vmem:[%s5 + $0x88] sm:$0xff]
  %v3297 = vld [vmem:[%s5 + $0x90] sm:$0xff]
  %v3298 = vld [vmem:[%s5 + $0x98] sm:$0xff]
  %v3299 = vld [vmem:[%s5 + $0xa0] sm:$0xff]
  %v3300 = vld [vmem:[%s5 + $0xa8] sm:$0xff]
  %v3301 = vld [vmem:[%s5 + $0xb0] sm:$0xff]
  %v3302 = vld [vmem:[%s5 + $0xb8] sm:$0xff]
  %v3303 = vld [vmem:[%s5 + $0xc0] sm:$0xff]
  %v3304 = vld [vmem:[%s5 + $0xc8] sm:$0xff]
  %v3305 = vld [vmem:[%s5 + $0xd0] sm:$0xff]
  %v3306 = vld [vmem:[%s5 + $0xd8] sm:$0xff]
  %v3307 = vld [vmem:[%s5 + $0xe0] sm:$0xff]
  %v3308 = vld [vmem:[%s5 + $0xe8] sm:$0xff]
  %v3309 = vld [vmem:[%s5 + $0xf0] sm:$0xff]
  %v3310 = vld [vmem:[%s5 + $0xf8] sm:$0xff]
  %v3311 = vld [vmem:[%s5 + $0x100] sm:$0xff]
  %v3312 = vld [vmem:[%s5 + $0x108] sm:$0xff]
  %v3313 = vld [vmem:[%s5 + $0x110] sm:$0xff]
  %v3314 = vld [vmem:[%s5 + $0x118] sm:$0xff]
  %v3315 = vld [vmem:[%s5 + $0x120] sm:$0xff]
  %v3316 = vld [vmem:[%s5 + $0x128] sm:$0xff]
  %v3317 = vld [vmem:[%s5 + $0x130] sm:$0xff]
  %v3318 = vld [vmem:[%s5 + $0x138] sm:$0xff]
  %v3319 = vld [vmem:[%s6] sm:$0x1]
  %v3321 = vlaneseq
  %v3322 = vshrl.u32 %v3321, 7
  %v3323 = vsub.s32 0, %v3322
  %v3324 = vrot.slane %v3319, %v3323
  %v3326 = vsel %vm3277, %v3270, 0
  %3328 = vmatprep.subr.mxu0 0.0
  %3329 = vmatpush1.msra.mxu0 %v3294
  %3330 = vmatprep.subr.mxu0 0.0
  %3331 = vmatpush1.msra.mxu0 %v3293
  %3332 = vmatprep.subr.mxu0 0.0
  %3333 = vmatpush1.msra.mxu0 %v3292
  %3334 = vmatprep.subr.mxu0 0.0
  %3335 = vmatpush1.msra.mxu0 %v3291
  %3336 = vmatprep.subr.mxu0 0.0
  %3337 = vmatpush1.msra.mxu0 %v3290
  %3338 = vmatprep.subr.mxu0 0.0
  %3339 = vmatpush1.msra.mxu0 %v3289
  %3340 = vmatprep.subr.mxu0 0.0
  %3341 = vmatpush1.msra.mxu0 %v3288
  %3342 = vmatprep.subr.mxu0 0.0
  %3343 = vmatpush1.msra.mxu0 %v3287
  %3344 = vmatprep.subr.mxu0 0.0
  %3345 = vmatpush1.msra.mxu0 %v3286
  %3346 = vmatprep.subr.mxu0 0.0
  %3347 = vmatpush1.msra.mxu0 %v3285
  %3348 = vmatprep.subr.mxu0 0.0
  %3349 = vmatpush1.msra.mxu0 %v3284
  %3350 = vmatprep.subr.mxu0 0.0
  %3351 = vmatpush1.msra.mxu0 %v3283
  %3352 = vmatprep.subr.mxu0 0.0
  %3353 = vmatpush1.msra.mxu0 %v3282
  %3354 = vmatprep.subr.mxu0 0.0
  %3355 = vmatpush1.msra.mxu0 %v3281
  %3356 = vmatprep.subr.mxu0 0.0
  %3357 = vmatpush1.msra.mxu0 %v3280
  %3358 = vmatprep.subr.mxu0 0.0
  %3359 = vmatpush1.msra.mxu0 %v3279
  %3360 = vmatprep.subr.mxu0 0.0
  %3361 = vmatpush2.msra.mxu0 %v3310
  %3362 = vmatprep.subr.mxu0 0.0
  %3363 = vmatpush2.msra.mxu0 %v3309
  %3364 = vmatprep.subr.mxu0 0.0
  %3365 = vmatpush2.msra.mxu0 %v3308
  %3366 = vmatprep.subr.mxu0 0.0
  %3367 = vmatpush2.msra.mxu0 %v3307
  %3368 = vmatprep.subr.mxu0 0.0
  %3369 = vmatpush2.msra.mxu0 %v3306
  %3370 = vmatprep.subr.mxu0 0.0
  %3371 = vmatpush2.msra.mxu0 %v3305
  %3372 = vmatprep.subr.mxu0 0.0
  %3373 = vmatpush2.msra.mxu0 %v3304
  %3374 = vmatprep.subr.mxu0 0.0
  %3375 = vmatpush2.msra.mxu0 %v3303
  %3376 = vmatprep.subr.mxu0 0.0
  %3377 = vmatpush2.msra.mxu0 %v3302
  %3378 = vmatprep.subr.mxu0 0.0
  %3379 = vmatpush2.msra.mxu0 %v3301
  %3380 = vmatprep.subr.mxu0 0.0
  %3381 = vmatpush2.msra.mxu0 %v3300
  %3382 = vmatprep.subr.mxu0 0.0
  %3383 = vmatpush2.msra.mxu0 %v3299
  %3384 = vmatprep.subr.mxu0 0.0
  %3385 = vmatpush2.msra.mxu0 %v3298
  %3386 = vmatprep.subr.mxu0 0.0
  %3387 = vmatpush2.msra.mxu0 %v3297
  %3388 = vmatprep.subr.mxu0 0.0
  %3389 = vmatpush2.msra.mxu0 %v3296
  %3390 = vmatprep.subr.mxu0 0.0
  %3391 = vmatpush2.msra.mxu0 %v3295
  %3392 = vmatprep.mubr.f32.mxu0 %v3274
  %3393 = vmatmul.mubr.f32.gmra.mxu0 %v3272
  %v3394 = vpop.f32.mrf.mxu0
  %v3395 = vadd.f32 %v3324, %v3394
  %v3396 = vpop.f32.mrf.mxu0
  %3397 = vdwg.mxu0
  %3398 = vmatprep.subr.mxu0 0.0
  %3399 = vmatpush1.msra.mxu0 0.0
  %3400 = vmatprep.subr.mxu0 0.0
  %3401 = vmatpush1.msra.mxu0 0.0
  %3402 = vmatprep.subr.mxu0 0.0
  %3403 = vmatpush1.msra.mxu0 0.0
  %3404 = vmatprep.subr.mxu0 0.0
  %3405 = vmatpush1.msra.mxu0 0.0
  %3406 = vmatprep.subr.mxu0 0.0
  %3407 = vmatpush1.msra.mxu0 0.0
  %3408 = vmatprep.subr.mxu0 0.0
  %3409 = vmatpush1.msra.mxu0 0.0
  %3410 = vmatprep.subr.mxu0 0.0
  %3411 = vmatpush1.msra.mxu0 0.0
  %3412 = vmatprep.subr.mxu0 0.0
  %3413 = vmatpush1.msra.mxu0 0.0
  %3414 = vmatprep.subr.mxu0 0.0
  %3415 = vmatpush1.msra.mxu0 %v3318
  %3416 = vmatprep.subr.mxu0 0.0
  %3417 = vmatpush1.msra.mxu0 %v3317
  %3418 = vmatprep.subr.mxu0 0.0
  %3419 = vmatpush1.msra.mxu0 %v3316
  %3420 = vmatprep.subr.mxu0 0.0
  %3421 = vmatpush1.msra.mxu0 %v3315
  %3422 = vmatprep.subr.mxu0 0.0
  %3423 = vmatpush1.msra.mxu0 %v3314
  %3424 = vmatprep.subr.mxu0 0.0
  %3425 = vmatpush1.msra.mxu0 %v3313
  %3426 = vmatprep.subr.mxu0 0.0
  %3427 = vmatpush1.msra.mxu0 %v3312
  %3428 = vmatprep.subr.mxu0 0.0
  %3429 = vmatpush1.msra.mxu0 %v3311
  %3430 = vmatprep.subr.mxu0 0.0
  %3431 = vmatpush2.msra.mxu0 0.0
  %3432 = vmatprep.subr.mxu0 0.0
  %3433 = vmatpush2.msra.mxu0 0.0
  %3434 = vmatprep.subr.mxu0 0.0
  %3435 = vmatpush2.msra.mxu0 0.0
  %3436 = vmatprep.subr.mxu0 0.0
  %3437 = vmatpush2.msra.mxu0 0.0
  %3438 = vmatprep.subr.mxu0 0.0
  %3439 = vmatpush2.msra.mxu0 0.0
  %3440 = vmatprep.subr.mxu0 0.0
  %3441 = vmatpush2.msra.mxu0 0.0
  %3442 = vmatprep.subr.mxu0 0.0
  %3443 = vmatpush2.msra.mxu0 0.0
  %3444 = vmatprep.subr.mxu0 0.0
  %3445 = vmatpush2.msra.mxu0 0.0
  %3446 = vmatprep.subr.mxu0 0.0
  %3447 = vmatpush2.msra.mxu0 0.0
  %3448 = vmatprep.subr.mxu0 0.0
  %3449 = vmatpush2.msra.mxu0 0.0
  %3450 = vmatprep.subr.mxu0 0.0
  %3451 = vmatpush2.msra.mxu0 0.0
  %3452 = vmatprep.subr.mxu0 0.0
  %3453 = vmatpush2.msra.mxu0 0.0
  %3454 = vmatprep.subr.mxu0 0.0
  %3455 = vmatpush2.msra.mxu0 0.0
  %3456 = vmatprep.subr.mxu0 0.0
  %3457 = vmatpush2.msra.mxu0 0.0
  %3458 = vmatprep.subr.mxu0 0.0
  %3459 = vmatpush2.msra.mxu0 0.0
  %3460 = vmatprep.subr.mxu0 0.0
  %3461 = vmatpush2.msra.mxu0 0.0
  %3462 = vmatprep.mubr.f32.mxu0 0.0
  %3463 = vmatmul.mubr.f32.gmra.mxu0 %v3326
  %v3464 = vpop.f32.mrf.mxu0
  %v3465 = vadd.f32 %v3395, %v3464
  %v3466 = vpop.f32.mrf.mxu0
  %3467 = vdwg.mxu0
  %v3468 = vmax.f32 %v3465, 0.0
  %3469 = vst.msk [vmem:[%s11] sm:$0xff] %vm2176, %v3468
  %v3470 = vld [vmem:[%s7] sm:$0xff]
  %v3471 = vld [vmem:[%s7 + $0x8] sm:$0xff]
  %v3472 = vld [vmem:[%s7 + $0x10] sm:$0xff]
  %v3473 = vld [vmem:[%s7 + $0x18] sm:$0xff]
  %v3474 = vld [vmem:[%s7 + $0x20] sm:$0xff]
  %v3475 = vld [vmem:[%s7 + $0x28] sm:$0xff]
  %v3476 = vld [vmem:[%s7 + $0x30] sm:$0x3]
  %v3477 = vld [vmem:[%s8] sm:$0x1]
  %v3479 = vlaneseq
  %v3480 = vshrl.u32 %v3479, 7
  %v3481 = vsub.s32 0, %v3480
  %v3482 = vrot.slane %v3477, %v3481
  %v3485 = vsel %vm2176, %v3468, 0
  %vm3487 = vcmask 1041408
  %v3489 = vsel %vm3487, %v3476, 0
  %3491 = vmatprep.subr.mxu0 0.0
  %3492 = vmatpush1.msra.mxu0 0.0
  %3493 = vmatprep.subr.mxu0 0.0
  %3494 = vmatpush1.msra.mxu0 0.0
  %3495 = vmatprep.subr.mxu0 0.0
  %3496 = vmatpush1.msra.mxu0 0.0
  %3497 = vmatprep.subr.mxu0 0.0
  %3498 = vmatpush1.msra.mxu0 0.0
  %3499 = vmatprep.subr.mxu0 0.0
  %3500 = vmatpush1.msra.mxu0 0.0
  %3501 = vmatprep.subr.mxu0 0.0
  %3502 = vmatpush1.msra.mxu0 0.0
  %3503 = vmatprep.subr.mxu0 0.0
  %3504 = vmatpush1.msra.mxu0 0.0
  %3505 = vmatprep.subr.mxu0 0.0
  %3506 = vmatpush1.msra.mxu0 0.0
  %3507 = vmatprep.subr.mxu0 0.0
  %3508 = vmatpush1.msra.mxu0 0.0
  %3509 = vmatprep.subr.mxu0 0.0
  %3510 = vmatpush1.msra.mxu0 %v3489
  %3511 = vmatprep.subr.mxu0 0.0
  %3512 = vmatpush1.msra.mxu0 %v3475
  %3513 = vmatprep.subr.mxu0 0.0
  %3514 = vmatpush1.msra.mxu0 %v3474
  %3515 = vmatprep.subr.mxu0 0.0
  %3516 = vmatpush1.msra.mxu0 %v3473
  %3517 = vmatprep.subr.mxu0 0.0
  %3518 = vmatpush1.msra.mxu0 %v3472
  %3519 = vmatprep.subr.mxu0 0.0
  %3520 = vmatpush1.msra.mxu0 %v3471
  %3521 = vmatprep.subr.mxu0 0.0
  %3522 = vmatpush1.msra.mxu0 %v3470
  %3523 = vmatprep.subr.mxu0 0.0
  %3524 = vmatpush2.msra.mxu0 0.0
  %3525 = vmatprep.subr.mxu0 0.0
  %3526 = vmatpush2.msra.mxu0 0.0
  %3527 = vmatprep.subr.mxu0 0.0
  %3528 = vmatpush2.msra.mxu0 0.0
  %3529 = vmatprep.subr.mxu0 0.0
  %3530 = vmatpush2.msra.mxu0 0.0
  %3531 = vmatprep.subr.mxu0 0.0
  %3532 = vmatpush2.msra.mxu0 0.0
  %3533 = vmatprep.subr.mxu0 0.0
  %3534 = vmatpush2.msra.mxu0 0.0
  %3535 = vmatprep.subr.mxu0 0.0
  %3536 = vmatpush2.msra.mxu0 0.0
  %3537 = vmatprep.subr.mxu0 0.0
  %3538 = vmatpush2.msra.mxu0 0.0
  %3539 = vmatprep.subr.mxu0 0.0
  %3540 = vmatpush2.msra.mxu0 0.0
  %3541 = vmatprep.subr.mxu0 0.0
  %3542 = vmatpush2.msra.mxu0 0.0
  %3543 = vmatprep.subr.mxu0 0.0
  %3544 = vmatpush2.msra.mxu0 0.0
  %3545 = vmatprep.subr.mxu0 0.0
  %3546 = vmatpush2.msra.mxu0 0.0
  %3547 = vmatprep.subr.mxu0 0.0
  %3548 = vmatpush2.msra.mxu0 0.0
  %3549 = vmatprep.subr.mxu0 0.0
  %3550 = vmatpush2.msra.mxu0 0.0
  %3551 = vmatprep.subr.mxu0 0.0
  %3552 = vmatpush2.msra.mxu0 0.0
  %3553 = vmatprep.subr.mxu0 0.0
  %3554 = vmatpush2.msra.mxu0 0.0
  %3555 = vmatprep.mubr.f32.mxu0 0.0
  %3556 = vmatmul.mubr.f32.gmra.mxu0 %v3485
  %v3557 = vpop.f32.mrf.mxu0
  %v3558 = vadd.f32 %v3482, %v3557
  %v3559 = vpop.f32.mrf.mxu0
  %3560 = vdwg.mxu0
  %3561 = vst.msk [vmem:[%s12] sm:$0xff] %vm2124, %v3558
  %v3562 = vsel %vm2124, %v3558, -inf
  %3563 = vmax.xlane.f32.xlu0 %v3562
  %v3564 = vpop.xlane.xlu0 %3563
  %v3565 = vsub.f32 %v3558, %v3564
  %v3566 = vmul.f32 %v3565, 1.442695
  %v3567 = vpow.pop %v3566
  %v3568 = vsel %vm2124, %v3567, 0.0
  %3569 = vadd.xlane.f32.xlu0 %v3568
  %v3570 = vpop.xlane.xlu0 %3569
  %v3571 = vlog2.pop %v3570
  %v3572 = vmul.f32 %v3571, 0.6931472
  %v3573 = vsub.f32 %v3565, %v3572
  %3574 = vst.msk [vmem:[%s13] sm:$0xff] %vm2124, %v3573
  // Predicated region
  $region38: #{cnnmnist_forward.1} parent=0 // pred_check
    _
  $region39: #{cnnmnist_forward.1} parent=0 // pred_check_branch
    %3576 = sbr.rel (0) target = $region41
  $region40: #{cnnmnist_forward.1} parent=0 // pred_region
    _
  $region41: #{cnnmnist_forward.1} parent=0 // pred_fallthru
    _
  // Predicated region
  $region42: #{cnnmnist_forward.1} parent=0 // pred_check
    _
  $region43: #{cnnmnist_forward.1} parent=0 // pred_check_branch
    %3578 = sbr.rel (0) target = $region45
  $region44: #{cnnmnist_forward.1} parent=0 // pred_region
    _
  $region45: #{cnnmnist_forward.1} parent=0 // pred_fallthru
    _
  // Predicated region
  $region46: #{cnnmnist_forward.1} parent=0 // pred_check
    _
  $region47: #{cnnmnist_forward.1} parent=0 // pred_check_branch
    %3580 = sbr.rel (0) target = $region49
  $region48: #{cnnmnist_forward.1} parent=0 // pred_region
    _
  $region49: #{cnnmnist_forward.1} parent=0 // pred_fallthru
    _
  // Predicated region
  $region50: #{cnnmnist_forward.1} parent=0 // pred_check
    _
  $region51: #{cnnmnist_forward.1} parent=0 // pred_check_branch
    %3582 = sbr.rel (0) target = $region53
  $region52: #{cnnmnist_forward.1} parent=0 // pred_region
    _
  $region53: #{cnnmnist_forward.1} parent=0 // pred_fallthru
    _
  // Predicated region
  $region54: #{cnnmnist_forward.1} parent=0 // pred_check
    _
  $region55: #{cnnmnist_forward.1} parent=0 // pred_check_branch
    %3584 = sbr.rel (0) target = $region57
  $region56: #{cnnmnist_forward.1} parent=0 // pred_region
    _
  $region57: #{cnnmnist_forward.1} parent=0 // pred_fallthru
    _
  // Predicated region
  $region58: #{cnnmnist_forward.1} parent=0 // pred_check
    _
  $region59: #{cnnmnist_forward.1} parent=0 // pred_check_branch
    %3586 = sbr.rel (0) target = $region61
  $region60: #{cnnmnist_forward.1} parent=0 // pred_region
    _
  $region61: #{cnnmnist_forward.1} parent=0 // pred_fallthru
    _
  // Predicated region
  $region62: #{cnnmnist_forward.1} parent=0 // pred_check
    _
  $region63: #{cnnmnist_forward.1} parent=0 // pred_check_branch
    %3588 = sbr.rel (0) target = $region65
  $region64: #{cnnmnist_forward.1} parent=0 // pred_region
    _
  $region65: #{cnnmnist_forward.1} parent=0 // pred_fallthru
    _
  // Predicated region
  $region66: #{cnnmnist_forward.1} parent=0 // pred_check
    _
  $region67: #{cnnmnist_forward.1} parent=0 // pred_check_branch
    %3590 = sbr.rel (0) target = $region69
  $region68: #{cnnmnist_forward.1} parent=0 // pred_region
    _
  $region69: #{cnnmnist_forward.1} parent=0 // pred_fallthru
    _
  // Predicated region
  $region70: #{cnnmnist_forward.1} parent=0 // pred_check
    _
  $region71: #{cnnmnist_forward.1} parent=0 // pred_check_branch
    %3592 = sbr.rel (0) target = $region73
  $region72: #{cnnmnist_forward.1} parent=0 // pred_region
    _
  $region73: #{cnnmnist_forward.1} parent=0 // pred_fallthru
    _
  // Predicated region
  $region74: #{cnnmnist_forward.1} parent=0 // pred_check
    _
  $region75: #{cnnmnist_forward.1} parent=0 // pred_check_branch
    %3594 = sbr.rel (0) target = $region77
  $region76: #{cnnmnist_forward.1} parent=0 // pred_region
    _
  $region77: #{cnnmnist_forward.1} parent=0 // pred_fallthru
    _

</llo_original>
